<compile_context>
chip_gen: v6e
topology: v6e:2x2x1
jax: 0.10.0
libtpu: 0.0.40
codegen_flags: <defaults>
</compile_context>

<pallas_src>
import math
import functools

import jax
import jax.numpy as jnp
from jax.experimental import pallas as pl
from jax.experimental.pallas import tpu as pltpu

CONFIG = dict(
    image_width=16,
    image_height=16,
    patch_size=8,
    num_channels=4,
    hidden_size=32,
    intermediate_size=64,
    num_attention_heads=4,
    num_hidden_layers=2,
    num_classes=8,
    qkv_bias=True,
    initializer_range=0.02,
)


# ----------------------------- helpers (traced inside the kernel) -------------

def _gelu_tanh(x):
    # Exactly the GELUActivation from the PyTorch module (tanh approximation).
    return 0.5 * x * (1.0 + jnp.tanh(math.sqrt(2.0 / math.pi)
                                     * (x + 0.044715 * x ** 3)))


def _layernorm(x, w, b, eps=1e-5):
    mu = jnp.mean(x, axis=-1, keepdims=True)
    var = jnp.mean((x - mu) ** 2, axis=-1, keepdims=True)
    return (x - mu) * jax.lax.rsqrt(var + eps) * w + b


# ----------------------------- fused Pallas kernel ----------------------------

def vit_kernel(patches_ref, pw_ref, emb_ref,
               ln1w_ref, ln1b_ref,
               wq_ref, bq_ref, wk_ref, bk_ref, wv_ref, bv_ref,
               wo_ref, bo_ref,
               ln2w_ref, ln2b_ref, w1_ref, b1_ref, w2_ref, b2_ref,
               clsw_ref, clsb_ref, o_ref,
               *, batch, seq_pad, seq_valid, num_heads, num_layers, head_dim):
    rows = batch * seq_pad

    # --- patch embedding; cls token / pos-embed / conv bias pre-folded in emb ---
    # patches: (rows, C*P*P) with zero rows at the CLS slot and pad slots.
    x = jnp.dot(patches_ref[...], pw_ref[...],
                preferred_element_type=jnp.float32) + emb_ref[...]      # (rows, H)

    # key-padding mask: keys >= seq_valid get a very negative score bias.
    key_ids = jax.lax.broadcasted_iota(jnp.int32, (1, 1, seq_pad), 2)
    key_bias = jnp.where(key_ids < seq_valid, 0.0, -1e30).astype(jnp.float32)

    for l in range(num_layers):              # static unroll; weights VMEM-resident
        # ---------------- multi-head self-attention (pre-LN) ------------------
        h = _layernorm(x, ln1w_ref[l], ln1b_ref[l])
        # 1/sqrt(head_dim) already folded into wq/bq in the wrapper.
        q = jnp.dot(h, wq_ref[l], preferred_element_type=jnp.float32) + bq_ref[l]
        k = jnp.dot(h, wk_ref[l], preferred_element_type=jnp.float32) + bk_ref[l]
        v = jnp.dot(h, wv_ref[l], preferred_element_type=jnp.float32) + bv_ref[l]

        head_outs = []
        for hh in range(num_heads):          # static unroll over heads
            sl = slice(hh * head_dim, (hh + 1) * head_dim)
            qh = q[:, sl].reshape(batch, seq_pad, head_dim)     # (B, S, hd)
            kh = k[:, sl].reshape(batch, seq_pad, head_dim)
            vh = v[:, sl].reshape(batch, seq_pad, head_dim)
            s = jnp.einsum('bqd,bkd->bqk', qh, kh,
                           preferred_element_type=jnp.float32) + key_bias
            s = s - jnp.max(s, axis=-1, keepdims=True)
            e = jnp.exp(s)
            p = e * pl.reciprocal(jnp.sum(e, axis=-1, keepdims=True), approx=True)
            oh = jnp.einsum('bqk,bkd->bqd', p, vh,
                            preferred_element_type=jnp.float32)
            head_outs.append(oh.reshape(rows, head_dim))
        attn = jnp.concatenate(head_outs, axis=-1)                      # (rows, H)
        attn = jnp.dot(attn, wo_ref[l],
                       preferred_element_type=jnp.float32) + bo_ref[l]
        x = x + attn                                                    # residual 1

        # ---------------- MLP (pre-LN) ----------------------------------------
        h2 = _layernorm(x, ln2w_ref[l], ln2b_ref[l])
        m = jnp.dot(h2, w1_ref[l], preferred_element_type=jnp.float32) + b1_ref[l]
        m = _gelu_tanh(m)
        m = jnp.dot(m, w2_ref[l], preferred_element_type=jnp.float32) + b2_ref[l]
        x = x + m                                                       # residual 2

    # ---------------- classifier on the CLS rows (row b*seq_pad per batch) -----
    cls = jnp.concatenate(
        [x[b * seq_pad:b * seq_pad + 1, :] for b in range(batch)], axis=0)  # (B, H)
    o_ref[...] = jnp.dot(cls, clsw_ref[...],
                         preferred_element_type=jnp.float32) + clsb_ref[...]


# ----------------------------- wrapper ----------------------------------------

def _full_spec(shape):
    nd = len(shape)
    return pl.BlockSpec(shape, lambda i, nd=nd: (0,) * nd)


def pack_params(params, cfg, seq_pad, batch):
    """Stack per-layer params as (L, ...) arrays; fold scale/bias/cls/pos."""
    H = cfg["hidden_size"]
    heads = cfg["num_attention_heads"]
    hd = H // heads
    P = cfg["patch_size"]
    NP = (cfg["image_width"] // P) * (cfg["image_height"] // P)
    scale = 1.0 / math.sqrt(hd)

    # additive embedding slab: row 0 = cls + pos[0]; rows 1..NP = pos + conv bias;
    # pad rows = 0.  Tiled over batch -> (batch*seq_pad, H).
    emb = jnp.concatenate([
        params["cls_token"][0] + params["pos_embed"][0, :1],
        params["pos_embed"][0, 1:NP + 1] + params["patch_b"],
        jnp.zeros((seq_pad - NP - 1, H), jnp.float32),
    ], axis=0)
    emb = jnp.tile(emb, (batch, 1))

    blocks = params["blocks"]

    def stack(name):
        return jnp.stack([blk[name] for blk in blocks])

    # split fused (H, 3H) qkv weight/bias into stacked q/k/v; fold 1/sqrt(hd)
    # into q so the kernel needs no per-head score scaling.
    wq = jnp.stack([blk["wqkv"][:, 0 * H:1 * H] for blk in blocks]) * scale
    wk = jnp.stack([blk["wqkv"][:, 1 * H:2 * H] for blk in blocks])
    wv = jnp.stack([blk["wqkv"][:, 2 * H:3 * H] for blk in blocks])
    bq = jnp.stack([blk["bqkv"][:, 0 * H:1 * H] for blk in blocks]) * scale
    bk = jnp.stack([blk["bqkv"][:, 1 * H:2 * H] for blk in blocks])
    bv = jnp.stack([blk["bqkv"][:, 2 * H:3 * H] for blk in blocks])

    return dict(
        patch_w=params["patch_w"], emb=emb,
        ln1_w=stack("ln1_w"), ln1_b=stack("ln1_b"),
        wq=wq, bq=bq, wk=wk, bk=bk, wv=wv, bv=bv,
        wo=stack("wo"), bo=stack("bo"),
        ln2_w=stack("ln2_w"), ln2_b=stack("ln2_b"),
        w1=stack("w1"), b1=stack("b1"),
        w2=stack("w2"), b2=stack("b2"),
        cls_w=params["cls_w"], cls_b=params["cls_b"],
    )


def vit_forward(x, params, cfg):
    """x: (B, C, H, W) float32 NCHW -> logits (B, num_classes)."""
    B, C, Hh, Ww = x.shape
    P = cfg["patch_size"]
    H = cfg["hidden_size"]
    NC = cfg["num_classes"]
    nh_p, nw_p = Hh // P, Ww // P
    NP = nh_p * nw_p
    S = NP + 1
    S_pad = max(8, ((S + 7) // 8) * 8)          # pad sequence to sublane multiple
    CPP = C * P * P

    # im2col (glue): (B, NP, C*P*P) with pixels flattened in (C, P, P) order,
    # patch order row-major — identical to Conv2d(stride=P) + flatten.transpose.
    patches = (x.reshape(B, C, nh_p, P, nw_p, P)
                 .transpose(0, 2, 4, 1, 3, 5)
                 .reshape(B, NP, CPP))
    # insert a zero row for the CLS slot and zero rows for sequence padding.
    patches = jnp.concatenate(
        [jnp.zeros((B, 1, CPP), jnp.float32), patches,
         jnp.zeros((B, S_pad - S, CPP), jnp.float32)], axis=1
    ).reshape(B * S_pad, CPP)

    pk = pack_params(params, cfg, S_pad, B)
    inputs = (patches, pk["patch_w"], pk["emb"],
              pk["ln1_w"], pk["ln1_b"],
              pk["wq"], pk["bq"], pk["wk"], pk["bk"], pk["wv"], pk["bv"],
              pk["wo"], pk["bo"],
              pk["ln2_w"], pk["ln2_b"], pk["w1"], pk["b1"], pk["w2"], pk["b2"],
              pk["cls_w"], pk["cls_b"])

    kernel = functools.partial(
        vit_kernel,
        batch=B, seq_pad=S_pad, seq_valid=S,
        num_heads=cfg["num_attention_heads"],
        num_layers=cfg["num_hidden_layers"],
        head_dim=H // cfg["num_attention_heads"])

    # Single fused kernel invocation; weights + activations (~150 KB) stay
    # resident in VMEM for the whole forward pass.
    return pl.pallas_call(
        kernel,
        out_shape=jax.ShapeDtypeStruct((B, NC), jnp.float32),
        grid=(1,),
        in_specs=[_full_spec(a.shape) for a in inputs],
        out_specs=_full_spec((B, NC)),
        compiler_params=pltpu.CompilerParams(
            dimension_semantics=("arbitrary",)),
    )(*inputs)


# ----------------------------- parameters --------------------------------------

def init_params(key, cfg):
    std = cfg["initializer_range"]
    H, I = cfg["hidden_size"], cfg["intermediate_size"]
    C, P = cfg["num_channels"], cfg["patch_size"]
    NC = cfg["num_classes"]
    NP = (cfg["image_width"] // P) * (cfg["image_height"] // P)

    keys = iter(jax.random.split(key, 64))

    def normal(shape):
        return std * jax.random.normal(next(keys), shape, jnp.float32)

    def trunc(shape):
        return std * jax.random.truncated_normal(next(keys), -2.0, 2.0, shape,
                                                 jnp.float32)

    params = {
        # Conv2d weight (H, C, P, P) stored pre-reshaped/transposed as (C*P*P, H)
        "patch_w": normal((C * P * P, H)),
        "patch_b": jnp.zeros((1, H), jnp.float32),
        "cls_token": trunc((1, 1, H)),
        "pos_embed": trunc((1, NP + 1, H)),
        "cls_w": normal((H, NC)),
        "cls_b": jnp.zeros((1, NC), jnp.float32),
        "blocks": [],
    }
    for _ in range(cfg["num_hidden_layers"]):
        params["blocks"].append(dict(
            ln1_w=jnp.ones((1, H), jnp.float32),
            ln1_b=jnp.zeros((1, H), jnp.float32),
            wqkv=normal((H, 3 * H)),
            bqkv=jnp.zeros((1, 3 * H), jnp.float32),   # qkv_bias=True
            wo=normal((H, H)),
            bo=jnp.zeros((1, H), jnp.float32),
            ln2_w=jnp.ones((1, H), jnp.float32),
            ln2_b=jnp.zeros((1, H), jnp.float32),
            w1=normal((H, I)),
            b1=jnp.zeros((1, I), jnp.float32),
            w2=normal((I, H)),
            b2=jnp.zeros((1, H), jnp.float32),
        ))
    return params


# ----------------------------- pure-JAX reference (sanity check) ---------------

def vit_reference(x, params, cfg):
    B, C, Hh, Ww = x.shape
    P = cfg["patch_size"]
    H = cfg["hidden_size"]
    nh_, nw_ = Hh // P, Ww // P
    NP = nh_ * nw_
    nhd = cfg["num_attention_heads"]
    hd = H // nhd

    patches = (x.reshape(B, C, nh_, P, nw_, P)
                 .transpose(0, 2, 4, 1, 3, 5)
                 .reshape(B, NP, C * P * P))
    pe = patches @ params["patch_w"] + params["patch_b"][0]
    cls = jnp.broadcast_to(params["cls_token"], (B, 1, H))
    seq = jnp.concatenate([cls, pe], axis=1) + params["pos_embed"]

    def ln(t, w, b):
        mu = t.mean(-1, keepdims=True)
        var = ((t - mu) ** 2).mean(-1, keepdims=True)
        return (t - mu) / jnp.sqrt(var + 1e-5) * w + b

    for blk in params["blocks"]:
        h = ln(seq, blk["ln1_w"][0], blk["ln1_b"][0])
        qkv = h @ blk["wqkv"] + blk["bqkv"][0]
        q, k, v = jnp.split(qkv, 3, axis=-1)
        S = seq.shape[1]
        q = q.reshape(B, S, nhd, hd).transpose(0, 2, 1, 3)
        k = k.reshape(B, S, nhd, hd).transpose(0, 2, 1, 3)
        v = v.reshape(B, S, nhd, hd).transpose(0, 2, 1, 3)
        w_ = jnp.einsum("bhqd,bhkd->bhqk", q, k) / math.sqrt(hd)
        p = jax.nn.softmax(w_, axis=-1)
        a = jnp.einsum("bhqk,bhkd->bhqd", p, v).transpose(0, 2, 1, 3).reshape(B, S, H)
        seq = seq + (a @ blk["wo"] + blk["bo"][0])
        h2 = ln(seq, blk["ln2_w"][0], blk["ln2_b"][0])
        m = _gelu_tanh(h2 @ blk["w1"] + blk["b1"][0])
        seq = seq + (m @ blk["w2"] + blk["b2"][0])

    return seq[:, 0, :] @ params["cls_w"] + params["cls_b"][0]


# ----------------------------- main ---------------------------------------------

if __name__ == "__main__":
    key = jax.random.PRNGKey(0)
    k_param, k_input = jax.random.split(key)

    params = init_params(k_param, CONFIG)
    x = jax.random.normal(
        k_input,
        (2, CONFIG["num_channels"], CONFIG["image_height"], CONFIG["image_width"]),
        jnp.float32)

    fwd = jax.jit(lambda xx, pp: vit_forward(xx, pp, CONFIG))
    logits = jax.block_until_ready(fwd(x, params))

    ref = vit_reference(x, params, CONFIG)
    assert logits.shape == (2, CONFIG["num_classes"])
    assert jnp.allclose(logits, ref, atol=1e-2, rtol=1e-2), (logits, ref)

    print("KERNEL_OK")
</pallas_src>

<mosaic_0001>
module attributes {stable_mosaic.version = 11 : i64} {
  func.func @vit_kernel(%arg0: i32, %arg1: memref<16x256xf32, #tpu.memory_space<vmem>>, %arg2: memref<256x32xf32, #tpu.memory_space<vmem>>, %arg3: memref<16x32xf32, #tpu.memory_space<vmem>>, %arg4: memref<2x1x32xf32, #tpu.memory_space<vmem>>, %arg5: memref<2x1x32xf32, #tpu.memory_space<vmem>>, %arg6: memref<2x32x32xf32, #tpu.memory_space<vmem>>, %arg7: memref<2x1x32xf32, #tpu.memory_space<vmem>>, %arg8: memref<2x32x32xf32, #tpu.memory_space<vmem>>, %arg9: memref<2x1x32xf32, #tpu.memory_space<vmem>>, %arg10: memref<2x32x32xf32, #tpu.memory_space<vmem>>, %arg11: memref<2x1x32xf32, #tpu.memory_space<vmem>>, %arg12: memref<2x32x32xf32, #tpu.memory_space<vmem>>, %arg13: memref<2x1x32xf32, #tpu.memory_space<vmem>>, %arg14: memref<2x1x32xf32, #tpu.memory_space<vmem>>, %arg15: memref<2x1x32xf32, #tpu.memory_space<vmem>>, %arg16: memref<2x32x64xf32, #tpu.memory_space<vmem>>, %arg17: memref<2x1x64xf32, #tpu.memory_space<vmem>>, %arg18: memref<2x64x32xf32, #tpu.memory_space<vmem>>, %arg19: memref<2x1x32xf32, #tpu.memory_space<vmem>>, %arg20: memref<32x8xf32, #tpu.memory_space<vmem>>, %arg21: memref<1x8xf32, #tpu.memory_space<vmem>>, %arg22: memref<2x8xf32, #tpu.memory_space<vmem>>) attributes {dimension_semantics = [#tpu.dimension_semantics<arbitrary>], iteration_bounds = array<i64: 1>, scalar_prefetch = 0 : i64, scratch_operands = 0 : i64, tpu.core_type = #tpu.core_type<tc>, window_params = [{pipeline_mode = #tpu.pipeline_mode<synchronous>, transform_indices = @transform_0, window_bounds = array<i64: 16, 256>}, {pipeline_mode = #tpu.pipeline_mode<synchronous>, transform_indices = @transform_1, window_bounds = array<i64: 256, 32>}, {pipeline_mode = #tpu.pipeline_mode<synchronous>, transform_indices = @transform_2, window_bounds = array<i64: 16, 32>}, {pipeline_mode = #tpu.pipeline_mode<synchronous>, transform_indices = @transform_3, window_bounds = array<i64: 2, 1, 32>}, {pipeline_mode = #tpu.pipeline_mode<synchronous>, transform_indices = @transform_4, window_bounds = array<i64: 2, 1, 32>}, {pipeline_mode = #tpu.pipeline_mode<synchronous>, transform_indices = @transform_5, window_bounds = array<i64: 2, 32, 32>}, {pipeline_mode = #tpu.pipeline_mode<synchronous>, transform_indices = @transform_6, window_bounds = array<i64: 2, 1, 32>}, {pipeline_mode = #tpu.pipeline_mode<synchronous>, transform_indices = @transform_7, window_bounds = array<i64: 2, 32, 32>}, {pipeline_mode = #tpu.pipeline_mode<synchronous>, transform_indices = @transform_8, window_bounds = array<i64: 2, 1, 32>}, {pipeline_mode = #tpu.pipeline_mode<synchronous>, transform_indices = @transform_9, window_bounds = array<i64: 2, 32, 32>}, {pipeline_mode = #tpu.pipeline_mode<synchronous>, transform_indices = @transform_10, window_bounds = array<i64: 2, 1, 32>}, {pipeline_mode = #tpu.pipeline_mode<synchronous>, transform_indices = @transform_11, window_bounds = array<i64: 2, 32, 32>}, {pipeline_mode = #tpu.pipeline_mode<synchronous>, transform_indices = @transform_12, window_bounds = array<i64: 2, 1, 32>}, {pipeline_mode = #tpu.pipeline_mode<synchronous>, transform_indices = @transform_13, window_bounds = array<i64: 2, 1, 32>}, {pipeline_mode = #tpu.pipeline_mode<synchronous>, transform_indices = @transform_14, window_bounds = array<i64: 2, 1, 32>}, {pipeline_mode = #tpu.pipeline_mode<synchronous>, transform_indices = @transform_15, window_bounds = array<i64: 2, 32, 64>}, {pipeline_mode = #tpu.pipeline_mode<synchronous>, transform_indices = @transform_16, window_bounds = array<i64: 2, 1, 64>}, {pipeline_mode = #tpu.pipeline_mode<synchronous>, transform_indices = @transform_17, window_bounds = array<i64: 2, 64, 32>}, {pipeline_mode = #tpu.pipeline_mode<synchronous>, transform_indices = @transform_18, window_bounds = array<i64: 2, 1, 32>}, {pipeline_mode = #tpu.pipeline_mode<synchronous>, transform_indices = @transform_19, window_bounds = array<i64: 32, 8>}, {pipeline_mode = #tpu.pipeline_mode<synchronous>, transform_indices = @transform_20, window_bounds = array<i64: 1, 8>}, {pipeline_mode = #tpu.pipeline_mode<synchronous>, transform_indices = @transform_21, window_bounds = array<i64: 2, 8>}]} {
    %c0 = arith.constant 0 : index
    %c0_0 = arith.constant 0 : index
    %0 = vector.load %arg1[%c0, %c0_0] : memref<16x256xf32, #tpu.memory_space<vmem>>, vector<16x256xf32>
    %c0_1 = arith.constant 0 : index
    %c0_2 = arith.constant 0 : index
    %1 = vector.load %arg2[%c0_1, %c0_2] : memref<256x32xf32, #tpu.memory_space<vmem>>, vector<256x32xf32>
    %cst = arith.constant dense<0.000000e+00> : vector<16x32xf32>
    %2 = tpu.matmul %0, %1, %cst {dimension_numbers = #tpu.dot_dimension_numbers<[1], [0], [0], [1], [0, 0, 1, 1], [], []>} : vector<16x256xf32>, vector<256x32xf32>, vector<16x32xf32> -> vector<16x32xf32>
    %c0_3 = arith.constant 0 : index
    %c0_4 = arith.constant 0 : index
    %3 = vector.load %arg3[%c0_3, %c0_4] : memref<16x32xf32, #tpu.memory_space<vmem>>, vector<16x32xf32>
    %4 = arith.addf %2, %3 : vector<16x32xf32>
    %5 = tpu.iota {dimensions = array<i32: 2>} : vector<1x1x8xi32>
    %c5_i32 = arith.constant 5 : i32
    %6 = vector.broadcast %c5_i32 : i32 to vector<1x1x8xi32>
    %7 = arith.cmpi slt, %5, %6 : vector<1x1x8xi32>
    %cst_5 = arith.constant 0.000000e+00 : f32
    %cst_6 = arith.constant -1.000000e+30 : f32
    %8 = vector.broadcast %cst_5 : f32 to vector<1x1x8xf32>
    %9 = vector.broadcast %cst_6 : f32 to vector<1x1x8xf32>
    %10 = arith.select %7, %8, %9 : vector<1x1x8xi1>, vector<1x1x8xf32>
    %c0_7 = arith.constant 0 : index
    %c0_8 = arith.constant 0 : index
    %c0_9 = arith.constant 0 : index
    %11 = vector.load %arg4[%c0_7, %c0_8, %c0_9] : memref<2x1x32xf32, #tpu.memory_space<vmem>>, vector<1x1x32xf32>
    %12 = vector.shape_cast %11 : vector<1x1x32xf32> to vector<1x32xf32>
    %c0_10 = arith.constant 0 : index
    %c0_11 = arith.constant 0 : index
    %c0_12 = arith.constant 0 : index
    %13 = vector.load %arg5[%c0_10, %c0_11, %c0_12] : memref<2x1x32xf32, #tpu.memory_space<vmem>>, vector<1x1x32xf32>
    %14 = vector.shape_cast %13 : vector<1x1x32xf32> to vector<1x32xf32>
    %cst_13 = arith.constant dense<0.000000e+00> : vector<16xf32>
    %15 = vector.multi_reduction <add>, %4, %cst_13 [1] : vector<16x32xf32> to vector<16xf32>
    %16 = vector.shape_cast %15 : vector<16xf32> to vector<16x1xf32>
    %cst_14 = arith.constant 3.200000e+01 : f32
    %17 = vector.broadcast %cst_14 : f32 to vector<16x1xf32>
    %18 = arith.divf %16, %17 : vector<16x1xf32>
    %19 = vector.broadcast %18 : vector<16x1xf32> to vector<16x32xf32>
    %20 = arith.subf %4, %19 : vector<16x32xf32>
    %21 = arith.mulf %20, %20 : vector<16x32xf32>
    %cst_15 = arith.constant dense<0.000000e+00> : vector<16xf32>
    %22 = vector.multi_reduction <add>, %21, %cst_15 [1] : vector<16x32xf32> to vector<16xf32>
    %23 = vector.shape_cast %22 : vector<16xf32> to vector<16x1xf32>
    %cst_16 = arith.constant 3.200000e+01 : f32
    %24 = vector.broadcast %cst_16 : f32 to vector<16x1xf32>
    %25 = arith.divf %23, %24 : vector<16x1xf32>
    %26 = vector.broadcast %18 : vector<16x1xf32> to vector<16x32xf32>
    %27 = arith.subf %4, %26 : vector<16x32xf32>
    %cst_17 = arith.constant 9.99999974E-6 : f32
    %28 = vector.broadcast %cst_17 : f32 to vector<16x1xf32>
    %29 = arith.addf %25, %28 : vector<16x1xf32>
    %30 = math.rsqrt %29 : vector<16x1xf32>
    %31 = vector.broadcast %30 : vector<16x1xf32> to vector<16x32xf32>
    %32 = arith.mulf %27, %31 : vector<16x32xf32>
    %33 = vector.broadcast %12 : vector<1x32xf32> to vector<16x32xf32>
    %34 = arith.mulf %32, %33 : vector<16x32xf32>
    %35 = vector.broadcast %14 : vector<1x32xf32> to vector<16x32xf32>
    %36 = arith.addf %34, %35 : vector<16x32xf32>
    %c0_18 = arith.constant 0 : index
    %c0_19 = arith.constant 0 : index
    %c0_20 = arith.constant 0 : index
    %37 = vector.load %arg6[%c0_18, %c0_19, %c0_20] : memref<2x32x32xf32, #tpu.memory_space<vmem>>, vector<1x32x32xf32>
    %38 = vector.shape_cast %37 : vector<1x32x32xf32> to vector<32x32xf32>
    %cst_21 = arith.constant dense<0.000000e+00> : vector<16x32xf32>
    %39 = tpu.matmul %36, %38, %cst_21 {dimension_numbers = #tpu.dot_dimension_numbers<[1], [0], [0], [1], [0, 0, 1, 1], [], []>} : vector<16x32xf32>, vector<32x32xf32>, vector<16x32xf32> -> vector<16x32xf32>
    %c0_22 = arith.constant 0 : index
    %c0_23 = arith.constant 0 : index
    %c0_24 = arith.constant 0 : index
    %40 = vector.load %arg7[%c0_22, %c0_23, %c0_24] : memref<2x1x32xf32, #tpu.memory_space<vmem>>, vector<1x1x32xf32>
    %41 = vector.shape_cast %40 : vector<1x1x32xf32> to vector<1x32xf32>
    %42 = vector.broadcast %41 : vector<1x32xf32> to vector<16x32xf32>
    %43 = arith.addf %39, %42 : vector<16x32xf32>
    %c0_25 = arith.constant 0 : index
    %c0_26 = arith.constant 0 : index
    %c0_27 = arith.constant 0 : index
    %44 = vector.load %arg8[%c0_25, %c0_26, %c0_27] : memref<2x32x32xf32, #tpu.memory_space<vmem>>, vector<1x32x32xf32>
    %45 = vector.shape_cast %44 : vector<1x32x32xf32> to vector<32x32xf32>
    %cst_28 = arith.constant dense<0.000000e+00> : vector<16x32xf32>
    %46 = tpu.matmul %36, %45, %cst_28 {dimension_numbers = #tpu.dot_dimension_numbers<[1], [0], [0], [1], [0, 0, 1, 1], [], []>} : vector<16x32xf32>, vector<32x32xf32>, vector<16x32xf32> -> vector<16x32xf32>
    %c0_29 = arith.constant 0 : index
    %c0_30 = arith.constant 0 : index
    %c0_31 = arith.constant 0 : index
    %47 = vector.load %arg9[%c0_29, %c0_30, %c0_31] : memref<2x1x32xf32, #tpu.memory_space<vmem>>, vector<1x1x32xf32>
    %48 = vector.shape_cast %47 : vector<1x1x32xf32> to vector<1x32xf32>
    %49 = vector.broadcast %48 : vector<1x32xf32> to vector<16x32xf32>
    %50 = arith.addf %46, %49 : vector<16x32xf32>
    %c0_32 = arith.constant 0 : index
    %c0_33 = arith.constant 0 : index
    %c0_34 = arith.constant 0 : index
    %51 = vector.load %arg10[%c0_32, %c0_33, %c0_34] : memref<2x32x32xf32, #tpu.memory_space<vmem>>, vector<1x32x32xf32>
    %52 = vector.shape_cast %51 : vector<1x32x32xf32> to vector<32x32xf32>
    %cst_35 = arith.constant dense<0.000000e+00> : vector<16x32xf32>
    %53 = tpu.matmul %36, %52, %cst_35 {dimension_numbers = #tpu.dot_dimension_numbers<[1], [0], [0], [1], [0, 0, 1, 1], [], []>} : vector<16x32xf32>, vector<32x32xf32>, vector<16x32xf32> -> vector<16x32xf32>
    %c0_36 = arith.constant 0 : index
    %c0_37 = arith.constant 0 : index
    %c0_38 = arith.constant 0 : index
    %54 = vector.load %arg11[%c0_36, %c0_37, %c0_38] : memref<2x1x32xf32, #tpu.memory_space<vmem>>, vector<1x1x32xf32>
    %55 = vector.shape_cast %54 : vector<1x1x32xf32> to vector<1x32xf32>
    %56 = vector.broadcast %55 : vector<1x32xf32> to vector<16x32xf32>
    %57 = arith.addf %53, %56 : vector<16x32xf32>
    %58 = vector.extract_strided_slice %43 {offsets = [0, 0], sizes = [16, 8], strides = [1, 1]} : vector<16x32xf32> to vector<16x8xf32>
    %59 = vector.shape_cast %58 : vector<16x8xf32> to vector<2x8x8xf32>
    %60 = vector.extract_strided_slice %50 {offsets = [0, 0], sizes = [16, 8], strides = [1, 1]} : vector<16x32xf32> to vector<16x8xf32>
    %61 = vector.shape_cast %60 : vector<16x8xf32> to vector<2x8x8xf32>
    %62 = vector.extract_strided_slice %57 {offsets = [0, 0], sizes = [16, 8], strides = [1, 1]} : vector<16x32xf32> to vector<16x8xf32>
    %63 = vector.shape_cast %62 : vector<16x8xf32> to vector<2x8x8xf32>
    "tpu.trace_start"() <{level = 10 : i32, message = "bqd,bkd->bqk"}> : () -> ()
    %cst_39 = arith.constant dense<0.000000e+00> : vector<2x8x8xf32>
    %64 = tpu.matmul %59, %61, %cst_39 {dimension_numbers = #tpu.dot_dimension_numbers<[2], [2], [1], [1], [0, 0, 0, 1, 1, 1], [0], [0]>} : vector<2x8x8xf32>, vector<2x8x8xf32>, vector<2x8x8xf32> -> vector<2x8x8xf32>
    "tpu.trace_stop"() : () -> ()
    %65 = vector.broadcast %10 : vector<1x1x8xf32> to vector<2x8x8xf32>
    %66 = arith.addf %64, %65 : vector<2x8x8xf32>
    %cst_40 = arith.constant dense<0xFF800000> : vector<2x8xf32>
    %67 = vector.multi_reduction <maximumf>, %66, %cst_40 [2] : vector<2x8x8xf32> to vector<2x8xf32>
    %68 = vector.shape_cast %67 : vector<2x8xf32> to vector<2x8x1xf32>
    %69 = vector.broadcast %68 : vector<2x8x1xf32> to vector<2x8x8xf32>
    %70 = arith.subf %66, %69 : vector<2x8x8xf32>
    %71 = math.exp %70 : vector<2x8x8xf32>
    %cst_41 = arith.constant dense<0.000000e+00> : vector<2x8xf32>
    %72 = vector.multi_reduction <add>, %71, %cst_41 [2] : vector<2x8x8xf32> to vector<2x8xf32>
    %73 = vector.shape_cast %72 : vector<2x8xf32> to vector<2x8x1xf32>
    %74 = tpu.reciprocal %73 {approx = true} : vector<2x8x1xf32> -> vector<2x8x1xf32>
    %75 = vector.broadcast %74 : vector<2x8x1xf32> to vector<2x8x8xf32>
    %76 = arith.mulf %71, %75 : vector<2x8x8xf32>
    "tpu.trace_start"() <{level = 10 : i32, message = "bqk,bkd->bqd"}> : () -> ()
    %cst_42 = arith.constant dense<0.000000e+00> : vector<2x8x8xf32>
    %77 = tpu.matmul %76, %63, %cst_42 {dimension_numbers = #tpu.dot_dimension_numbers<[2], [1], [1], [2], [0, 0, 0, 1, 1, 2], [0], [0]>} : vector<2x8x8xf32>, vector<2x8x8xf32>, vector<2x8x8xf32> -> vector<2x8x8xf32>
    "tpu.trace_stop"() : () -> ()
    %78 = vector.shape_cast %77 : vector<2x8x8xf32> to vector<16x8xf32>
    %79 = vector.extract_strided_slice %43 {offsets = [0, 8], sizes = [16, 8], strides = [1, 1]} : vector<16x32xf32> to vector<16x8xf32>
    %80 = vector.shape_cast %79 : vector<16x8xf32> to vector<2x8x8xf32>
    %81 = vector.extract_strided_slice %50 {offsets = [0, 8], sizes = [16, 8], strides = [1, 1]} : vector<16x32xf32> to vector<16x8xf32>
    %82 = vector.shape_cast %81 : vector<16x8xf32> to vector<2x8x8xf32>
    %83 = vector.extract_strided_slice %57 {offsets = [0, 8], sizes = [16, 8], strides = [1, 1]} : vector<16x32xf32> to vector<16x8xf32>
    %84 = vector.shape_cast %83 : vector<16x8xf32> to vector<2x8x8xf32>
    "tpu.trace_start"() <{level = 10 : i32, message = "bqd,bkd->bqk"}> : () -> ()
    %cst_43 = arith.constant dense<0.000000e+00> : vector<2x8x8xf32>
    %85 = tpu.matmul %80, %82, %cst_43 {dimension_numbers = #tpu.dot_dimension_numbers<[2], [2], [1], [1], [0, 0, 0, 1, 1, 1], [0], [0]>} : vector<2x8x8xf32>, vector<2x8x8xf32>, vector<2x8x8xf32> -> vector<2x8x8xf32>
    "tpu.trace_stop"() : () -> ()
    %86 = vector.broadcast %10 : vector<1x1x8xf32> to vector<2x8x8xf32>
    %87 = arith.addf %85, %86 : vector<2x8x8xf32>
    %cst_44 = arith.constant dense<0xFF800000> : vector<2x8xf32>
    %88 = vector.multi_reduction <maximumf>, %87, %cst_44 [2] : vector<2x8x8xf32> to vector<2x8xf32>
    %89 = vector.shape_cast %88 : vector<2x8xf32> to vector<2x8x1xf32>
    %90 = vector.broadcast %89 : vector<2x8x1xf32> to vector<2x8x8xf32>
    %91 = arith.subf %87, %90 : vector<2x8x8xf32>
    %92 = math.exp %91 : vector<2x8x8xf32>
    %cst_45 = arith.constant dense<0.000000e+00> : vector<2x8xf32>
    %93 = vector.multi_reduction <add>, %92, %cst_45 [2] : vector<2x8x8xf32> to vector<2x8xf32>
    %94 = vector.shape_cast %93 : vector<2x8xf32> to vector<2x8x1xf32>
    %95 = tpu.reciprocal %94 {approx = true} : vector<2x8x1xf32> -> vector<2x8x1xf32>
    %96 = vector.broadcast %95 : vector<2x8x1xf32> to vector<2x8x8xf32>
    %97 = arith.mulf %92, %96 : vector<2x8x8xf32>
    "tpu.trace_start"() <{level = 10 : i32, message = "bqk,bkd->bqd"}> : () -> ()
    %cst_46 = arith.constant dense<0.000000e+00> : vector<2x8x8xf32>
    %98 = tpu.matmul %97, %84, %cst_46 {dimension_numbers = #tpu.dot_dimension_numbers<[2], [1], [1], [2], [0, 0, 0, 1, 1, 2], [0], [0]>} : vector<2x8x8xf32>, vector<2x8x8xf32>, vector<2x8x8xf32> -> vector<2x8x8xf32>
    "tpu.trace_stop"() : () -> ()
    %99 = vector.shape_cast %98 : vector<2x8x8xf32> to vector<16x8xf32>
    %100 = vector.extract_strided_slice %43 {offsets = [0, 16], sizes = [16, 8], strides = [1, 1]} : vector<16x32xf32> to vector<16x8xf32>
    %101 = vector.shape_cast %100 : vector<16x8xf32> to vector<2x8x8xf32>
    %102 = vector.extract_strided_slice %50 {offsets = [0, 16], sizes = [16, 8], strides = [1, 1]} : vector<16x32xf32> to vector<16x8xf32>
    %103 = vector.shape_cast %102 : vector<16x8xf32> to vector<2x8x8xf32>
    %104 = vector.extract_strided_slice %57 {offsets = [0, 16], sizes = [16, 8], strides = [1, 1]} : vector<16x32xf32> to vector<16x8xf32>
    %105 = vector.shape_cast %104 : vector<16x8xf32> to vector<2x8x8xf32>
    "tpu.trace_start"() <{level = 10 : i32, message = "bqd,bkd->bqk"}> : () -> ()
    %cst_47 = arith.constant dense<0.000000e+00> : vector<2x8x8xf32>
    %106 = tpu.matmul %101, %103, %cst_47 {dimension_numbers = #tpu.dot_dimension_numbers<[2], [2], [1], [1], [0, 0, 0, 1, 1, 1], [0], [0]>} : vector<2x8x8xf32>, vector<2x8x8xf32>, vector<2x8x8xf32> -> vector<2x8x8xf32>
    "tpu.trace_stop"() : () -> ()
    %107 = vector.broadcast %10 : vector<1x1x8xf32> to vector<2x8x8xf32>
    %108 = arith.addf %106, %107 : vector<2x8x8xf32>
    %cst_48 = arith.constant dense<0xFF800000> : vector<2x8xf32>
    %109 = vector.multi_reduction <maximumf>, %108, %cst_48 [2] : vector<2x8x8xf32> to vector<2x8xf32>
    %110 = vector.shape_cast %109 : vector<2x8xf32> to vector<2x8x1xf32>
    %111 = vector.broadcast %110 : vector<2x8x1xf32> to vector<2x8x8xf32>
    %112 = arith.subf %108, %111 : vector<2x8x8xf32>
    %113 = math.exp %112 : vector<2x8x8xf32>
    %cst_49 = arith.constant dense<0.000000e+00> : vector<2x8xf32>
    %114 = vector.multi_reduction <add>, %113, %cst_49 [2] : vector<2x8x8xf32> to vector<2x8xf32>
    %115 = vector.shape_cast %114 : vector<2x8xf32> to vector<2x8x1xf32>
    %116 = tpu.reciprocal %115 {approx = true} : vector<2x8x1xf32> -> vector<2x8x1xf32>
    %117 = vector.broadcast %116 : vector<2x8x1xf32> to vector<2x8x8xf32>
    %118 = arith.mulf %113, %117 : vector<2x8x8xf32>
    "tpu.trace_start"() <{level = 10 : i32, message = "bqk,bkd->bqd"}> : () -> ()
    %cst_50 = arith.constant dense<0.000000e+00> : vector<2x8x8xf32>
    %119 = tpu.matmul %118, %105, %cst_50 {dimension_numbers = #tpu.dot_dimension_numbers<[2], [1], [1], [2], [0, 0, 0, 1, 1, 2], [0], [0]>} : vector<2x8x8xf32>, vector<2x8x8xf32>, vector<2x8x8xf32> -> vector<2x8x8xf32>
    "tpu.trace_stop"() : () -> ()
    %120 = vector.shape_cast %119 : vector<2x8x8xf32> to vector<16x8xf32>
    %121 = vector.extract_strided_slice %43 {offsets = [0, 24], sizes = [16, 8], strides = [1, 1]} : vector<16x32xf32> to vector<16x8xf32>
    %122 = vector.shape_cast %121 : vector<16x8xf32> to vector<2x8x8xf32>
    %123 = vector.extract_strided_slice %50 {offsets = [0, 24], sizes = [16, 8], strides = [1, 1]} : vector<16x32xf32> to vector<16x8xf32>
    %124 = vector.shape_cast %123 : vector<16x8xf32> to vector<2x8x8xf32>
    %125 = vector.extract_strided_slice %57 {offsets = [0, 24], sizes = [16, 8], strides = [1, 1]} : vector<16x32xf32> to vector<16x8xf32>
    %126 = vector.shape_cast %125 : vector<16x8xf32> to vector<2x8x8xf32>
    "tpu.trace_start"() <{level = 10 : i32, message = "bqd,bkd->bqk"}> : () -> ()
    %cst_51 = arith.constant dense<0.000000e+00> : vector<2x8x8xf32>
    %127 = tpu.matmul %122, %124, %cst_51 {dimension_numbers = #tpu.dot_dimension_numbers<[2], [2], [1], [1], [0, 0, 0, 1, 1, 1], [0], [0]>} : vector<2x8x8xf32>, vector<2x8x8xf32>, vector<2x8x8xf32> -> vector<2x8x8xf32>
    "tpu.trace_stop"() : () -> ()
    %128 = vector.broadcast %10 : vector<1x1x8xf32> to vector<2x8x8xf32>
    %129 = arith.addf %127, %128 : vector<2x8x8xf32>
    %cst_52 = arith.constant dense<0xFF800000> : vector<2x8xf32>
    %130 = vector.multi_reduction <maximumf>, %129, %cst_52 [2] : vector<2x8x8xf32> to vector<2x8xf32>
    %131 = vector.shape_cast %130 : vector<2x8xf32> to vector<2x8x1xf32>
    %132 = vector.broadcast %131 : vector<2x8x1xf32> to vector<2x8x8xf32>
    %133 = arith.subf %129, %132 : vector<2x8x8xf32>
    %134 = math.exp %133 : vector<2x8x8xf32>
    %cst_53 = arith.constant dense<0.000000e+00> : vector<2x8xf32>
    %135 = vector.multi_reduction <add>, %134, %cst_53 [2] : vector<2x8x8xf32> to vector<2x8xf32>
    %136 = vector.shape_cast %135 : vector<2x8xf32> to vector<2x8x1xf32>
    %137 = tpu.reciprocal %136 {approx = true} : vector<2x8x1xf32> -> vector<2x8x1xf32>
    %138 = vector.broadcast %137 : vector<2x8x1xf32> to vector<2x8x8xf32>
    %139 = arith.mulf %134, %138 : vector<2x8x8xf32>
    "tpu.trace_start"() <{level = 10 : i32, message = "bqk,bkd->bqd"}> : () -> ()
    %cst_54 = arith.constant dense<0.000000e+00> : vector<2x8x8xf32>
    %140 = tpu.matmul %139, %126, %cst_54 {dimension_numbers = #tpu.dot_dimension_numbers<[2], [1], [1], [2], [0, 0, 0, 1, 1, 2], [0], [0]>} : vector<2x8x8xf32>, vector<2x8x8xf32>, vector<2x8x8xf32> -> vector<2x8x8xf32>
    "tpu.trace_stop"() : () -> ()
    %141 = vector.shape_cast %140 : vector<2x8x8xf32> to vector<16x8xf32>
    %142 = tpu.concatenate %78, %99, %120, %141 in 1 : vector<16x8xf32>, vector<16x8xf32>, vector<16x8xf32>, vector<16x8xf32> -> vector<16x32xf32>
    %c0_55 = arith.constant 0 : index
    %c0_56 = arith.constant 0 : index
    %c0_57 = arith.constant 0 : index
    %143 = vector.load %arg12[%c0_55, %c0_56, %c0_57] : memref<2x32x32xf32, #tpu.memory_space<vmem>>, vector<1x32x32xf32>
    %144 = vector.shape_cast %143 : vector<1x32x32xf32> to vector<32x32xf32>
    %cst_58 = arith.constant dense<0.000000e+00> : vector<16x32xf32>
    %145 = tpu.matmul %142, %144, %cst_58 {dimension_numbers = #tpu.dot_dimension_numbers<[1], [0], [0], [1], [0, 0, 1, 1], [], []>} : vector<16x32xf32>, vector<32x32xf32>, vector<16x32xf32> -> vector<16x32xf32>
    %c0_59 = arith.constant 0 : index
    %c0_60 = arith.constant 0 : index
    %c0_61 = arith.constant 0 : index
    %146 = vector.load %arg13[%c0_59, %c0_60, %c0_61] : memref<2x1x32xf32, #tpu.memory_space<vmem>>, vector<1x1x32xf32>
    %147 = vector.shape_cast %146 : vector<1x1x32xf32> to vector<1x32xf32>
    %148 = vector.broadcast %147 : vector<1x32xf32> to vector<16x32xf32>
    %149 = arith.addf %145, %148 : vector<16x32xf32>
    %150 = arith.addf %4, %149 : vector<16x32xf32>
    %c0_62 = arith.constant 0 : index
    %c0_63 = arith.constant 0 : index
    %c0_64 = arith.constant 0 : index
    %151 = vector.load %arg14[%c0_62, %c0_63, %c0_64] : memref<2x1x32xf32, #tpu.memory_space<vmem>>, vector<1x1x32xf32>
    %152 = vector.shape_cast %151 : vector<1x1x32xf32> to vector<1x32xf32>
    %c0_65 = arith.constant 0 : index
    %c0_66 = arith.constant 0 : index
    %c0_67 = arith.constant 0 : index
    %153 = vector.load %arg15[%c0_65, %c0_66, %c0_67] : memref<2x1x32xf32, #tpu.memory_space<vmem>>, vector<1x1x32xf32>
    %154 = vector.shape_cast %153 : vector<1x1x32xf32> to vector<1x32xf32>
    %cst_68 = arith.constant dense<0.000000e+00> : vector<16xf32>
    %155 = vector.multi_reduction <add>, %150, %cst_68 [1] : vector<16x32xf32> to vector<16xf32>
    %156 = vector.shape_cast %155 : vector<16xf32> to vector<16x1xf32>
    %cst_69 = arith.constant 3.200000e+01 : f32
    %157 = vector.broadcast %cst_69 : f32 to vector<16x1xf32>
    %158 = arith.divf %156, %157 : vector<16x1xf32>
    %159 = vector.broadcast %158 : vector<16x1xf32> to vector<16x32xf32>
    %160 = arith.subf %150, %159 : vector<16x32xf32>
    %161 = arith.mulf %160, %160 : vector<16x32xf32>
    %cst_70 = arith.constant dense<0.000000e+00> : vector<16xf32>
    %162 = vector.multi_reduction <add>, %161, %cst_70 [1] : vector<16x32xf32> to vector<16xf32>
    %163 = vector.shape_cast %162 : vector<16xf32> to vector<16x1xf32>
    %cst_71 = arith.constant 3.200000e+01 : f32
    %164 = vector.broadcast %cst_71 : f32 to vector<16x1xf32>
    %165 = arith.divf %163, %164 : vector<16x1xf32>
    %166 = vector.broadcast %158 : vector<16x1xf32> to vector<16x32xf32>
    %167 = arith.subf %150, %166 : vector<16x32xf32>
    %cst_72 = arith.constant 9.99999974E-6 : f32
    %168 = vector.broadcast %cst_72 : f32 to vector<16x1xf32>
    %169 = arith.addf %165, %168 : vector<16x1xf32>
    %170 = math.rsqrt %169 : vector<16x1xf32>
    %171 = vector.broadcast %170 : vector<16x1xf32> to vector<16x32xf32>
    %172 = arith.mulf %167, %171 : vector<16x32xf32>
    %173 = vector.broadcast %152 : vector<1x32xf32> to vector<16x32xf32>
    %174 = arith.mulf %172, %173 : vector<16x32xf32>
    %175 = vector.broadcast %154 : vector<1x32xf32> to vector<16x32xf32>
    %176 = arith.addf %174, %175 : vector<16x32xf32>
    %c0_73 = arith.constant 0 : index
    %c0_74 = arith.constant 0 : index
    %c0_75 = arith.constant 0 : index
    %177 = vector.load %arg16[%c0_73, %c0_74, %c0_75] : memref<2x32x64xf32, #tpu.memory_space<vmem>>, vector<1x32x64xf32>
    %178 = vector.shape_cast %177 : vector<1x32x64xf32> to vector<32x64xf32>
    %cst_76 = arith.constant dense<0.000000e+00> : vector<16x64xf32>
    %179 = tpu.matmul %176, %178, %cst_76 {dimension_numbers = #tpu.dot_dimension_numbers<[1], [0], [0], [1], [0, 0, 1, 1], [], []>} : vector<16x32xf32>, vector<32x64xf32>, vector<16x64xf32> -> vector<16x64xf32>
    %c0_77 = arith.constant 0 : index
    %c0_78 = arith.constant 0 : index
    %c0_79 = arith.constant 0 : index
    %180 = vector.load %arg17[%c0_77, %c0_78, %c0_79] : memref<2x1x64xf32, #tpu.memory_space<vmem>>, vector<1x1x64xf32>
    %181 = vector.shape_cast %180 : vector<1x1x64xf32> to vector<1x64xf32>
    %182 = vector.broadcast %181 : vector<1x64xf32> to vector<16x64xf32>
    %183 = arith.addf %179, %182 : vector<16x64xf32>
    %cst_80 = arith.constant 5.000000e-01 : f32
    %184 = vector.broadcast %cst_80 : f32 to vector<16x64xf32>
    %185 = arith.mulf %184, %183 : vector<16x64xf32>
    %186 = arith.mulf %183, %183 : vector<16x64xf32>
    %187 = arith.mulf %183, %186 : vector<16x64xf32>
    %cst_81 = arith.constant 4.471500e-02 : f32
    %188 = vector.broadcast %cst_81 : f32 to vector<16x64xf32>
    %189 = arith.mulf %188, %187 : vector<16x64xf32>
    %190 = arith.addf %183, %189 : vector<16x64xf32>
    %cst_82 = arith.constant 0.797884583 : f32
    %191 = vector.broadcast %cst_82 : f32 to vector<16x64xf32>
    %192 = arith.mulf %191, %190 : vector<16x64xf32>
    %193 = math.tanh %192 : vector<16x64xf32>
    %cst_83 = arith.constant 1.000000e+00 : f32
    %194 = vector.broadcast %cst_83 : f32 to vector<16x64xf32>
    %195 = arith.addf %194, %193 : vector<16x64xf32>
    %196 = arith.mulf %185, %195 : vector<16x64xf32>
    %c0_84 = arith.constant 0 : index
    %c0_85 = arith.constant 0 : index
    %c0_86 = arith.constant 0 : index
    %197 = vector.load %arg18[%c0_84, %c0_85, %c0_86] : memref<2x64x32xf32, #tpu.memory_space<vmem>>, vector<1x64x32xf32>
    %198 = vector.shape_cast %197 : vector<1x64x32xf32> to vector<64x32xf32>
    %cst_87 = arith.constant dense<0.000000e+00> : vector<16x32xf32>
    %199 = tpu.matmul %196, %198, %cst_87 {dimension_numbers = #tpu.dot_dimension_numbers<[1], [0], [0], [1], [0, 0, 1, 1], [], []>} : vector<16x64xf32>, vector<64x32xf32>, vector<16x32xf32> -> vector<16x32xf32>
    %c0_88 = arith.constant 0 : index
    %c0_89 = arith.constant 0 : index
    %c0_90 = arith.constant 0 : index
    %200 = vector.load %arg19[%c0_88, %c0_89, %c0_90] : memref<2x1x32xf32, #tpu.memory_space<vmem>>, vector<1x1x32xf32>
    %201 = vector.shape_cast %200 : vector<1x1x32xf32> to vector<1x32xf32>
    %202 = vector.broadcast %201 : vector<1x32xf32> to vector<16x32xf32>
    %203 = arith.addf %199, %202 : vector<16x32xf32>
    %204 = arith.addf %150, %203 : vector<16x32xf32>
    %c1 = arith.constant 1 : index
    %c0_91 = arith.constant 0 : index
    %c0_92 = arith.constant 0 : index
    %205 = vector.load %arg4[%c1, %c0_91, %c0_92] : memref<2x1x32xf32, #tpu.memory_space<vmem>>, vector<1x1x32xf32>
    %206 = vector.shape_cast %205 : vector<1x1x32xf32> to vector<1x32xf32>
    %c1_93 = arith.constant 1 : index
    %c0_94 = arith.constant 0 : index
    %c0_95 = arith.constant 0 : index
    %207 = vector.load %arg5[%c1_93, %c0_94, %c0_95] : memref<2x1x32xf32, #tpu.memory_space<vmem>>, vector<1x1x32xf32>
    %208 = vector.shape_cast %207 : vector<1x1x32xf32> to vector<1x32xf32>
    %cst_96 = arith.constant dense<0.000000e+00> : vector<16xf32>
    %209 = vector.multi_reduction <add>, %204, %cst_96 [1] : vector<16x32xf32> to vector<16xf32>
    %210 = vector.shape_cast %209 : vector<16xf32> to vector<16x1xf32>
    %cst_97 = arith.constant 3.200000e+01 : f32
    %211 = vector.broadcast %cst_97 : f32 to vector<16x1xf32>
    %212 = arith.divf %210, %211 : vector<16x1xf32>
    %213 = vector.broadcast %212 : vector<16x1xf32> to vector<16x32xf32>
    %214 = arith.subf %204, %213 : vector<16x32xf32>
    %215 = arith.mulf %214, %214 : vector<16x32xf32>
    %cst_98 = arith.constant dense<0.000000e+00> : vector<16xf32>
    %216 = vector.multi_reduction <add>, %215, %cst_98 [1] : vector<16x32xf32> to vector<16xf32>
    %217 = vector.shape_cast %216 : vector<16xf32> to vector<16x1xf32>
    %cst_99 = arith.constant 3.200000e+01 : f32
    %218 = vector.broadcast %cst_99 : f32 to vector<16x1xf32>
    %219 = arith.divf %217, %218 : vector<16x1xf32>
    %220 = vector.broadcast %212 : vector<16x1xf32> to vector<16x32xf32>
    %221 = arith.subf %204, %220 : vector<16x32xf32>
    %cst_100 = arith.constant 9.99999974E-6 : f32
    %222 = vector.broadcast %cst_100 : f32 to vector<16x1xf32>
    %223 = arith.addf %219, %222 : vector<16x1xf32>
    %224 = math.rsqrt %223 : vector<16x1xf32>
    %225 = vector.broadcast %224 : vector<16x1xf32> to vector<16x32xf32>
    %226 = arith.mulf %221, %225 : vector<16x32xf32>
    %227 = vector.broadcast %206 : vector<1x32xf32> to vector<16x32xf32>
    %228 = arith.mulf %226, %227 : vector<16x32xf32>
    %229 = vector.broadcast %208 : vector<1x32xf32> to vector<16x32xf32>
    %230 = arith.addf %228, %229 : vector<16x32xf32>
    %c1_101 = arith.constant 1 : index
    %c0_102 = arith.constant 0 : index
    %c0_103 = arith.constant 0 : index
    %231 = vector.load %arg6[%c1_101, %c0_102, %c0_103] : memref<2x32x32xf32, #tpu.memory_space<vmem>>, vector<1x32x32xf32>
    %232 = vector.shape_cast %231 : vector<1x32x32xf32> to vector<32x32xf32>
    %cst_104 = arith.constant dense<0.000000e+00> : vector<16x32xf32>
    %233 = tpu.matmul %230, %232, %cst_104 {dimension_numbers = #tpu.dot_dimension_numbers<[1], [0], [0], [1], [0, 0, 1, 1], [], []>} : vector<16x32xf32>, vector<32x32xf32>, vector<16x32xf32> -> vector<16x32xf32>
    %c1_105 = arith.constant 1 : index
    %c0_106 = arith.constant 0 : index
    %c0_107 = arith.constant 0 : index
    %234 = vector.load %arg7[%c1_105, %c0_106, %c0_107] : memref<2x1x32xf32, #tpu.memory_space<vmem>>, vector<1x1x32xf32>
    %235 = vector.shape_cast %234 : vector<1x1x32xf32> to vector<1x32xf32>
    %236 = vector.broadcast %235 : vector<1x32xf32> to vector<16x32xf32>
    %237 = arith.addf %233, %236 : vector<16x32xf32>
    %c1_108 = arith.constant 1 : index
    %c0_109 = arith.constant 0 : index
    %c0_110 = arith.constant 0 : index
    %238 = vector.load %arg8[%c1_108, %c0_109, %c0_110] : memref<2x32x32xf32, #tpu.memory_space<vmem>>, vector<1x32x32xf32>
    %239 = vector.shape_cast %238 : vector<1x32x32xf32> to vector<32x32xf32>
    %cst_111 = arith.constant dense<0.000000e+00> : vector<16x32xf32>
    %240 = tpu.matmul %230, %239, %cst_111 {dimension_numbers = #tpu.dot_dimension_numbers<[1], [0], [0], [1], [0, 0, 1, 1], [], []>} : vector<16x32xf32>, vector<32x32xf32>, vector<16x32xf32> -> vector<16x32xf32>
    %c1_112 = arith.constant 1 : index
    %c0_113 = arith.constant 0 : index
    %c0_114 = arith.constant 0 : index
    %241 = vector.load %arg9[%c1_112, %c0_113, %c0_114] : memref<2x1x32xf32, #tpu.memory_space<vmem>>, vector<1x1x32xf32>
    %242 = vector.shape_cast %241 : vector<1x1x32xf32> to vector<1x32xf32>
    %243 = vector.broadcast %242 : vector<1x32xf32> to vector<16x32xf32>
    %244 = arith.addf %240, %243 : vector<16x32xf32>
    %c1_115 = arith.constant 1 : index
    %c0_116 = arith.constant 0 : index
    %c0_117 = arith.constant 0 : index
    %245 = vector.load %arg10[%c1_115, %c0_116, %c0_117] : memref<2x32x32xf32, #tpu.memory_space<vmem>>, vector<1x32x32xf32>
    %246 = vector.shape_cast %245 : vector<1x32x32xf32> to vector<32x32xf32>
    %cst_118 = arith.constant dense<0.000000e+00> : vector<16x32xf32>
    %247 = tpu.matmul %230, %246, %cst_118 {dimension_numbers = #tpu.dot_dimension_numbers<[1], [0], [0], [1], [0, 0, 1, 1], [], []>} : vector<16x32xf32>, vector<32x32xf32>, vector<16x32xf32> -> vector<16x32xf32>
    %c1_119 = arith.constant 1 : index
    %c0_120 = arith.constant 0 : index
    %c0_121 = arith.constant 0 : index
    %248 = vector.load %arg11[%c1_119, %c0_120, %c0_121] : memref<2x1x32xf32, #tpu.memory_space<vmem>>, vector<1x1x32xf32>
    %249 = vector.shape_cast %248 : vector<1x1x32xf32> to vector<1x32xf32>
    %250 = vector.broadcast %249 : vector<1x32xf32> to vector<16x32xf32>
    %251 = arith.addf %247, %250 : vector<16x32xf32>
    %252 = vector.extract_strided_slice %237 {offsets = [0, 0], sizes = [16, 8], strides = [1, 1]} : vector<16x32xf32> to vector<16x8xf32>
    %253 = vector.shape_cast %252 : vector<16x8xf32> to vector<2x8x8xf32>
    %254 = vector.extract_strided_slice %244 {offsets = [0, 0], sizes = [16, 8], strides = [1, 1]} : vector<16x32xf32> to vector<16x8xf32>
    %255 = vector.shape_cast %254 : vector<16x8xf32> to vector<2x8x8xf32>
    %256 = vector.extract_strided_slice %251 {offsets = [0, 0], sizes = [16, 8], strides = [1, 1]} : vector<16x32xf32> to vector<16x8xf32>
    %257 = vector.shape_cast %256 : vector<16x8xf32> to vector<2x8x8xf32>
    "tpu.trace_start"() <{level = 10 : i32, message = "bqd,bkd->bqk"}> : () -> ()
    %cst_122 = arith.constant dense<0.000000e+00> : vector<2x8x8xf32>
    %258 = tpu.matmul %253, %255, %cst_122 {dimension_numbers = #tpu.dot_dimension_numbers<[2], [2], [1], [1], [0, 0, 0, 1, 1, 1], [0], [0]>} : vector<2x8x8xf32>, vector<2x8x8xf32>, vector<2x8x8xf32> -> vector<2x8x8xf32>
    "tpu.trace_stop"() : () -> ()
    %259 = vector.broadcast %10 : vector<1x1x8xf32> to vector<2x8x8xf32>
    %260 = arith.addf %258, %259 : vector<2x8x8xf32>
    %cst_123 = arith.constant dense<0xFF800000> : vector<2x8xf32>
    %261 = vector.multi_reduction <maximumf>, %260, %cst_123 [2] : vector<2x8x8xf32> to vector<2x8xf32>
    %262 = vector.shape_cast %261 : vector<2x8xf32> to vector<2x8x1xf32>
    %263 = vector.broadcast %262 : vector<2x8x1xf32> to vector<2x8x8xf32>
    %264 = arith.subf %260, %263 : vector<2x8x8xf32>
    %265 = math.exp %264 : vector<2x8x8xf32>
    %cst_124 = arith.constant dense<0.000000e+00> : vector<2x8xf32>
    %266 = vector.multi_reduction <add>, %265, %cst_124 [2] : vector<2x8x8xf32> to vector<2x8xf32>
    %267 = vector.shape_cast %266 : vector<2x8xf32> to vector<2x8x1xf32>
    %268 = tpu.reciprocal %267 {approx = true} : vector<2x8x1xf32> -> vector<2x8x1xf32>
    %269 = vector.broadcast %268 : vector<2x8x1xf32> to vector<2x8x8xf32>
    %270 = arith.mulf %265, %269 : vector<2x8x8xf32>
    "tpu.trace_start"() <{level = 10 : i32, message = "bqk,bkd->bqd"}> : () -> ()
    %cst_125 = arith.constant dense<0.000000e+00> : vector<2x8x8xf32>
    %271 = tpu.matmul %270, %257, %cst_125 {dimension_numbers = #tpu.dot_dimension_numbers<[2], [1], [1], [2], [0, 0, 0, 1, 1, 2], [0], [0]>} : vector<2x8x8xf32>, vector<2x8x8xf32>, vector<2x8x8xf32> -> vector<2x8x8xf32>
    "tpu.trace_stop"() : () -> ()
    %272 = vector.shape_cast %271 : vector<2x8x8xf32> to vector<16x8xf32>
    %273 = vector.extract_strided_slice %237 {offsets = [0, 8], sizes = [16, 8], strides = [1, 1]} : vector<16x32xf32> to vector<16x8xf32>
    %274 = vector.shape_cast %273 : vector<16x8xf32> to vector<2x8x8xf32>
    %275 = vector.extract_strided_slice %244 {offsets = [0, 8], sizes = [16, 8], strides = [1, 1]} : vector<16x32xf32> to vector<16x8xf32>
    %276 = vector.shape_cast %275 : vector<16x8xf32> to vector<2x8x8xf32>
    %277 = vector.extract_strided_slice %251 {offsets = [0, 8], sizes = [16, 8], strides = [1, 1]} : vector<16x32xf32> to vector<16x8xf32>
    %278 = vector.shape_cast %277 : vector<16x8xf32> to vector<2x8x8xf32>
    "tpu.trace_start"() <{level = 10 : i32, message = "bqd,bkd->bqk"}> : () -> ()
    %cst_126 = arith.constant dense<0.000000e+00> : vector<2x8x8xf32>
    %279 = tpu.matmul %274, %276, %cst_126 {dimension_numbers = #tpu.dot_dimension_numbers<[2], [2], [1], [1], [0, 0, 0, 1, 1, 1], [0], [0]>} : vector<2x8x8xf32>, vector<2x8x8xf32>, vector<2x8x8xf32> -> vector<2x8x8xf32>
    "tpu.trace_stop"() : () -> ()
    %280 = vector.broadcast %10 : vector<1x1x8xf32> to vector<2x8x8xf32>
    %281 = arith.addf %279, %280 : vector<2x8x8xf32>
    %cst_127 = arith.constant dense<0xFF800000> : vector<2x8xf32>
    %282 = vector.multi_reduction <maximumf>, %281, %cst_127 [2] : vector<2x8x8xf32> to vector<2x8xf32>
    %283 = vector.shape_cast %282 : vector<2x8xf32> to vector<2x8x1xf32>
    %284 = vector.broadcast %283 : vector<2x8x1xf32> to vector<2x8x8xf32>
    %285 = arith.subf %281, %284 : vector<2x8x8xf32>
    %286 = math.exp %285 : vector<2x8x8xf32>
    %cst_128 = arith.constant dense<0.000000e+00> : vector<2x8xf32>
    %287 = vector.multi_reduction <add>, %286, %cst_128 [2] : vector<2x8x8xf32> to vector<2x8xf32>
    %288 = vector.shape_cast %287 : vector<2x8xf32> to vector<2x8x1xf32>
    %289 = tpu.reciprocal %288 {approx = true} : vector<2x8x1xf32> -> vector<2x8x1xf32>
    %290 = vector.broadcast %289 : vector<2x8x1xf32> to vector<2x8x8xf32>
    %291 = arith.mulf %286, %290 : vector<2x8x8xf32>
    "tpu.trace_start"() <{level = 10 : i32, message = "bqk,bkd->bqd"}> : () -> ()
    %cst_129 = arith.constant dense<0.000000e+00> : vector<2x8x8xf32>
    %292 = tpu.matmul %291, %278, %cst_129 {dimension_numbers = #tpu.dot_dimension_numbers<[2], [1], [1], [2], [0, 0, 0, 1, 1, 2], [0], [0]>} : vector<2x8x8xf32>, vector<2x8x8xf32>, vector<2x8x8xf32> -> vector<2x8x8xf32>
    "tpu.trace_stop"() : () -> ()
    %293 = vector.shape_cast %292 : vector<2x8x8xf32> to vector<16x8xf32>
    %294 = vector.extract_strided_slice %237 {offsets = [0, 16], sizes = [16, 8], strides = [1, 1]} : vector<16x32xf32> to vector<16x8xf32>
    %295 = vector.shape_cast %294 : vector<16x8xf32> to vector<2x8x8xf32>
    %296 = vector.extract_strided_slice %244 {offsets = [0, 16], sizes = [16, 8], strides = [1, 1]} : vector<16x32xf32> to vector<16x8xf32>
    %297 = vector.shape_cast %296 : vector<16x8xf32> to vector<2x8x8xf32>
    %298 = vector.extract_strided_slice %251 {offsets = [0, 16], sizes = [16, 8], strides = [1, 1]} : vector<16x32xf32> to vector<16x8xf32>
    %299 = vector.shape_cast %298 : vector<16x8xf32> to vector<2x8x8xf32>
    "tpu.trace_start"() <{level = 10 : i32, message = "bqd,bkd->bqk"}> : () -> ()
    %cst_130 = arith.constant dense<0.000000e+00> : vector<2x8x8xf32>
    %300 = tpu.matmul %295, %297, %cst_130 {dimension_numbers = #tpu.dot_dimension_numbers<[2], [2], [1], [1], [0, 0, 0, 1, 1, 1], [0], [0]>} : vector<2x8x8xf32>, vector<2x8x8xf32>, vector<2x8x8xf32> -> vector<2x8x8xf32>
    "tpu.trace_stop"() : () -> ()
    %301 = vector.broadcast %10 : vector<1x1x8xf32> to vector<2x8x8xf32>
    %302 = arith.addf %300, %301 : vector<2x8x8xf32>
    %cst_131 = arith.constant dense<0xFF800000> : vector<2x8xf32>
    %303 = vector.multi_reduction <maximumf>, %302, %cst_131 [2] : vector<2x8x8xf32> to vector<2x8xf32>
    %304 = vector.shape_cast %303 : vector<2x8xf32> to vector<2x8x1xf32>
    %305 = vector.broadcast %304 : vector<2x8x1xf32> to vector<2x8x8xf32>
    %306 = arith.subf %302, %305 : vector<2x8x8xf32>
    %307 = math.exp %306 : vector<2x8x8xf32>
    %cst_132 = arith.constant dense<0.000000e+00> : vector<2x8xf32>
    %308 = vector.multi_reduction <add>, %307, %cst_132 [2] : vector<2x8x8xf32> to vector<2x8xf32>
    %309 = vector.shape_cast %308 : vector<2x8xf32> to vector<2x8x1xf32>
    %310 = tpu.reciprocal %309 {approx = true} : vector<2x8x1xf32> -> vector<2x8x1xf32>
    %311 = vector.broadcast %310 : vector<2x8x1xf32> to vector<2x8x8xf32>
    %312 = arith.mulf %307, %311 : vector<2x8x8xf32>
    "tpu.trace_start"() <{level = 10 : i32, message = "bqk,bkd->bqd"}> : () -> ()
    %cst_133 = arith.constant dense<0.000000e+00> : vector<2x8x8xf32>
    %313 = tpu.matmul %312, %299, %cst_133 {dimension_numbers = #tpu.dot_dimension_numbers<[2], [1], [1], [2], [0, 0, 0, 1, 1, 2], [0], [0]>} : vector<2x8x8xf32>, vector<2x8x8xf32>, vector<2x8x8xf32> -> vector<2x8x8xf32>
    "tpu.trace_stop"() : () -> ()
    %314 = vector.shape_cast %313 : vector<2x8x8xf32> to vector<16x8xf32>
    %315 = vector.extract_strided_slice %237 {offsets = [0, 24], sizes = [16, 8], strides = [1, 1]} : vector<16x32xf32> to vector<16x8xf32>
    %316 = vector.shape_cast %315 : vector<16x8xf32> to vector<2x8x8xf32>
    %317 = vector.extract_strided_slice %244 {offsets = [0, 24], sizes = [16, 8], strides = [1, 1]} : vector<16x32xf32> to vector<16x8xf32>
    %318 = vector.shape_cast %317 : vector<16x8xf32> to vector<2x8x8xf32>
    %319 = vector.extract_strided_slice %251 {offsets = [0, 24], sizes = [16, 8], strides = [1, 1]} : vector<16x32xf32> to vector<16x8xf32>
    %320 = vector.shape_cast %319 : vector<16x8xf32> to vector<2x8x8xf32>
    "tpu.trace_start"() <{level = 10 : i32, message = "bqd,bkd->bqk"}> : () -> ()
    %cst_134 = arith.constant dense<0.000000e+00> : vector<2x8x8xf32>
    %321 = tpu.matmul %316, %318, %cst_134 {dimension_numbers = #tpu.dot_dimension_numbers<[2], [2], [1], [1], [0, 0, 0, 1, 1, 1], [0], [0]>} : vector<2x8x8xf32>, vector<2x8x8xf32>, vector<2x8x8xf32> -> vector<2x8x8xf32>
    "tpu.trace_stop"() : () -> ()
    %322 = vector.broadcast %10 : vector<1x1x8xf32> to vector<2x8x8xf32>
    %323 = arith.addf %321, %322 : vector<2x8x8xf32>
    %cst_135 = arith.constant dense<0xFF800000> : vector<2x8xf32>
    %324 = vector.multi_reduction <maximumf>, %323, %cst_135 [2] : vector<2x8x8xf32> to vector<2x8xf32>
    %325 = vector.shape_cast %324 : vector<2x8xf32> to vector<2x8x1xf32>
    %326 = vector.broadcast %325 : vector<2x8x1xf32> to vector<2x8x8xf32>
    %327 = arith.subf %323, %326 : vector<2x8x8xf32>
    %328 = math.exp %327 : vector<2x8x8xf32>
    %cst_136 = arith.constant dense<0.000000e+00> : vector<2x8xf32>
    %329 = vector.multi_reduction <add>, %328, %cst_136 [2] : vector<2x8x8xf32> to vector<2x8xf32>
    %330 = vector.shape_cast %329 : vector<2x8xf32> to vector<2x8x1xf32>
    %331 = tpu.reciprocal %330 {approx = true} : vector<2x8x1xf32> -> vector<2x8x1xf32>
    %332 = vector.broadcast %331 : vector<2x8x1xf32> to vector<2x8x8xf32>
    %333 = arith.mulf %328, %332 : vector<2x8x8xf32>
    "tpu.trace_start"() <{level = 10 : i32, message = "bqk,bkd->bqd"}> : () -> ()
    %cst_137 = arith.constant dense<0.000000e+00> : vector<2x8x8xf32>
    %334 = tpu.matmul %333, %320, %cst_137 {dimension_numbers = #tpu.dot_dimension_numbers<[2], [1], [1], [2], [0, 0, 0, 1, 1, 2], [0], [0]>} : vector<2x8x8xf32>, vector<2x8x8xf32>, vector<2x8x8xf32> -> vector<2x8x8xf32>
    "tpu.trace_stop"() : () -> ()
    %335 = vector.shape_cast %334 : vector<2x8x8xf32> to vector<16x8xf32>
    %336 = tpu.concatenate %272, %293, %314, %335 in 1 : vector<16x8xf32>, vector<16x8xf32>, vector<16x8xf32>, vector<16x8xf32> -> vector<16x32xf32>
    %c1_138 = arith.constant 1 : index
    %c0_139 = arith.constant 0 : index
    %c0_140 = arith.constant 0 : index
    %337 = vector.load %arg12[%c1_138, %c0_139, %c0_140] : memref<2x32x32xf32, #tpu.memory_space<vmem>>, vector<1x32x32xf32>
    %338 = vector.shape_cast %337 : vector<1x32x32xf32> to vector<32x32xf32>
    %cst_141 = arith.constant dense<0.000000e+00> : vector<16x32xf32>
    %339 = tpu.matmul %336, %338, %cst_141 {dimension_numbers = #tpu.dot_dimension_numbers<[1], [0], [0], [1], [0, 0, 1, 1], [], []>} : vector<16x32xf32>, vector<32x32xf32>, vector<16x32xf32> -> vector<16x32xf32>
    %c1_142 = arith.constant 1 : index
    %c0_143 = arith.constant 0 : index
    %c0_144 = arith.constant 0 : index
    %340 = vector.load %arg13[%c1_142, %c0_143, %c0_144] : memref<2x1x32xf32, #tpu.memory_space<vmem>>, vector<1x1x32xf32>
    %341 = vector.shape_cast %340 : vector<1x1x32xf32> to vector<1x32xf32>
    %342 = vector.broadcast %341 : vector<1x32xf32> to vector<16x32xf32>
    %343 = arith.addf %339, %342 : vector<16x32xf32>
    %344 = arith.addf %204, %343 : vector<16x32xf32>
    %c1_145 = arith.constant 1 : index
    %c0_146 = arith.constant 0 : index
    %c0_147 = arith.constant 0 : index
    %345 = vector.load %arg14[%c1_145, %c0_146, %c0_147] : memref<2x1x32xf32, #tpu.memory_space<vmem>>, vector<1x1x32xf32>
    %346 = vector.shape_cast %345 : vector<1x1x32xf32> to vector<1x32xf32>
    %c1_148 = arith.constant 1 : index
    %c0_149 = arith.constant 0 : index
    %c0_150 = arith.constant 0 : index
    %347 = vector.load %arg15[%c1_148, %c0_149, %c0_150] : memref<2x1x32xf32, #tpu.memory_space<vmem>>, vector<1x1x32xf32>
    %348 = vector.shape_cast %347 : vector<1x1x32xf32> to vector<1x32xf32>
    %cst_151 = arith.constant dense<0.000000e+00> : vector<16xf32>
    %349 = vector.multi_reduction <add>, %344, %cst_151 [1] : vector<16x32xf32> to vector<16xf32>
    %350 = vector.shape_cast %349 : vector<16xf32> to vector<16x1xf32>
    %cst_152 = arith.constant 3.200000e+01 : f32
    %351 = vector.broadcast %cst_152 : f32 to vector<16x1xf32>
    %352 = arith.divf %350, %351 : vector<16x1xf32>
    %353 = vector.broadcast %352 : vector<16x1xf32> to vector<16x32xf32>
    %354 = arith.subf %344, %353 : vector<16x32xf32>
    %355 = arith.mulf %354, %354 : vector<16x32xf32>
    %cst_153 = arith.constant dense<0.000000e+00> : vector<16xf32>
    %356 = vector.multi_reduction <add>, %355, %cst_153 [1] : vector<16x32xf32> to vector<16xf32>
    %357 = vector.shape_cast %356 : vector<16xf32> to vector<16x1xf32>
    %cst_154 = arith.constant 3.200000e+01 : f32
    %358 = vector.broadcast %cst_154 : f32 to vector<16x1xf32>
    %359 = arith.divf %357, %358 : vector<16x1xf32>
    %360 = vector.broadcast %352 : vector<16x1xf32> to vector<16x32xf32>
    %361 = arith.subf %344, %360 : vector<16x32xf32>
    %cst_155 = arith.constant 9.99999974E-6 : f32
    %362 = vector.broadcast %cst_155 : f32 to vector<16x1xf32>
    %363 = arith.addf %359, %362 : vector<16x1xf32>
    %364 = math.rsqrt %363 : vector<16x1xf32>
    %365 = vector.broadcast %364 : vector<16x1xf32> to vector<16x32xf32>
    %366 = arith.mulf %361, %365 : vector<16x32xf32>
    %367 = vector.broadcast %346 : vector<1x32xf32> to vector<16x32xf32>
    %368 = arith.mulf %366, %367 : vector<16x32xf32>
    %369 = vector.broadcast %348 : vector<1x32xf32> to vector<16x32xf32>
    %370 = arith.addf %368, %369 : vector<16x32xf32>
    %c1_156 = arith.constant 1 : index
    %c0_157 = arith.constant 0 : index
    %c0_158 = arith.constant 0 : index
    %371 = vector.load %arg16[%c1_156, %c0_157, %c0_158] : memref<2x32x64xf32, #tpu.memory_space<vmem>>, vector<1x32x64xf32>
    %372 = vector.shape_cast %371 : vector<1x32x64xf32> to vector<32x64xf32>
    %cst_159 = arith.constant dense<0.000000e+00> : vector<16x64xf32>
    %373 = tpu.matmul %370, %372, %cst_159 {dimension_numbers = #tpu.dot_dimension_numbers<[1], [0], [0], [1], [0, 0, 1, 1], [], []>} : vector<16x32xf32>, vector<32x64xf32>, vector<16x64xf32> -> vector<16x64xf32>
    %c1_160 = arith.constant 1 : index
    %c0_161 = arith.constant 0 : index
    %c0_162 = arith.constant 0 : index
    %374 = vector.load %arg17[%c1_160, %c0_161, %c0_162] : memref<2x1x64xf32, #tpu.memory_space<vmem>>, vector<1x1x64xf32>
    %375 = vector.shape_cast %374 : vector<1x1x64xf32> to vector<1x64xf32>
    %376 = vector.broadcast %375 : vector<1x64xf32> to vector<16x64xf32>
    %377 = arith.addf %373, %376 : vector<16x64xf32>
    %cst_163 = arith.constant 5.000000e-01 : f32
    %378 = vector.broadcast %cst_163 : f32 to vector<16x64xf32>
    %379 = arith.mulf %378, %377 : vector<16x64xf32>
    %380 = arith.mulf %377, %377 : vector<16x64xf32>
    %381 = arith.mulf %377, %380 : vector<16x64xf32>
    %cst_164 = arith.constant 4.471500e-02 : f32
    %382 = vector.broadcast %cst_164 : f32 to vector<16x64xf32>
    %383 = arith.mulf %382, %381 : vector<16x64xf32>
    %384 = arith.addf %377, %383 : vector<16x64xf32>
    %cst_165 = arith.constant 0.797884583 : f32
    %385 = vector.broadcast %cst_165 : f32 to vector<16x64xf32>
    %386 = arith.mulf %385, %384 : vector<16x64xf32>
    %387 = math.tanh %386 : vector<16x64xf32>
    %cst_166 = arith.constant 1.000000e+00 : f32
    %388 = vector.broadcast %cst_166 : f32 to vector<16x64xf32>
    %389 = arith.addf %388, %387 : vector<16x64xf32>
    %390 = arith.mulf %379, %389 : vector<16x64xf32>
    %c1_167 = arith.constant 1 : index
    %c0_168 = arith.constant 0 : index
    %c0_169 = arith.constant 0 : index
    %391 = vector.load %arg18[%c1_167, %c0_168, %c0_169] : memref<2x64x32xf32, #tpu.memory_space<vmem>>, vector<1x64x32xf32>
    %392 = vector.shape_cast %391 : vector<1x64x32xf32> to vector<64x32xf32>
    %cst_170 = arith.constant dense<0.000000e+00> : vector<16x32xf32>
    %393 = tpu.matmul %390, %392, %cst_170 {dimension_numbers = #tpu.dot_dimension_numbers<[1], [0], [0], [1], [0, 0, 1, 1], [], []>} : vector<16x64xf32>, vector<64x32xf32>, vector<16x32xf32> -> vector<16x32xf32>
    %c1_171 = arith.constant 1 : index
    %c0_172 = arith.constant 0 : index
    %c0_173 = arith.constant 0 : index
    %394 = vector.load %arg19[%c1_171, %c0_172, %c0_173] : memref<2x1x32xf32, #tpu.memory_space<vmem>>, vector<1x1x32xf32>
    %395 = vector.shape_cast %394 : vector<1x1x32xf32> to vector<1x32xf32>
    %396 = vector.broadcast %395 : vector<1x32xf32> to vector<16x32xf32>
    %397 = arith.addf %393, %396 : vector<16x32xf32>
    %398 = arith.addf %344, %397 : vector<16x32xf32>
    %399 = vector.extract_strided_slice %398 {offsets = [0, 0], sizes = [1, 32], strides = [1, 1]} : vector<16x32xf32> to vector<1x32xf32>
    %400 = vector.extract_strided_slice %398 {offsets = [8, 0], sizes = [1, 32], strides = [1, 1]} : vector<16x32xf32> to vector<1x32xf32>
    %401 = tpu.concatenate %399, %400 in 0 : vector<1x32xf32>, vector<1x32xf32> -> vector<2x32xf32>
    %c0_174 = arith.constant 0 : index
    %c0_175 = arith.constant 0 : index
    %402 = vector.load %arg20[%c0_174, %c0_175] : memref<32x8xf32, #tpu.memory_space<vmem>>, vector<32x8xf32>
    %cst_176 = arith.constant dense<0.000000e+00> : vector<2x8xf32>
    %403 = tpu.matmul %401, %402, %cst_176 {dimension_numbers = #tpu.dot_dimension_numbers<[1], [0], [0], [1], [0, 0, 1, 1], [], []>} : vector<2x32xf32>, vector<32x8xf32>, vector<2x8xf32> -> vector<2x8xf32>
    %c0_177 = arith.constant 0 : index
    %c0_178 = arith.constant 0 : index
    %404 = vector.load %arg21[%c0_177, %c0_178] : memref<1x8xf32, #tpu.memory_space<vmem>>, vector<1x8xf32>
    %405 = vector.broadcast %404 : vector<1x8xf32> to vector<2x8xf32>
    %406 = arith.addf %403, %405 : vector<2x8xf32>
    %c0_179 = arith.constant 0 : index
    %c0_180 = arith.constant 0 : index
    %407 = vector.load %arg22[%c0_179, %c0_180] : memref<2x8xf32, #tpu.memory_space<vmem>>, vector<2x8xf32>
    tpu.vector_store %arg22[%c0_179, %c0_180], %406 {strides = array<i32>} : memref<2x8xf32, #tpu.memory_space<vmem>>, vector<2x8xf32>,
    return
  }
  func.func @transform_0(%arg0: i32) -> (i32, i32) {
    %c0_i32 = arith.constant 0 : i32
    %c0_i32_0 = arith.constant 0 : i32
    %c0_i32_1 = arith.constant 0 : i32
    return %c0_i32, %c0_i32_0 : i32, i32
  }
  func.func @transform_1(%arg0: i32) -> (i32, i32) {
    %c0_i32 = arith.constant 0 : i32
    %c0_i32_0 = arith.constant 0 : i32
    %c0_i32_1 = arith.constant 0 : i32
    return %c0_i32, %c0_i32_0 : i32, i32
  }
  func.func @transform_2(%arg0: i32) -> (i32, i32) {
    %c0_i32 = arith.constant 0 : i32
    %c0_i32_0 = arith.constant 0 : i32
    %c0_i32_1 = arith.constant 0 : i32
    return %c0_i32, %c0_i32_0 : i32, i32
  }
  func.func @transform_3(%arg0: i32) -> (i32, i32, i32) {
    %c0_i32 = arith.constant 0 : i32
    %c0_i32_0 = arith.constant 0 : i32
    %c0_i32_1 = arith.constant 0 : i32
    %c0_i32_2 = arith.constant 0 : i32
    return %c0_i32, %c0_i32_0, %c0_i32_1 : i32, i32, i32
  }
  func.func @transform_4(%arg0: i32) -> (i32, i32, i32) {
    %c0_i32 = arith.constant 0 : i32
    %c0_i32_0 = arith.constant 0 : i32
    %c0_i32_1 = arith.constant 0 : i32
    %c0_i32_2 = arith.constant 0 : i32
    return %c0_i32, %c0_i32_0, %c0_i32_1 : i32, i32, i32
  }
  func.func @transform_5(%arg0: i32) -> (i32, i32, i32) {
    %c0_i32 = arith.constant 0 : i32
    %c0_i32_0 = arith.constant 0 : i32
    %c0_i32_1 = arith.constant 0 : i32
    %c0_i32_2 = arith.constant 0 : i32
    return %c0_i32, %c0_i32_0, %c0_i32_1 : i32, i32, i32
  }
  func.func @transform_6(%arg0: i32) -> (i32, i32, i32) {
    %c0_i32 = arith.constant 0 : i32
    %c0_i32_0 = arith.constant 0 : i32
    %c0_i32_1 = arith.constant 0 : i32
    %c0_i32_2 = arith.constant 0 : i32
    return %c0_i32, %c0_i32_0, %c0_i32_1 : i32, i32, i32
  }
  func.func @transform_7(%arg0: i32) -> (i32, i32, i32) {
    %c0_i32 = arith.constant 0 : i32
    %c0_i32_0 = arith.constant 0 : i32
    %c0_i32_1 = arith.constant 0 : i32
    %c0_i32_2 = arith.constant 0 : i32
    return %c0_i32, %c0_i32_0, %c0_i32_1 : i32, i32, i32
  }
  func.func @transform_8(%arg0: i32) -> (i32, i32, i32) {
    %c0_i32 = arith.constant 0 : i32
    %c0_i32_0 = arith.constant 0 : i32
    %c0_i32_1 = arith.constant 0 : i32
    %c0_i32_2 = arith.constant 0 : i32
    return %c0_i32, %c0_i32_0, %c0_i32_1 : i32, i32, i32
  }
  func.func @transform_9(%arg0: i32) -> (i32, i32, i32) {
    %c0_i32 = arith.constant 0 : i32
    %c0_i32_0 = arith.constant 0 : i32
    %c0_i32_1 = arith.constant 0 : i32
    %c0_i32_2 = arith.constant 0 : i32
    return %c0_i32, %c0_i32_0, %c0_i32_1 : i32, i32, i32
  }
  func.func @transform_10(%arg0: i32) -> (i32, i32, i32) {
    %c0_i32 = arith.constant 0 : i32
    %c0_i32_0 = arith.constant 0 : i32
    %c0_i32_1 = arith.constant 0 : i32
    %c0_i32_2 = arith.constant 0 : i32
    return %c0_i32, %c0_i32_0, %c0_i32_1 : i32, i32, i32
  }
  func.func @transform_11(%arg0: i32) -> (i32, i32, i32) {
    %c0_i32 = arith.constant 0 : i32
    %c0_i32_0 = arith.constant 0 : i32
    %c0_i32_1 = arith.constant 0 : i32
    %c0_i32_2 = arith.constant 0 : i32
    return %c0_i32, %c0_i32_0, %c0_i32_1 : i32, i32, i32
  }
  func.func @transform_12(%arg0: i32) -> (i32, i32, i32) {
    %c0_i32 = arith.constant 0 : i32
    %c0_i32_0 = arith.constant 0 : i32
    %c0_i32_1 = arith.constant 0 : i32
    %c0_i32_2 = arith.constant 0 : i32
    return %c0_i32, %c0_i32_0, %c0_i32_1 : i32, i32, i32
  }
  func.func @transform_13(%arg0: i32) -> (i32, i32, i32) {
    %c0_i32 = arith.constant 0 : i32
    %c0_i32_0 = arith.constant 0 : i32
    %c0_i32_1 = arith.constant 0 : i32
    %c0_i32_2 = arith.constant 0 : i32
    return %c0_i32, %c0_i32_0, %c0_i32_1 : i32, i32, i32
  }
  func.func @transform_14(%arg0: i32) -> (i32, i32, i32) {
    %c0_i32 = arith.constant 0 : i32
    %c0_i32_0 = arith.constant 0 : i32
    %c0_i32_1 = arith.constant 0 : i32
    %c0_i32_2 = arith.constant 0 : i32
    return %c0_i32, %c0_i32_0, %c0_i32_1 : i32, i32, i32
  }
  func.func @transform_15(%arg0: i32) -> (i32, i32, i32) {
    %c0_i32 = arith.constant 0 : i32
    %c0_i32_0 = arith.constant 0 : i32
    %c0_i32_1 = arith.constant 0 : i32
    %c0_i32_2 = arith.constant 0 : i32
    return %c0_i32, %c0_i32_0, %c0_i32_1 : i32, i32, i32
  }
  func.func @transform_16(%arg0: i32) -> (i32, i32, i32) {
    %c0_i32 = arith.constant 0 : i32
    %c0_i32_0 = arith.constant 0 : i32
    %c0_i32_1 = arith.constant 0 : i32
    %c0_i32_2 = arith.constant 0 : i32
    return %c0_i32, %c0_i32_0, %c0_i32_1 : i32, i32, i32
  }
  func.func @transform_17(%arg0: i32) -> (i32, i32, i32) {
    %c0_i32 = arith.constant 0 : i32
    %c0_i32_0 = arith.constant 0 : i32
    %c0_i32_1 = arith.constant 0 : i32
    %c0_i32_2 = arith.constant 0 : i32
    return %c0_i32, %c0_i32_0, %c0_i32_1 : i32, i32, i32
  }
  func.func @transform_18(%arg0: i32) -> (i32, i32, i32) {
    %c0_i32 = arith.constant 0 : i32
    %c0_i32_0 = arith.constant 0 : i32
    %c0_i32_1 = arith.constant 0 : i32
    %c0_i32_2 = arith.constant 0 : i32
    return %c0_i32, %c0_i32_0, %c0_i32_1 : i32, i32, i32
  }
  func.func @transform_19(%arg0: i32) -> (i32, i32) {
    %c0_i32 = arith.constant 0 : i32
    %c0_i32_0 = arith.constant 0 : i32
    %c0_i32_1 = arith.constant 0 : i32
    return %c0_i32, %c0_i32_0 : i32, i32
  }
  func.func @transform_20(%arg0: i32) -> (i32, i32) {
    %c0_i32 = arith.constant 0 : i32
    %c0_i32_0 = arith.constant 0 : i32
    %c0_i32_1 = arith.constant 0 : i32
    return %c0_i32, %c0_i32_0 : i32, i32
  }
  func.func @transform_21(%arg0: i32) -> (i32, i32) {
    %c0_i32 = arith.constant 0 : i32
    %c0_i32_0 = arith.constant 0 : i32
    %c0_i32_1 = arith.constant 0 : i32
    return %c0_i32, %c0_i32_0 : i32, i32
  }
}

</mosaic_0001>

<llo_original>
// kernel: _lambda_.1
$region0: #{_lambda_.1}
  #allocation0 [shape = 'u32[]', space=smem, size = 0x4, offset = 0x4, fixed_abs, tag = 'smem constant byte address 0x4 - core index']
  #allocation1 [shape = 'u32[144,128]{1,0:T(1,128)}', space=vmem, size = 0x12000, scoped, tag = 'internal scratch']
  %s0 = inlined_call_operand.vmem [shape: f32[16,256], index: 0, kind: input, shape index: {}]
  %s1 = inlined_call_operand.vmem [shape: f32[256,32], index: 1, kind: input, shape index: {}]
  %s2 = inlined_call_operand.vmem [shape: f32[16,32], index: 2, kind: input, shape index: {}]
  %s3 = inlined_call_operand.vmem [shape: f32[2,1,32], index: 3, kind: input, shape index: {}]
  %s4 = inlined_call_operand.vmem [shape: f32[2,1,32], index: 4, kind: input, shape index: {}]
  %s5 = inlined_call_operand.vmem [shape: f32[2,32,32], index: 5, kind: input, shape index: {}]
  %s6 = inlined_call_operand.vmem [shape: f32[2,1,32], index: 6, kind: input, shape index: {}]
  %s7 = inlined_call_operand.vmem [shape: f32[2,32,32], index: 7, kind: input, shape index: {}]
  %s8 = inlined_call_operand.vmem [shape: f32[2,1,32], index: 8, kind: input, shape index: {}]
  %s9 = inlined_call_operand.vmem [shape: f32[2,32,32], index: 9, kind: input, shape index: {}]
  %s10 = inlined_call_operand.vmem [shape: f32[2,1,32], index: 10, kind: input, shape index: {}]
  %s11 = inlined_call_operand.vmem [shape: f32[2,32,32], index: 11, kind: input, shape index: {}]
  %s12 = inlined_call_operand.vmem [shape: f32[2,1,32], index: 12, kind: input, shape index: {}]
  %s13 = inlined_call_operand.vmem [shape: f32[2,1,32], index: 13, kind: input, shape index: {}]
  %s14 = inlined_call_operand.vmem [shape: f32[2,1,32], index: 14, kind: input, shape index: {}]
  %s15 = inlined_call_operand.vmem [shape: f32[2,32,64], index: 15, kind: input, shape index: {}]
  %s16 = inlined_call_operand.vmem [shape: f32[2,1,64], index: 16, kind: input, shape index: {}]
  %s17 = inlined_call_operand.vmem [shape: f32[2,64,32], index: 17, kind: input, shape index: {}]
  %s18 = inlined_call_operand.vmem [shape: f32[2,1,32], index: 18, kind: input, shape index: {}]
  %s19 = inlined_call_operand.vmem [shape: f32[32,8], index: 19, kind: input, shape index: {}]
  %s20 = inlined_call_operand.vmem [shape: f32[1,8], index: 20, kind: input, shape index: {}]
  %s21 = inlined_call_operand.hbm [shape: f32[2,8], index: 21, kind: output, shape index: {}]
  %s22 = sld [smem:[#allocation0]]
  $region94: #{_lambda_.1} parent=0
    _
  %s24 = ssub.s32 1, %s22
  %s25 = scalar_select 0, %s24, %s22
  $region1: #{_lambda_.1} parent=0
    #allocation2 [shape = 'u8[1024]{0}', space=vmem, size = 0x400, scoped, tag = 'output window, operand 0, single buffered']
    #allocation3 [shape = 's32[1]{0}', space=sflag, size = 0x4, scoped, tag = 'scoped memory for _lambda_.1']
    %26 = vsyncpa [#allocation3], 0
    // Predicated region
    $region2: #{_lambda_.1} parent=1 // pred_check
      _
    $region3: #{_lambda_.1} parent=1 // pred_check_branch
      %28 = sbr.rel (0) target = $region5
    $region4: #{_lambda_.1} parent=1 // pred_region
      _
    $region5: #{_lambda_.1} parent=1 // pred_fallthru
      _
    // Predicated region
    $region6: #{_lambda_.1} parent=1 // pred_check
      _
    $region7: #{_lambda_.1} parent=1 // pred_check_branch
      %30 = sbr.rel (0) target = $region9
    $region8: #{_lambda_.1} parent=1 // pred_region
      _
    $region9: #{_lambda_.1} parent=1 // pred_fallthru
      _
    // Predicated region
    $region10: #{_lambda_.1} parent=1 // pred_check
      _
    $region11: #{_lambda_.1} parent=1 // pred_check_branch
      %32 = sbr.rel (0) target = $region13
    $region12: #{_lambda_.1} parent=1 // pred_region
      _
    $region13: #{_lambda_.1} parent=1 // pred_fallthru
      _
    // Predicated region
    $region14: #{_lambda_.1} parent=1 // pred_check
      _
    $region15: #{_lambda_.1} parent=1 // pred_check_branch
      %34 = sbr.rel (0) target = $region17
    $region16: #{_lambda_.1} parent=1 // pred_region
      _
    $region17: #{_lambda_.1} parent=1 // pred_fallthru
      _
    // Predicated region
    $region18: #{_lambda_.1} parent=1 // pred_check
      _
    $region19: #{_lambda_.1} parent=1 // pred_check_branch
      %36 = sbr.rel (0) target = $region21
    $region20: #{_lambda_.1} parent=1 // pred_region
      _
    $region21: #{_lambda_.1} parent=1 // pred_fallthru
      _
    // Predicated region
    $region22: #{_lambda_.1} parent=1 // pred_check
      _
    $region23: #{_lambda_.1} parent=1 // pred_check_branch
      %38 = sbr.rel (0) target = $region25
    $region24: #{_lambda_.1} parent=1 // pred_region
      _
    $region25: #{_lambda_.1} parent=1 // pred_fallthru
      _
    // Predicated region
    $region26: #{_lambda_.1} parent=1 // pred_check
      _
    $region27: #{_lambda_.1} parent=1 // pred_check_branch
      %40 = sbr.rel (0) target = $region29
    $region28: #{_lambda_.1} parent=1 // pred_region
      _
    $region29: #{_lambda_.1} parent=1 // pred_fallthru
      _
    // Predicated region
    $region30: #{_lambda_.1} parent=1 // pred_check
      _
    $region31: #{_lambda_.1} parent=1 // pred_check_branch
      %42 = sbr.rel (0) target = $region33
    $region32: #{_lambda_.1} parent=1 // pred_region
      _
    $region33: #{_lambda_.1} parent=1 // pred_fallthru
      _
    // Predicated region
    $region34: #{_lambda_.1} parent=1 // pred_check
      _
    $region35: #{_lambda_.1} parent=1 // pred_check_branch
      %44 = sbr.rel (0) target = $region37
    $region36: #{_lambda_.1} parent=1 // pred_region
      _
    $region37: #{_lambda_.1} parent=1 // pred_fallthru
      _
    // Predicated region
    $region38: #{_lambda_.1} parent=1 // pred_check
      _
    $region39: #{_lambda_.1} parent=1 // pred_check_branch
      %46 = sbr.rel (0) target = $region41
    $region40: #{_lambda_.1} parent=1 // pred_region
      _
    $region41: #{_lambda_.1} parent=1 // pred_fallthru
      _
    // Predicated region
    $region42: #{_lambda_.1} parent=1 // pred_check
      _
    $region43: #{_lambda_.1} parent=1 // pred_check_branch
      %48 = sbr.rel (0) target = $region45
    $region44: #{_lambda_.1} parent=1 // pred_region
      _
    $region45: #{_lambda_.1} parent=1 // pred_fallthru
      _
    // Predicated region
    $region46: #{_lambda_.1} parent=1 // pred_check
      _
    $region47: #{_lambda_.1} parent=1 // pred_check_branch
      %50 = sbr.rel (0) target = $region49
    $region48: #{_lambda_.1} parent=1 // pred_region
      _
    $region49: #{_lambda_.1} parent=1 // pred_fallthru
      _
    // Predicated region
    $region50: #{_lambda_.1} parent=1 // pred_check
      _
    $region51: #{_lambda_.1} parent=1 // pred_check_branch
      %52 = sbr.rel (0) target = $region53
    $region52: #{_lambda_.1} parent=1 // pred_region
      _
    $region53: #{_lambda_.1} parent=1 // pred_fallthru
      _
    // Predicated region
    $region54: #{_lambda_.1} parent=1 // pred_check
      _
    $region55: #{_lambda_.1} parent=1 // pred_check_branch
      %54 = sbr.rel (0) target = $region57
    $region56: #{_lambda_.1} parent=1 // pred_region
      _
    $region57: #{_lambda_.1} parent=1 // pred_fallthru
      _
    // Predicated region
    $region58: #{_lambda_.1} parent=1 // pred_check
      _
    $region59: #{_lambda_.1} parent=1 // pred_check_branch
      %56 = sbr.rel (0) target = $region61
    $region60: #{_lambda_.1} parent=1 // pred_region
      _
    $region61: #{_lambda_.1} parent=1 // pred_fallthru
      _
    // Predicated region
    $region62: #{_lambda_.1} parent=1 // pred_check
      _
    $region63: #{_lambda_.1} parent=1 // pred_check_branch
      %58 = sbr.rel (0) target = $region65
    $region64: #{_lambda_.1} parent=1 // pred_region
      _
    $region65: #{_lambda_.1} parent=1 // pred_fallthru
      _
    // Predicated region
    $region66: #{_lambda_.1} parent=1 // pred_check
      _
    $region67: #{_lambda_.1} parent=1 // pred_check_branch
      %60 = sbr.rel (0) target = $region69
    $region68: #{_lambda_.1} parent=1 // pred_region
      _
    $region69: #{_lambda_.1} parent=1 // pred_fallthru
      _
    // Predicated region
    $region70: #{_lambda_.1} parent=1 // pred_check
      _
    $region71: #{_lambda_.1} parent=1 // pred_check_branch
      %62 = sbr.rel (0) target = $region73
    $region72: #{_lambda_.1} parent=1 // pred_region
      _
    $region73: #{_lambda_.1} parent=1 // pred_fallthru
      _
    // Predicated region
    $region74: #{_lambda_.1} parent=1 // pred_check
      _
    $region75: #{_lambda_.1} parent=1 // pred_check_branch
      %64 = sbr.rel (0) target = $region77
    $region76: #{_lambda_.1} parent=1 // pred_region
      _
    $region77: #{_lambda_.1} parent=1 // pred_fallthru
      _
    // Predicated region
    $region78: #{_lambda_.1} parent=1 // pred_check
      _
    $region79: #{_lambda_.1} parent=1 // pred_check_branch
      %66 = sbr.rel (0) target = $region81
    $region80: #{_lambda_.1} parent=1 // pred_region
      _
    $region81: #{_lambda_.1} parent=1 // pred_fallthru
      _
    // Predicated region
    $region82: #{_lambda_.1} parent=1 // pred_check
      _
    $region83: #{_lambda_.1} parent=1 // pred_check_branch
      %68 = sbr.rel (0) target = $region85
    $region84: #{_lambda_.1} parent=1 // pred_region
      _
    $region85: #{_lambda_.1} parent=1 // pred_fallthru
      _
    %v69 = vld [vmem:[%s0] sm:$0xff]
    %v70 = vld [vmem:[%s0 + $0x8] sm:$0xff]
    %v71 = vld [vmem:[%s0 + $0x10] sm:$0xff]
    %v72 = vld [vmem:[%s0 + $0x18] sm:$0xff]
    %v73 = vld [vmem:[%s1] sm:$0xff]
    %v74 = vld [vmem:[%s1 + $0x8] sm:$0xff]
    %v75 = vld [vmem:[%s1 + $0x10] sm:$0xff]
    %v76 = vld [vmem:[%s1 + $0x18] sm:$0xff]
    %v77 = vld [vmem:[%s1 + $0x20] sm:$0xff]
    %v78 = vld [vmem:[%s1 + $0x28] sm:$0xff]
    %v79 = vld [vmem:[%s1 + $0x30] sm:$0xff]
    %v80 = vld [vmem:[%s1 + $0x38] sm:$0xff]
    %v81 = vld [vmem:[%s1 + $0x40] sm:$0xff]
    %v82 = vld [vmem:[%s1 + $0x48] sm:$0xff]
    %v83 = vld [vmem:[%s1 + $0x50] sm:$0xff]
    %v84 = vld [vmem:[%s1 + $0x58] sm:$0xff]
    %v85 = vld [vmem:[%s1 + $0x60] sm:$0xff]
    %v86 = vld [vmem:[%s1 + $0x68] sm:$0xff]
    %v87 = vld [vmem:[%s1 + $0x70] sm:$0xff]
    %v88 = vld [vmem:[%s1 + $0x78] sm:$0xff]
    %v89 = vld [vmem:[%s1 + $0x80] sm:$0xff]
    %v90 = vld [vmem:[%s1 + $0x88] sm:$0xff]
    %v91 = vld [vmem:[%s1 + $0x90] sm:$0xff]
    %v92 = vld [vmem:[%s1 + $0x98] sm:$0xff]
    %v93 = vld [vmem:[%s1 + $0xa0] sm:$0xff]
    %v94 = vld [vmem:[%s1 + $0xa8] sm:$0xff]
    %v95 = vld [vmem:[%s1 + $0xb0] sm:$0xff]
    %v96 = vld [vmem:[%s1 + $0xb8] sm:$0xff]
    %v97 = vld [vmem:[%s1 + $0xc0] sm:$0xff]
    %v98 = vld [vmem:[%s1 + $0xc8] sm:$0xff]
    %v99 = vld [vmem:[%s1 + $0xd0] sm:$0xff]
    %v100 = vld [vmem:[%s1 + $0xd8] sm:$0xff]
    %v101 = vld [vmem:[%s1 + $0xe0] sm:$0xff]
    %v102 = vld [vmem:[%s1 + $0xe8] sm:$0xff]
    %v103 = vld [vmem:[%s1 + $0xf0] sm:$0xff]
    %v104 = vld [vmem:[%s1 + $0xf8] sm:$0xff]
    %v105 = vld [vmem:[%s2] sm:$0xff]
    %v106 = vld [vmem:[%s2 + $0x8] sm:$0xff]
    %107 = vmatprep.subr.mxu0 0.0
    %108 = vmatpush1.msra.mxu0 %v88
    %109 = vmatprep.subr.mxu0 0.0
    %110 = vmatpush1.msra.mxu0 %v87
    %111 = vmatprep.subr.mxu0 0.0
    %112 = vmatpush1.msra.mxu0 %v86
    %113 = vmatprep.subr.mxu0 0.0
    %114 = vmatpush1.msra.mxu0 %v85
    %115 = vmatprep.subr.mxu0 0.0
    %116 = vmatpush1.msra.mxu0 %v84
    %117 = vmatprep.subr.mxu0 0.0
    %118 = vmatpush1.msra.mxu0 %v83
    %119 = vmatprep.subr.mxu0 0.0
    %120 = vmatpush1.msra.mxu0 %v82
    %121 = vmatprep.subr.mxu0 0.0
    %122 = vmatpush1.msra.mxu0 %v81
    %123 = vmatprep.subr.mxu0 0.0
    %124 = vmatpush1.msra.mxu0 %v80
    %125 = vmatprep.subr.mxu0 0.0
    %126 = vmatpush1.msra.mxu0 %v79
    %127 = vmatprep.subr.mxu0 0.0
    %128 = vmatpush1.msra.mxu0 %v78
    %129 = vmatprep.subr.mxu0 0.0
    %130 = vmatpush1.msra.mxu0 %v77
    %131 = vmatprep.subr.mxu0 0.0
    %132 = vmatpush1.msra.mxu0 %v76
    %133 = vmatprep.subr.mxu0 0.0
    %134 = vmatpush1.msra.mxu0 %v75
    %135 = vmatprep.subr.mxu0 0.0
    %136 = vmatpush1.msra.mxu0 %v74
    %137 = vmatprep.subr.mxu0 0.0
    %138 = vmatpush1.msra.mxu0 %v73
    %139 = vmatprep.subr.mxu0 0.0
    %140 = vmatpush2.msra.mxu0 %v104
    %141 = vmatprep.subr.mxu0 0.0
    %142 = vmatpush2.msra.mxu0 %v103
    %143 = vmatprep.subr.mxu0 0.0
    %144 = vmatpush2.msra.mxu0 %v102
    %145 = vmatprep.subr.mxu0 0.0
    %146 = vmatpush2.msra.mxu0 %v101
    %147 = vmatprep.subr.mxu0 0.0
    %148 = vmatpush2.msra.mxu0 %v100
    %149 = vmatprep.subr.mxu0 0.0
    %150 = vmatpush2.msra.mxu0 %v99
    %151 = vmatprep.subr.mxu0 0.0
    %152 = vmatpush2.msra.mxu0 %v98
    %153 = vmatprep.subr.mxu0 0.0
    %154 = vmatpush2.msra.mxu0 %v97
    %155 = vmatprep.subr.mxu0 0.0
    %156 = vmatpush2.msra.mxu0 %v96
    %157 = vmatprep.subr.mxu0 0.0
    %158 = vmatpush2.msra.mxu0 %v95
    %159 = vmatprep.subr.mxu0 0.0
    %160 = vmatpush2.msra.mxu0 %v94
    %161 = vmatprep.subr.mxu0 0.0
    %162 = vmatpush2.msra.mxu0 %v93
    %163 = vmatprep.subr.mxu0 0.0
    %164 = vmatpush2.msra.mxu0 %v92
    %165 = vmatprep.subr.mxu0 0.0
    %166 = vmatpush2.msra.mxu0 %v91
    %167 = vmatprep.subr.mxu0 0.0
    %168 = vmatpush2.msra.mxu0 %v90
    %169 = vmatprep.subr.mxu0 0.0
    %170 = vmatpush2.msra.mxu0 %v89
    %171 = vmatprep.mubr.f32.mxu0 %v70
    %172 = vmatmul.mubr.f32.gmra.mxu0 %v69
    %v173 = vpop.f32.mrf.mxu0
    %v174 = vadd.f32 %v105, %v173
    %v175 = vpop.f32.mrf.mxu0
    %176 = vmatprep.mubr.f32.mxu0 %v72
    %177 = vmatmul.mubr.f32.gmra.mxu0 %v71
    %v178 = vpop.f32.mrf.mxu0
    %v179 = vadd.f32 %v106, %v178
    %v180 = vpop.f32.mrf.mxu0
    %181 = vdwg.mxu0
    %v182 = vlaneseq
    %v183 = vand.u32 %v182, 127
    %vm184 = vcmp.lt.s32.totalorder %v183, 5
    %v185 = vsel %vm184, 0.0, -1e+30
    %v186 = vld [vmem:[%s3] sm:$0x1]
    %v187 = vld [vmem:[%s4] sm:$0x1]
    %vm188 = vcmask 261120
    %v189 = vsel %vm188, %v174, 0.0
    %190 = vadd.xlane.f32.xlu0 %v189
    %v191 = vpop.xlane.xlu0 %190
    %v192 = vsel %vm188, %v179, 0.0
    %193 = vadd.xlane.f32.xlu0 %v192
    %v194 = vpop.xlane.xlu0 %193
    %v195 = vrcp.pop 32.0
    %v196 = vmul.f32 %v191, %v195
    %v197 = vmul.f32 %v194, %v195
    %v198 = vsub.f32 %v174, %v196
    %v199 = vsub.f32 %v179, %v197
    %v200 = vmul.f32 %v198, %v198
    %v201 = vmul.f32 %v199, %v199
    %v202 = vsel %vm188, %v200, 0.0
    %203 = vadd.xlane.f32.xlu0 %v202
    %v204 = vpop.xlane.xlu0 %203
    %v205 = vsel %vm188, %v201, 0.0
    %206 = vadd.xlane.f32.xlu0 %v205
    %v207 = vpop.xlane.xlu0 %206
    %v208 = vmul.f32 %v204, %v195
    %v209 = vmul.f32 %v207, %v195
    %v210 = vadd.f32 %v208, 1e-05
    %v211 = vadd.f32 %v209, 1e-05
    %v212 = vrsqrt.pop %v210
    %v213 = vrsqrt.pop %v211
    %v214 = vmul.f32 %v198, %v212
    %v215 = vmul.f32 %v199, %v213
    %v217 = vlaneseq
    %v218 = vshrl.u32 %v217, 7
    %v219 = vsub.s32 0, %v218
    %v220 = vrot.slane %v186, %v219
    %v222 = vmul.f32 %v214, %v220
    %v223 = vmul.f32 %v215, %v220
    %v225 = vlaneseq
    %v226 = vshrl.u32 %v225, 7
    %v227 = vsub.s32 0, %v226
    %v228 = vrot.slane %v187, %v227
    %v230 = vadd.f32 %v222, %v228
    %v231 = vadd.f32 %v223, %v228
    %v232 = vld [vmem:[%s5] sm:$0xff]
    %v233 = vld [vmem:[%s5 + $0x8] sm:$0xff]
    %v234 = vld [vmem:[%s5 + $0x10] sm:$0xff]
    %v235 = vld [vmem:[%s5 + $0x18] sm:$0xff]
    %v236 = vld [vmem:[%s6] sm:$0x1]
    %v238 = vlaneseq
    %v239 = vshrl.u32 %v238, 7
    %v240 = vsub.s32 0, %v239
    %v241 = vrot.slane %v236, %v240
    %v244 = vsel %vm188, %v230, 0
    %v247 = vsel %vm188, %v231, 0
    %249 = vmatprep.subr.mxu0 0.0
    %250 = vmatpush1.msra.mxu0 0.0
    %251 = vmatprep.subr.mxu0 0.0
    %252 = vmatpush1.msra.mxu0 0.0
    %253 = vmatprep.subr.mxu0 0.0
    %254 = vmatpush1.msra.mxu0 0.0
    %255 = vmatprep.subr.mxu0 0.0
    %256 = vmatpush1.msra.mxu0 0.0
    %257 = vmatprep.subr.mxu0 0.0
    %258 = vmatpush1.msra.mxu0 0.0
    %259 = vmatprep.subr.mxu0 0.0
    %260 = vmatpush1.msra.mxu0 0.0
    %261 = vmatprep.subr.mxu0 0.0
    %262 = vmatpush1.msra.mxu0 0.0
    %263 = vmatprep.subr.mxu0 0.0
    %264 = vmatpush1.msra.mxu0 0.0
    %265 = vmatprep.subr.mxu0 0.0
    %266 = vmatpush1.msra.mxu0 0.0
    %267 = vmatprep.subr.mxu0 0.0
    %268 = vmatpush1.msra.mxu0 0.0
    %269 = vmatprep.subr.mxu0 0.0
    %270 = vmatpush1.msra.mxu0 0.0
    %271 = vmatprep.subr.mxu0 0.0
    %272 = vmatpush1.msra.mxu0 0.0
    %273 = vmatprep.subr.mxu0 0.0
    %274 = vmatpush1.msra.mxu0 %v235
    %275 = vmatprep.subr.mxu0 0.0
    %276 = vmatpush1.msra.mxu0 %v234
    %277 = vmatprep.subr.mxu0 0.0
    %278 = vmatpush1.msra.mxu0 %v233
    %279 = vmatprep.subr.mxu0 0.0
    %280 = vmatpush1.msra.mxu0 %v232
    %281 = vmatprep.subr.mxu0 0.0
    %282 = vmatpush2.msra.mxu0 0.0
    %283 = vmatprep.subr.mxu0 0.0
    %284 = vmatpush2.msra.mxu0 0.0
    %285 = vmatprep.subr.mxu0 0.0
    %286 = vmatpush2.msra.mxu0 0.0
    %287 = vmatprep.subr.mxu0 0.0
    %288 = vmatpush2.msra.mxu0 0.0
    %289 = vmatprep.subr.mxu0 0.0
    %290 = vmatpush2.msra.mxu0 0.0
    %291 = vmatprep.subr.mxu0 0.0
    %292 = vmatpush2.msra.mxu0 0.0
    %293 = vmatprep.subr.mxu0 0.0
    %294 = vmatpush2.msra.mxu0 0.0
    %295 = vmatprep.subr.mxu0 0.0
    %296 = vmatpush2.msra.mxu0 0.0
    %297 = vmatprep.subr.mxu0 0.0
    %298 = vmatpush2.msra.mxu0 0.0
    %299 = vmatprep.subr.mxu0 0.0
    %300 = vmatpush2.msra.mxu0 0.0
    %301 = vmatprep.subr.mxu0 0.0
    %302 = vmatpush2.msra.mxu0 0.0
    %303 = vmatprep.subr.mxu0 0.0
    %304 = vmatpush2.msra.mxu0 0.0
    %305 = vmatprep.subr.mxu0 0.0
    %306 = vmatpush2.msra.mxu0 0.0
    %307 = vmatprep.subr.mxu0 0.0
    %308 = vmatpush2.msra.mxu0 0.0
    %309 = vmatprep.subr.mxu0 0.0
    %310 = vmatpush2.msra.mxu0 0.0
    %311 = vmatprep.subr.mxu0 0.0
    %312 = vmatpush2.msra.mxu0 0.0
    %313 = vmatprep.mubr.f32.mxu0 0.0
    %314 = vmatmul.mubr.f32.gmra.mxu0 %v244
    %v315 = vpop.f32.mrf.mxu0
    %v316 = vadd.f32 %v241, %v315
    %v317 = vpop.f32.mrf.mxu0
    %318 = vmatprep.mubr.f32.mxu0 0.0
    %319 = vmatmul.mubr.f32.gmra.mxu0 %v247
    %v320 = vpop.f32.mrf.mxu0
    %v321 = vadd.f32 %v241, %v320
    %v322 = vpop.f32.mrf.mxu0
    %323 = vdwg.mxu0
    %v324 = vld [vmem:[%s7] sm:$0xff]
    %v325 = vld [vmem:[%s7 + $0x8] sm:$0xff]
    %v326 = vld [vmem:[%s7 + $0x10] sm:$0xff]
    %v327 = vld [vmem:[%s7 + $0x18] sm:$0xff]
    %v328 = vld [vmem:[%s8] sm:$0x1]
    %v330 = vlaneseq
    %v331 = vshrl.u32 %v330, 7
    %v332 = vsub.s32 0, %v331
    %v333 = vrot.slane %v328, %v332
    %335 = vmatprep.subr.mxu0 0.0
    %336 = vmatpush1.msra.mxu0 0.0
    %337 = vmatprep.subr.mxu0 0.0
    %338 = vmatpush1.msra.mxu0 0.0
    %339 = vmatprep.subr.mxu0 0.0
    %340 = vmatpush1.msra.mxu0 0.0
    %341 = vmatprep.subr.mxu0 0.0
    %342 = vmatpush1.msra.mxu0 0.0
    %343 = vmatprep.subr.mxu0 0.0
    %344 = vmatpush1.msra.mxu0 0.0
    %345 = vmatprep.subr.mxu0 0.0
    %346 = vmatpush1.msra.mxu0 0.0
    %347 = vmatprep.subr.mxu0 0.0
    %348 = vmatpush1.msra.mxu0 0.0
    %349 = vmatprep.subr.mxu0 0.0
    %350 = vmatpush1.msra.mxu0 0.0
    %351 = vmatprep.subr.mxu0 0.0
    %352 = vmatpush1.msra.mxu0 0.0
    %353 = vmatprep.subr.mxu0 0.0
    %354 = vmatpush1.msra.mxu0 0.0
    %355 = vmatprep.subr.mxu0 0.0
    %356 = vmatpush1.msra.mxu0 0.0
    %357 = vmatprep.subr.mxu0 0.0
    %358 = vmatpush1.msra.mxu0 0.0
    %359 = vmatprep.subr.mxu0 0.0
    %360 = vmatpush1.msra.mxu0 %v327
    %361 = vmatprep.subr.mxu0 0.0
    %362 = vmatpush1.msra.mxu0 %v326
    %363 = vmatprep.subr.mxu0 0.0
    %364 = vmatpush1.msra.mxu0 %v325
    %365 = vmatprep.subr.mxu0 0.0
    %366 = vmatpush1.msra.mxu0 %v324
    %367 = vmatprep.subr.mxu0 0.0
    %368 = vmatpush2.msra.mxu0 0.0
    %369 = vmatprep.subr.mxu0 0.0
    %370 = vmatpush2.msra.mxu0 0.0
    %371 = vmatprep.subr.mxu0 0.0
    %372 = vmatpush2.msra.mxu0 0.0
    %373 = vmatprep.subr.mxu0 0.0
    %374 = vmatpush2.msra.mxu0 0.0
    %375 = vmatprep.subr.mxu0 0.0
    %376 = vmatpush2.msra.mxu0 0.0
    %377 = vmatprep.subr.mxu0 0.0
    %378 = vmatpush2.msra.mxu0 0.0
    %379 = vmatprep.subr.mxu0 0.0
    %380 = vmatpush2.msra.mxu0 0.0
    %381 = vmatprep.subr.mxu0 0.0
    %382 = vmatpush2.msra.mxu0 0.0
    %383 = vmatprep.subr.mxu0 0.0
    %384 = vmatpush2.msra.mxu0 0.0
    %385 = vmatprep.subr.mxu0 0.0
    %386 = vmatpush2.msra.mxu0 0.0
    %387 = vmatprep.subr.mxu0 0.0
    %388 = vmatpush2.msra.mxu0 0.0
    %389 = vmatprep.subr.mxu0 0.0
    %390 = vmatpush2.msra.mxu0 0.0
    %391 = vmatprep.subr.mxu0 0.0
    %392 = vmatpush2.msra.mxu0 0.0
    %393 = vmatprep.subr.mxu0 0.0
    %394 = vmatpush2.msra.mxu0 0.0
    %395 = vmatprep.subr.mxu0 0.0
    %396 = vmatpush2.msra.mxu0 0.0
    %397 = vmatprep.subr.mxu0 0.0
    %398 = vmatpush2.msra.mxu0 0.0
    %399 = vmatprep.mubr.f32.mxu0 0.0
    %400 = vmatmul.mubr.f32.gmra.mxu0 %v244
    %v401 = vpop.f32.mrf.mxu0
    %v402 = vadd.f32 %v333, %v401
    %v403 = vpop.f32.mrf.mxu0
    %404 = vmatprep.mubr.f32.mxu0 0.0
    %405 = vmatmul.mubr.f32.gmra.mxu0 %v247
    %v406 = vpop.f32.mrf.mxu0
    %v407 = vadd.f32 %v333, %v406
    %v408 = vpop.f32.mrf.mxu0
    %409 = vdwg.mxu0
    %v410 = vld [vmem:[%s9] sm:$0xff]
    %v411 = vld [vmem:[%s9 + $0x8] sm:$0xff]
    %v412 = vld [vmem:[%s9 + $0x10] sm:$0xff]
    %v413 = vld [vmem:[%s9 + $0x18] sm:$0xff]
    %v414 = vld [vmem:[%s10] sm:$0x1]
    %v416 = vlaneseq
    %v417 = vshrl.u32 %v416, 7
    %v418 = vsub.s32 0, %v417
    %v419 = vrot.slane %v414, %v418
    %421 = vmatprep.subr.mxu0 0.0
    %422 = vmatpush1.msra.mxu0 0.0
    %423 = vmatprep.subr.mxu0 0.0
    %424 = vmatpush1.msra.mxu0 0.0
    %425 = vmatprep.subr.mxu0 0.0
    %426 = vmatpush1.msra.mxu0 0.0
    %427 = vmatprep.subr.mxu0 0.0
    %428 = vmatpush1.msra.mxu0 0.0
    %429 = vmatprep.subr.mxu0 0.0
    %430 = vmatpush1.msra.mxu0 0.0
    %431 = vmatprep.subr.mxu0 0.0
    %432 = vmatpush1.msra.mxu0 0.0
    %433 = vmatprep.subr.mxu0 0.0
    %434 = vmatpush1.msra.mxu0 0.0
    %435 = vmatprep.subr.mxu0 0.0
    %436 = vmatpush1.msra.mxu0 0.0
    %437 = vmatprep.subr.mxu0 0.0
    %438 = vmatpush1.msra.mxu0 0.0
    %439 = vmatprep.subr.mxu0 0.0
    %440 = vmatpush1.msra.mxu0 0.0
    %441 = vmatprep.subr.mxu0 0.0
    %442 = vmatpush1.msra.mxu0 0.0
    %443 = vmatprep.subr.mxu0 0.0
    %444 = vmatpush1.msra.mxu0 0.0
    %445 = vmatprep.subr.mxu0 0.0
    %446 = vmatpush1.msra.mxu0 %v413
    %447 = vmatprep.subr.mxu0 0.0
    %448 = vmatpush1.msra.mxu0 %v412
    %449 = vmatprep.subr.mxu0 0.0
    %450 = vmatpush1.msra.mxu0 %v411
    %451 = vmatprep.subr.mxu0 0.0
    %452 = vmatpush1.msra.mxu0 %v410
    %453 = vmatprep.subr.mxu0 0.0
    %454 = vmatpush2.msra.mxu0 0.0
    %455 = vmatprep.subr.mxu0 0.0
    %456 = vmatpush2.msra.mxu0 0.0
    %457 = vmatprep.subr.mxu0 0.0
    %458 = vmatpush2.msra.mxu0 0.0
    %459 = vmatprep.subr.mxu0 0.0
    %460 = vmatpush2.msra.mxu0 0.0
    %461 = vmatprep.subr.mxu0 0.0
    %462 = vmatpush2.msra.mxu0 0.0
    %463 = vmatprep.subr.mxu0 0.0
    %464 = vmatpush2.msra.mxu0 0.0
    %465 = vmatprep.subr.mxu0 0.0
    %466 = vmatpush2.msra.mxu0 0.0
    %467 = vmatprep.subr.mxu0 0.0
    %468 = vmatpush2.msra.mxu0 0.0
    %469 = vmatprep.subr.mxu0 0.0
    %470 = vmatpush2.msra.mxu0 0.0
    %471 = vmatprep.subr.mxu0 0.0
    %472 = vmatpush2.msra.mxu0 0.0
    %473 = vmatprep.subr.mxu0 0.0
    %474 = vmatpush2.msra.mxu0 0.0
    %475 = vmatprep.subr.mxu0 0.0
    %476 = vmatpush2.msra.mxu0 0.0
    %477 = vmatprep.subr.mxu0 0.0
    %478 = vmatpush2.msra.mxu0 0.0
    %479 = vmatprep.subr.mxu0 0.0
    %480 = vmatpush2.msra.mxu0 0.0
    %481 = vmatprep.subr.mxu0 0.0
    %482 = vmatpush2.msra.mxu0 0.0
    %483 = vmatprep.subr.mxu0 0.0
    %484 = vmatpush2.msra.mxu0 0.0
    %485 = vmatprep.mubr.f32.mxu0 0.0
    %486 = vmatmul.mubr.f32.gmra.mxu0 %v244
    %v487 = vpop.f32.mrf.mxu0
    %v488 = vadd.f32 %v419, %v487
    %v489 = vpop.f32.mrf.mxu0
    %490 = vmatprep.mubr.f32.mxu0 0.0
    %491 = vmatmul.mubr.f32.gmra.mxu0 %v247
    %v492 = vpop.f32.mrf.mxu0
    %v493 = vadd.f32 %v419, %v492
    %v494 = vpop.f32.mrf.mxu0
    %495 = vdwg.mxu0
    %vm496 = vcmask 64512
    %v498 = vsel %vm496, %v316, 0
    %v501 = vsel %vm496, %v402, 0
    %503 = vmatprep.subr.mxu0 0.0
    %504 = vmatpush1.xpose.msra.mxu0 0.0
    %505 = vmatprep.subr.mxu0 0.0
    %506 = vmatpush1.xpose.msra.mxu0 0.0
    %507 = vmatprep.subr.mxu0 0.0
    %508 = vmatpush1.xpose.msra.mxu0 0.0
    %509 = vmatprep.subr.mxu0 0.0
    %510 = vmatpush1.xpose.msra.mxu0 0.0
    %511 = vmatprep.subr.mxu0 0.0
    %512 = vmatpush1.xpose.msra.mxu0 0.0
    %513 = vmatprep.subr.mxu0 0.0
    %514 = vmatpush1.xpose.msra.mxu0 0.0
    %515 = vmatprep.subr.mxu0 0.0
    %516 = vmatpush1.xpose.msra.mxu0 0.0
    %517 = vmatprep.subr.mxu0 0.0
    %518 = vmatpush1.xpose.msra.mxu0 0.0
    %519 = vmatprep.subr.mxu0 0.0
    %520 = vmatpush1.xpose.msra.mxu0 0.0
    %521 = vmatprep.subr.mxu0 0.0
    %522 = vmatpush1.xpose.msra.mxu0 0.0
    %523 = vmatprep.subr.mxu0 0.0
    %524 = vmatpush1.xpose.msra.mxu0 0.0
    %525 = vmatprep.subr.mxu0 0.0
    %526 = vmatpush1.xpose.msra.mxu0 0.0
    %527 = vmatprep.subr.mxu0 0.0
    %528 = vmatpush1.xpose.msra.mxu0 0.0
    %529 = vmatprep.subr.mxu0 0.0
    %530 = vmatpush1.xpose.msra.mxu0 0.0
    %531 = vmatprep.subr.mxu0 0.0
    %532 = vmatpush1.xpose.msra.mxu0 0.0
    %533 = vmatprep.subr.mxu0 0.0
    %534 = vmatpush1.xpose.msra.mxu0 %v501
    %535 = vmatprep.subr.mxu0 0.0
    %536 = vmatpush2.xpose.msra.mxu0 0.0
    %537 = vmatprep.subr.mxu0 0.0
    %538 = vmatpush2.xpose.msra.mxu0 0.0
    %539 = vmatprep.subr.mxu0 0.0
    %540 = vmatpush2.xpose.msra.mxu0 0.0
    %541 = vmatprep.subr.mxu0 0.0
    %542 = vmatpush2.xpose.msra.mxu0 0.0
    %543 = vmatprep.subr.mxu0 0.0
    %544 = vmatpush2.xpose.msra.mxu0 0.0
    %545 = vmatprep.subr.mxu0 0.0
    %546 = vmatpush2.xpose.msra.mxu0 0.0
    %547 = vmatprep.subr.mxu0 0.0
    %548 = vmatpush2.xpose.msra.mxu0 0.0
    %549 = vmatprep.subr.mxu0 0.0
    %550 = vmatpush2.xpose.msra.mxu0 0.0
    %551 = vmatprep.subr.mxu0 0.0
    %552 = vmatpush2.xpose.msra.mxu0 0.0
    %553 = vmatprep.subr.mxu0 0.0
    %554 = vmatpush2.xpose.msra.mxu0 0.0
    %555 = vmatprep.subr.mxu0 0.0
    %556 = vmatpush2.xpose.msra.mxu0 0.0
    %557 = vmatprep.subr.mxu0 0.0
    %558 = vmatpush2.xpose.msra.mxu0 0.0
    %559 = vmatprep.subr.mxu0 0.0
    %560 = vmatpush2.xpose.msra.mxu0 0.0
    %561 = vmatprep.subr.mxu0 0.0
    %562 = vmatpush2.xpose.msra.mxu0 0.0
    %563 = vmatprep.subr.mxu0 0.0
    %564 = vmatpush2.xpose.msra.mxu0 0.0
    %565 = vmatprep.subr.mxu0 0.0
    %566 = vmatpush2.xpose.msra.mxu0 0.0
    %567 = vmatprep.mubr.f32.mxu0 0.0
    %568 = vmatmul.mubr.f32.gmra.mxu0 %v498
    %v569 = vpop.f32.mrf.mxu0
    %v570 = vadd.f32 %v185, %v569
    %v571 = vpop.f32.mrf.mxu0
    %572 = vdwg.mxu0
    %v574 = vsel %vm496, %v321, 0
    %v577 = vsel %vm496, %v407, 0
    %579 = vmatprep.subr.mxu0 0.0
    %580 = vmatpush1.xpose.msra.mxu0 0.0
    %581 = vmatprep.subr.mxu0 0.0
    %582 = vmatpush1.xpose.msra.mxu0 0.0
    %583 = vmatprep.subr.mxu0 0.0
    %584 = vmatpush1.xpose.msra.mxu0 0.0
    %585 = vmatprep.subr.mxu0 0.0
    %586 = vmatpush1.xpose.msra.mxu0 0.0
    %587 = vmatprep.subr.mxu0 0.0
    %588 = vmatpush1.xpose.msra.mxu0 0.0
    %589 = vmatprep.subr.mxu0 0.0
    %590 = vmatpush1.xpose.msra.mxu0 0.0
    %591 = vmatprep.subr.mxu0 0.0
    %592 = vmatpush1.xpose.msra.mxu0 0.0
    %593 = vmatprep.subr.mxu0 0.0
    %594 = vmatpush1.xpose.msra.mxu0 0.0
    %595 = vmatprep.subr.mxu0 0.0
    %596 = vmatpush1.xpose.msra.mxu0 0.0
    %597 = vmatprep.subr.mxu0 0.0
    %598 = vmatpush1.xpose.msra.mxu0 0.0
    %599 = vmatprep.subr.mxu0 0.0
    %600 = vmatpush1.xpose.msra.mxu0 0.0
    %601 = vmatprep.subr.mxu0 0.0
    %602 = vmatpush1.xpose.msra.mxu0 0.0
    %603 = vmatprep.subr.mxu0 0.0
    %604 = vmatpush1.xpose.msra.mxu0 0.0
    %605 = vmatprep.subr.mxu0 0.0
    %606 = vmatpush1.xpose.msra.mxu0 0.0
    %607 = vmatprep.subr.mxu0 0.0
    %608 = vmatpush1.xpose.msra.mxu0 0.0
    %609 = vmatprep.subr.mxu0 0.0
    %610 = vmatpush1.xpose.msra.mxu0 %v577
    %611 = vmatprep.subr.mxu0 0.0
    %612 = vmatpush2.xpose.msra.mxu0 0.0
    %613 = vmatprep.subr.mxu0 0.0
    %614 = vmatpush2.xpose.msra.mxu0 0.0
    %615 = vmatprep.subr.mxu0 0.0
    %616 = vmatpush2.xpose.msra.mxu0 0.0
    %617 = vmatprep.subr.mxu0 0.0
    %618 = vmatpush2.xpose.msra.mxu0 0.0
    %619 = vmatprep.subr.mxu0 0.0
    %620 = vmatpush2.xpose.msra.mxu0 0.0
    %621 = vmatprep.subr.mxu0 0.0
    %622 = vmatpush2.xpose.msra.mxu0 0.0
    %623 = vmatprep.subr.mxu0 0.0
    %624 = vmatpush2.xpose.msra.mxu0 0.0
    %625 = vmatprep.subr.mxu0 0.0
    %626 = vmatpush2.xpose.msra.mxu0 0.0
    %627 = vmatprep.subr.mxu0 0.0
    %628 = vmatpush2.xpose.msra.mxu0 0.0
    %629 = vmatprep.subr.mxu0 0.0
    %630 = vmatpush2.xpose.msra.mxu0 0.0
    %631 = vmatprep.subr.mxu0 0.0
    %632 = vmatpush2.xpose.msra.mxu0 0.0
    %633 = vmatprep.subr.mxu0 0.0
    %634 = vmatpush2.xpose.msra.mxu0 0.0
    %635 = vmatprep.subr.mxu0 0.0
    %636 = vmatpush2.xpose.msra.mxu0 0.0
    %637 = vmatprep.subr.mxu0 0.0
    %638 = vmatpush2.xpose.msra.mxu0 0.0
    %639 = vmatprep.subr.mxu0 0.0
    %640 = vmatpush2.xpose.msra.mxu0 0.0
    %641 = vmatprep.subr.mxu0 0.0
    %642 = vmatpush2.xpose.msra.mxu0 0.0
    %643 = vmatprep.mubr.f32.mxu0 0.0
    %644 = vmatmul.mubr.f32.gmra.mxu0 %v574
    %v645 = vpop.f32.mrf.mxu0
    %v646 = vadd.f32 %v185, %v645
    %v647 = vpop.f32.mrf.mxu0
    %648 = vdwg.mxu0
    %v649 = vsel %vm496, %v570, -inf
    %650 = vmax.xlane.f32.xlu0 %v649
    %v651 = vpop.xlane.xlu0 %650
    %v652 = vsel %vm496, %v646, -inf
    %653 = vmax.xlane.f32.xlu0 %v652
    %v654 = vpop.xlane.xlu0 %653
    %v655 = vsub.f32 %v570, %v651
    %v656 = vsub.f32 %v646, %v654
    %v657 = vmul.f32 %v655, 1.442695
    %v658 = vpow.pop %v657
    %v659 = vmul.f32 %v656, 1.442695
    %v660 = vpow.pop %v659
    %v661 = vsel %vm496, %v658, 0.0
    %662 = vadd.xlane.f32.xlu0 %v661
    %v663 = vpop.xlane.xlu0 %662
    %v664 = vsel %vm496, %v660, 0.0
    %665 = vadd.xlane.f32.xlu0 %v664
    %v666 = vpop.xlane.xlu0 %665
    %v667 = vrcp.pop %v663
    %v668 = vrcp.pop %v666
    %v669 = vmul.f32 %v658, %v667
    %v670 = vmul.f32 %v660, %v668
    %v672 = vsel %vm496, %v669, 0
    %674 = vmatprep.subr.mxu0 0.0
    %675 = vmatpush1.msra.mxu0 0.0
    %676 = vmatprep.subr.mxu0 0.0
    %677 = vmatpush1.msra.mxu0 0.0
    %678 = vmatprep.subr.mxu0 0.0
    %679 = vmatpush1.msra.mxu0 0.0
    %680 = vmatprep.subr.mxu0 0.0
    %681 = vmatpush1.msra.mxu0 0.0
    %682 = vmatprep.subr.mxu0 0.0
    %683 = vmatpush1.msra.mxu0 0.0
    %684 = vmatprep.subr.mxu0 0.0
    %685 = vmatpush1.msra.mxu0 0.0
    %686 = vmatprep.subr.mxu0 0.0
    %687 = vmatpush1.msra.mxu0 0.0
    %688 = vmatprep.subr.mxu0 0.0
    %689 = vmatpush1.msra.mxu0 0.0
    %690 = vmatprep.subr.mxu0 0.0
    %691 = vmatpush1.msra.mxu0 0.0
    %692 = vmatprep.subr.mxu0 0.0
    %693 = vmatpush1.msra.mxu0 0.0
    %694 = vmatprep.subr.mxu0 0.0
    %695 = vmatpush1.msra.mxu0 0.0
    %696 = vmatprep.subr.mxu0 0.0
    %697 = vmatpush1.msra.mxu0 0.0
    %698 = vmatprep.subr.mxu0 0.0
    %699 = vmatpush1.msra.mxu0 0.0
    %700 = vmatprep.subr.mxu0 0.0
    %701 = vmatpush1.msra.mxu0 0.0
    %702 = vmatprep.subr.mxu0 0.0
    %703 = vmatpush1.msra.mxu0 0.0
    %704 = vmatprep.subr.mxu0 0.0
    %705 = vmatpush1.msra.mxu0 %v488
    %706 = vmatprep.subr.mxu0 0.0
    %707 = vmatpush2.msra.mxu0 0.0
    %708 = vmatprep.subr.mxu0 0.0
    %709 = vmatpush2.msra.mxu0 0.0
    %710 = vmatprep.subr.mxu0 0.0
    %711 = vmatpush2.msra.mxu0 0.0
    %712 = vmatprep.subr.mxu0 0.0
    %713 = vmatpush2.msra.mxu0 0.0
    %714 = vmatprep.subr.mxu0 0.0
    %715 = vmatpush2.msra.mxu0 0.0
    %716 = vmatprep.subr.mxu0 0.0
    %717 = vmatpush2.msra.mxu0 0.0
    %718 = vmatprep.subr.mxu0 0.0
    %719 = vmatpush2.msra.mxu0 0.0
    %720 = vmatprep.subr.mxu0 0.0
    %721 = vmatpush2.msra.mxu0 0.0
    %722 = vmatprep.subr.mxu0 0.0
    %723 = vmatpush2.msra.mxu0 0.0
    %724 = vmatprep.subr.mxu0 0.0
    %725 = vmatpush2.msra.mxu0 0.0
    %726 = vmatprep.subr.mxu0 0.0
    %727 = vmatpush2.msra.mxu0 0.0
    %728 = vmatprep.subr.mxu0 0.0
    %729 = vmatpush2.msra.mxu0 0.0
    %730 = vmatprep.subr.mxu0 0.0
    %731 = vmatpush2.msra.mxu0 0.0
    %732 = vmatprep.subr.mxu0 0.0
    %733 = vmatpush2.msra.mxu0 0.0
    %734 = vmatprep.subr.mxu0 0.0
    %735 = vmatpush2.msra.mxu0 0.0
    %736 = vmatprep.subr.mxu0 0.0
    %737 = vmatpush2.msra.mxu0 0.0
    %738 = vmatprep.mubr.f32.mxu0 0.0
    %739 = vmatmul.mubr.f32.gmra.mxu0 %v672
    %v740 = vpop.f32.mrf.mxu0
    %v741 = vadd.f32 0.0, %v740
    %v742 = vpop.f32.mrf.mxu0
    %743 = vdwg.mxu0
    %v745 = vsel %vm496, %v670, 0
    %747 = vmatprep.subr.mxu0 0.0
    %748 = vmatpush1.msra.mxu0 0.0
    %749 = vmatprep.subr.mxu0 0.0
    %750 = vmatpush1.msra.mxu0 0.0
    %751 = vmatprep.subr.mxu0 0.0
    %752 = vmatpush1.msra.mxu0 0.0
    %753 = vmatprep.subr.mxu0 0.0
    %754 = vmatpush1.msra.mxu0 0.0
    %755 = vmatprep.subr.mxu0 0.0
    %756 = vmatpush1.msra.mxu0 0.0
    %757 = vmatprep.subr.mxu0 0.0
    %758 = vmatpush1.msra.mxu0 0.0
    %759 = vmatprep.subr.mxu0 0.0
    %760 = vmatpush1.msra.mxu0 0.0
    %761 = vmatprep.subr.mxu0 0.0
    %762 = vmatpush1.msra.mxu0 0.0
    %763 = vmatprep.subr.mxu0 0.0
    %764 = vmatpush1.msra.mxu0 0.0
    %765 = vmatprep.subr.mxu0 0.0
    %766 = vmatpush1.msra.mxu0 0.0
    %767 = vmatprep.subr.mxu0 0.0
    %768 = vmatpush1.msra.mxu0 0.0
    %769 = vmatprep.subr.mxu0 0.0
    %770 = vmatpush1.msra.mxu0 0.0
    %771 = vmatprep.subr.mxu0 0.0
    %772 = vmatpush1.msra.mxu0 0.0
    %773 = vmatprep.subr.mxu0 0.0
    %774 = vmatpush1.msra.mxu0 0.0
    %775 = vmatprep.subr.mxu0 0.0
    %776 = vmatpush1.msra.mxu0 0.0
    %777 = vmatprep.subr.mxu0 0.0
    %778 = vmatpush1.msra.mxu0 %v493
    %779 = vmatprep.subr.mxu0 0.0
    %780 = vmatpush2.msra.mxu0 0.0
    %781 = vmatprep.subr.mxu0 0.0
    %782 = vmatpush2.msra.mxu0 0.0
    %783 = vmatprep.subr.mxu0 0.0
    %784 = vmatpush2.msra.mxu0 0.0
    %785 = vmatprep.subr.mxu0 0.0
    %786 = vmatpush2.msra.mxu0 0.0
    %787 = vmatprep.subr.mxu0 0.0
    %788 = vmatpush2.msra.mxu0 0.0
    %789 = vmatprep.subr.mxu0 0.0
    %790 = vmatpush2.msra.mxu0 0.0
    %791 = vmatprep.subr.mxu0 0.0
    %792 = vmatpush2.msra.mxu0 0.0
    %793 = vmatprep.subr.mxu0 0.0
    %794 = vmatpush2.msra.mxu0 0.0
    %795 = vmatprep.subr.mxu0 0.0
    %796 = vmatpush2.msra.mxu0 0.0
    %797 = vmatprep.subr.mxu0 0.0
    %798 = vmatpush2.msra.mxu0 0.0
    %799 = vmatprep.subr.mxu0 0.0
    %800 = vmatpush2.msra.mxu0 0.0
    %801 = vmatprep.subr.mxu0 0.0
    %802 = vmatpush2.msra.mxu0 0.0
    %803 = vmatprep.subr.mxu0 0.0
    %804 = vmatpush2.msra.mxu0 0.0
    %805 = vmatprep.subr.mxu0 0.0
    %806 = vmatpush2.msra.mxu0 0.0
    %807 = vmatprep.subr.mxu0 0.0
    %808 = vmatpush2.msra.mxu0 0.0
    %809 = vmatprep.subr.mxu0 0.0
    %810 = vmatpush2.msra.mxu0 0.0
    %811 = vmatprep.mubr.f32.mxu0 0.0
    %812 = vmatmul.mubr.f32.gmra.mxu0 %v745
    %v813 = vpop.f32.mrf.mxu0
    %v814 = vadd.f32 0.0, %v813
    %v815 = vpop.f32.mrf.mxu0
    %816 = vdwg.mxu0
    %817 = vrot.lane.b32.xlu0 %v316, 120
    %v818 = vpop.permute.xlu0 %817
    %819 = vrot.lane.b32.xlu0 %v402, 120
    %v820 = vpop.permute.xlu0 %819
    %v821 = vsel %vm496, %v818, 0
    %v823 = vsel %vm496, %v820, 0
    %825 = vmatprep.subr.mxu0 0.0
    %826 = vmatpush1.xpose.msra.mxu0 0.0
    %827 = vmatprep.subr.mxu0 0.0
    %828 = vmatpush1.xpose.msra.mxu0 0.0
    %829 = vmatprep.subr.mxu0 0.0
    %830 = vmatpush1.xpose.msra.mxu0 0.0
    %831 = vmatprep.subr.mxu0 0.0
    %832 = vmatpush1.xpose.msra.mxu0 0.0
    %833 = vmatprep.subr.mxu0 0.0
    %834 = vmatpush1.xpose.msra.mxu0 0.0
    %835 = vmatprep.subr.mxu0 0.0
    %836 = vmatpush1.xpose.msra.mxu0 0.0
    %837 = vmatprep.subr.mxu0 0.0
    %838 = vmatpush1.xpose.msra.mxu0 0.0
    %839 = vmatprep.subr.mxu0 0.0
    %840 = vmatpush1.xpose.msra.mxu0 0.0
    %841 = vmatprep.subr.mxu0 0.0
    %842 = vmatpush1.xpose.msra.mxu0 0.0
    %843 = vmatprep.subr.mxu0 0.0
    %844 = vmatpush1.xpose.msra.mxu0 0.0
    %845 = vmatprep.subr.mxu0 0.0
    %846 = vmatpush1.xpose.msra.mxu0 0.0
    %847 = vmatprep.subr.mxu0 0.0
    %848 = vmatpush1.xpose.msra.mxu0 0.0
    %849 = vmatprep.subr.mxu0 0.0
    %850 = vmatpush1.xpose.msra.mxu0 0.0
    %851 = vmatprep.subr.mxu0 0.0
    %852 = vmatpush1.xpose.msra.mxu0 0.0
    %853 = vmatprep.subr.mxu0 0.0
    %854 = vmatpush1.xpose.msra.mxu0 0.0
    %855 = vmatprep.subr.mxu0 0.0
    %856 = vmatpush1.xpose.msra.mxu0 %v823
    %857 = vmatprep.subr.mxu0 0.0
    %858 = vmatpush2.xpose.msra.mxu0 0.0
    %859 = vmatprep.subr.mxu0 0.0
    %860 = vmatpush2.xpose.msra.mxu0 0.0
    %861 = vmatprep.subr.mxu0 0.0
    %862 = vmatpush2.xpose.msra.mxu0 0.0
    %863 = vmatprep.subr.mxu0 0.0
    %864 = vmatpush2.xpose.msra.mxu0 0.0
    %865 = vmatprep.subr.mxu0 0.0
    %866 = vmatpush2.xpose.msra.mxu0 0.0
    %867 = vmatprep.subr.mxu0 0.0
    %868 = vmatpush2.xpose.msra.mxu0 0.0
    %869 = vmatprep.subr.mxu0 0.0
    %870 = vmatpush2.xpose.msra.mxu0 0.0
    %871 = vmatprep.subr.mxu0 0.0
    %872 = vmatpush2.xpose.msra.mxu0 0.0
    %873 = vmatprep.subr.mxu0 0.0
    %874 = vmatpush2.xpose.msra.mxu0 0.0
    %875 = vmatprep.subr.mxu0 0.0
    %876 = vmatpush2.xpose.msra.mxu0 0.0
    %877 = vmatprep.subr.mxu0 0.0
    %878 = vmatpush2.xpose.msra.mxu0 0.0
    %879 = vmatprep.subr.mxu0 0.0
    %880 = vmatpush2.xpose.msra.mxu0 0.0
    %881 = vmatprep.subr.mxu0 0.0
    %882 = vmatpush2.xpose.msra.mxu0 0.0
    %883 = vmatprep.subr.mxu0 0.0
    %884 = vmatpush2.xpose.msra.mxu0 0.0
    %885 = vmatprep.subr.mxu0 0.0
    %886 = vmatpush2.xpose.msra.mxu0 0.0
    %887 = vmatprep.subr.mxu0 0.0
    %888 = vmatpush2.xpose.msra.mxu0 0.0
    %889 = vmatprep.mubr.f32.mxu0 0.0
    %890 = vmatmul.mubr.f32.gmra.mxu0 %v821
    %v891 = vpop.f32.mrf.mxu0
    %v892 = vadd.f32 %v185, %v891
    %v893 = vpop.f32.mrf.mxu0
    %894 = vdwg.mxu0
    %895 = vrot.lane.b32.xlu0 %v321, 120
    %v896 = vpop.permute.xlu0 %895
    %897 = vrot.lane.b32.xlu0 %v407, 120
    %v898 = vpop.permute.xlu0 %897
    %v899 = vsel %vm496, %v896, 0
    %v901 = vsel %vm496, %v898, 0
    %903 = vmatprep.subr.mxu0 0.0
    %904 = vmatpush1.xpose.msra.mxu0 0.0
    %905 = vmatprep.subr.mxu0 0.0
    %906 = vmatpush1.xpose.msra.mxu0 0.0
    %907 = vmatprep.subr.mxu0 0.0
    %908 = vmatpush1.xpose.msra.mxu0 0.0
    %909 = vmatprep.subr.mxu0 0.0
    %910 = vmatpush1.xpose.msra.mxu0 0.0
    %911 = vmatprep.subr.mxu0 0.0
    %912 = vmatpush1.xpose.msra.mxu0 0.0
    %913 = vmatprep.subr.mxu0 0.0
    %914 = vmatpush1.xpose.msra.mxu0 0.0
    %915 = vmatprep.subr.mxu0 0.0
    %916 = vmatpush1.xpose.msra.mxu0 0.0
    %917 = vmatprep.subr.mxu0 0.0
    %918 = vmatpush1.xpose.msra.mxu0 0.0
    %919 = vmatprep.subr.mxu0 0.0
    %920 = vmatpush1.xpose.msra.mxu0 0.0
    %921 = vmatprep.subr.mxu0 0.0
    %922 = vmatpush1.xpose.msra.mxu0 0.0
    %923 = vmatprep.subr.mxu0 0.0
    %924 = vmatpush1.xpose.msra.mxu0 0.0
    %925 = vmatprep.subr.mxu0 0.0
    %926 = vmatpush1.xpose.msra.mxu0 0.0
    %927 = vmatprep.subr.mxu0 0.0
    %928 = vmatpush1.xpose.msra.mxu0 0.0
    %929 = vmatprep.subr.mxu0 0.0
    %930 = vmatpush1.xpose.msra.mxu0 0.0
    %931 = vmatprep.subr.mxu0 0.0
    %932 = vmatpush1.xpose.msra.mxu0 0.0
    %933 = vmatprep.subr.mxu0 0.0
    %934 = vmatpush1.xpose.msra.mxu0 %v901
    %935 = vmatprep.subr.mxu0 0.0
    %936 = vmatpush2.xpose.msra.mxu0 0.0
    %937 = vmatprep.subr.mxu0 0.0
    %938 = vmatpush2.xpose.msra.mxu0 0.0
    %939 = vmatprep.subr.mxu0 0.0
    %940 = vmatpush2.xpose.msra.mxu0 0.0
    %941 = vmatprep.subr.mxu0 0.0
    %942 = vmatpush2.xpose.msra.mxu0 0.0
    %943 = vmatprep.subr.mxu0 0.0
    %944 = vmatpush2.xpose.msra.mxu0 0.0
    %945 = vmatprep.subr.mxu0 0.0
    %946 = vmatpush2.xpose.msra.mxu0 0.0
    %947 = vmatprep.subr.mxu0 0.0
    %948 = vmatpush2.xpose.msra.mxu0 0.0
    %949 = vmatprep.subr.mxu0 0.0
    %950 = vmatpush2.xpose.msra.mxu0 0.0
    %951 = vmatprep.subr.mxu0 0.0
    %952 = vmatpush2.xpose.msra.mxu0 0.0
    %953 = vmatprep.subr.mxu0 0.0
    %954 = vmatpush2.xpose.msra.mxu0 0.0
    %955 = vmatprep.subr.mxu0 0.0
    %956 = vmatpush2.xpose.msra.mxu0 0.0
    %957 = vmatprep.subr.mxu0 0.0
    %958 = vmatpush2.xpose.msra.mxu0 0.0
    %959 = vmatprep.subr.mxu0 0.0
    %960 = vmatpush2.xpose.msra.mxu0 0.0
    %961 = vmatprep.subr.mxu0 0.0
    %962 = vmatpush2.xpose.msra.mxu0 0.0
    %963 = vmatprep.subr.mxu0 0.0
    %964 = vmatpush2.xpose.msra.mxu0 0.0
    %965 = vmatprep.subr.mxu0 0.0
    %966 = vmatpush2.xpose.msra.mxu0 0.0
    %967 = vmatprep.mubr.f32.mxu0 0.0
    %968 = vmatmul.mubr.f32.gmra.mxu0 %v899
    %v969 = vpop.f32.mrf.mxu0
    %v970 = vadd.f32 %v185, %v969
    %v971 = vpop.f32.mrf.mxu0
    %972 = vdwg.mxu0
    %v973 = vsel %vm496, %v892, -inf
    %974 = vmax.xlane.f32.xlu0 %v973
    %v975 = vpop.xlane.xlu0 %974
    %v976 = vsel %vm496, %v970, -inf
    %977 = vmax.xlane.f32.xlu0 %v976
    %v978 = vpop.xlane.xlu0 %977
    %v979 = vsub.f32 %v892, %v975
    %v980 = vsub.f32 %v970, %v978
    %v981 = vmul.f32 %v979, 1.442695
    %v982 = vpow.pop %v981
    %v983 = vmul.f32 %v980, 1.442695
    %v984 = vpow.pop %v983
    %v985 = vsel %vm496, %v982, 0.0
    %986 = vadd.xlane.f32.xlu0 %v985
    %v987 = vpop.xlane.xlu0 %986
    %v988 = vsel %vm496, %v984, 0.0
    %989 = vadd.xlane.f32.xlu0 %v988
    %v990 = vpop.xlane.xlu0 %989
    %v991 = vrcp.pop %v987
    %v992 = vrcp.pop %v990
    %v993 = vmul.f32 %v982, %v991
    %v994 = vmul.f32 %v984, %v992
    %996 = vrot.lane.b32.xlu0 %v488, 120
    %v997 = vpop.permute.xlu0 %996
    %v1000 = vsel %vm496, %v993, 0
    %1002 = vmatprep.subr.mxu0 0.0
    %1003 = vmatpush1.msra.mxu0 0.0
    %1004 = vmatprep.subr.mxu0 0.0
    %1005 = vmatpush1.msra.mxu0 0.0
    %1006 = vmatprep.subr.mxu0 0.0
    %1007 = vmatpush1.msra.mxu0 0.0
    %1008 = vmatprep.subr.mxu0 0.0
    %1009 = vmatpush1.msra.mxu0 0.0
    %1010 = vmatprep.subr.mxu0 0.0
    %1011 = vmatpush1.msra.mxu0 0.0
    %1012 = vmatprep.subr.mxu0 0.0
    %1013 = vmatpush1.msra.mxu0 0.0
    %1014 = vmatprep.subr.mxu0 0.0
    %1015 = vmatpush1.msra.mxu0 0.0
    %1016 = vmatprep.subr.mxu0 0.0
    %1017 = vmatpush1.msra.mxu0 0.0
    %1018 = vmatprep.subr.mxu0 0.0
    %1019 = vmatpush1.msra.mxu0 0.0
    %1020 = vmatprep.subr.mxu0 0.0
    %1021 = vmatpush1.msra.mxu0 0.0
    %1022 = vmatprep.subr.mxu0 0.0
    %1023 = vmatpush1.msra.mxu0 0.0
    %1024 = vmatprep.subr.mxu0 0.0
    %1025 = vmatpush1.msra.mxu0 0.0
    %1026 = vmatprep.subr.mxu0 0.0
    %1027 = vmatpush1.msra.mxu0 0.0
    %1028 = vmatprep.subr.mxu0 0.0
    %1029 = vmatpush1.msra.mxu0 0.0
    %1030 = vmatprep.subr.mxu0 0.0
    %1031 = vmatpush1.msra.mxu0 0.0
    %1032 = vmatprep.subr.mxu0 0.0
    %1033 = vmatpush1.msra.mxu0 %v997
    %1034 = vmatprep.subr.mxu0 0.0
    %1035 = vmatpush2.msra.mxu0 0.0
    %1036 = vmatprep.subr.mxu0 0.0
    %1037 = vmatpush2.msra.mxu0 0.0
    %1038 = vmatprep.subr.mxu0 0.0
    %1039 = vmatpush2.msra.mxu0 0.0
    %1040 = vmatprep.subr.mxu0 0.0
    %1041 = vmatpush2.msra.mxu0 0.0
    %1042 = vmatprep.subr.mxu0 0.0
    %1043 = vmatpush2.msra.mxu0 0.0
    %1044 = vmatprep.subr.mxu0 0.0
    %1045 = vmatpush2.msra.mxu0 0.0
    %1046 = vmatprep.subr.mxu0 0.0
    %1047 = vmatpush2.msra.mxu0 0.0
    %1048 = vmatprep.subr.mxu0 0.0
    %1049 = vmatpush2.msra.mxu0 0.0
    %1050 = vmatprep.subr.mxu0 0.0
    %1051 = vmatpush2.msra.mxu0 0.0
    %1052 = vmatprep.subr.mxu0 0.0
    %1053 = vmatpush2.msra.mxu0 0.0
    %1054 = vmatprep.subr.mxu0 0.0
    %1055 = vmatpush2.msra.mxu0 0.0
    %1056 = vmatprep.subr.mxu0 0.0
    %1057 = vmatpush2.msra.mxu0 0.0
    %1058 = vmatprep.subr.mxu0 0.0
    %1059 = vmatpush2.msra.mxu0 0.0
    %1060 = vmatprep.subr.mxu0 0.0
    %1061 = vmatpush2.msra.mxu0 0.0
    %1062 = vmatprep.subr.mxu0 0.0
    %1063 = vmatpush2.msra.mxu0 0.0
    %1064 = vmatprep.subr.mxu0 0.0
    %1065 = vmatpush2.msra.mxu0 0.0
    %1066 = vmatprep.mubr.f32.mxu0 0.0
    %1067 = vmatmul.mubr.f32.gmra.mxu0 %v1000
    %v1068 = vpop.f32.mrf.mxu0
    %v1069 = vadd.f32 0.0, %v1068
    %v1070 = vpop.f32.mrf.mxu0
    %1071 = vdwg.mxu0
    %1073 = vrot.lane.b32.xlu0 %v493, 120
    %v1074 = vpop.permute.xlu0 %1073
    %v1077 = vsel %vm496, %v994, 0
    %1079 = vmatprep.subr.mxu0 0.0
    %1080 = vmatpush1.msra.mxu0 0.0
    %1081 = vmatprep.subr.mxu0 0.0
    %1082 = vmatpush1.msra.mxu0 0.0
    %1083 = vmatprep.subr.mxu0 0.0
    %1084 = vmatpush1.msra.mxu0 0.0
    %1085 = vmatprep.subr.mxu0 0.0
    %1086 = vmatpush1.msra.mxu0 0.0
    %1087 = vmatprep.subr.mxu0 0.0
    %1088 = vmatpush1.msra.mxu0 0.0
    %1089 = vmatprep.subr.mxu0 0.0
    %1090 = vmatpush1.msra.mxu0 0.0
    %1091 = vmatprep.subr.mxu0 0.0
    %1092 = vmatpush1.msra.mxu0 0.0
    %1093 = vmatprep.subr.mxu0 0.0
    %1094 = vmatpush1.msra.mxu0 0.0
    %1095 = vmatprep.subr.mxu0 0.0
    %1096 = vmatpush1.msra.mxu0 0.0
    %1097 = vmatprep.subr.mxu0 0.0
    %1098 = vmatpush1.msra.mxu0 0.0
    %1099 = vmatprep.subr.mxu0 0.0
    %1100 = vmatpush1.msra.mxu0 0.0
    %1101 = vmatprep.subr.mxu0 0.0
    %1102 = vmatpush1.msra.mxu0 0.0
    %1103 = vmatprep.subr.mxu0 0.0
    %1104 = vmatpush1.msra.mxu0 0.0
    %1105 = vmatprep.subr.mxu0 0.0
    %1106 = vmatpush1.msra.mxu0 0.0
    %1107 = vmatprep.subr.mxu0 0.0
    %1108 = vmatpush1.msra.mxu0 0.0
    %1109 = vmatprep.subr.mxu0 0.0
    %1110 = vmatpush1.msra.mxu0 %v1074
    %1111 = vmatprep.subr.mxu0 0.0
    %1112 = vmatpush2.msra.mxu0 0.0
    %1113 = vmatprep.subr.mxu0 0.0
    %1114 = vmatpush2.msra.mxu0 0.0
    %1115 = vmatprep.subr.mxu0 0.0
    %1116 = vmatpush2.msra.mxu0 0.0
    %1117 = vmatprep.subr.mxu0 0.0
    %1118 = vmatpush2.msra.mxu0 0.0
    %1119 = vmatprep.subr.mxu0 0.0
    %1120 = vmatpush2.msra.mxu0 0.0
    %1121 = vmatprep.subr.mxu0 0.0
    %1122 = vmatpush2.msra.mxu0 0.0
    %1123 = vmatprep.subr.mxu0 0.0
    %1124 = vmatpush2.msra.mxu0 0.0
    %1125 = vmatprep.subr.mxu0 0.0
    %1126 = vmatpush2.msra.mxu0 0.0
    %1127 = vmatprep.subr.mxu0 0.0
    %1128 = vmatpush2.msra.mxu0 0.0
    %1129 = vmatprep.subr.mxu0 0.0
    %1130 = vmatpush2.msra.mxu0 0.0
    %1131 = vmatprep.subr.mxu0 0.0
    %1132 = vmatpush2.msra.mxu0 0.0
    %1133 = vmatprep.subr.mxu0 0.0
    %1134 = vmatpush2.msra.mxu0 0.0
    %1135 = vmatprep.subr.mxu0 0.0
    %1136 = vmatpush2.msra.mxu0 0.0
    %1137 = vmatprep.subr.mxu0 0.0
    %1138 = vmatpush2.msra.mxu0 0.0
    %1139 = vmatprep.subr.mxu0 0.0
    %1140 = vmatpush2.msra.mxu0 0.0
    %1141 = vmatprep.subr.mxu0 0.0
    %1142 = vmatpush2.msra.mxu0 0.0
    %1143 = vmatprep.mubr.f32.mxu0 0.0
    %1144 = vmatmul.mubr.f32.gmra.mxu0 %v1077
    %v1145 = vpop.f32.mrf.mxu0
    %v1146 = vadd.f32 0.0, %v1145
    %v1147 = vpop.f32.mrf.mxu0
    %1148 = vdwg.mxu0
    %1149 = vrot.lane.b32.xlu0 %v316, 112
    %v1150 = vpop.permute.xlu0 %1149
    %1151 = vrot.lane.b32.xlu0 %v402, 112
    %v1152 = vpop.permute.xlu0 %1151
    %v1153 = vsel %vm496, %v1150, 0
    %v1155 = vsel %vm496, %v1152, 0
    %1157 = vmatprep.subr.mxu0 0.0
    %1158 = vmatpush1.xpose.msra.mxu0 0.0
    %1159 = vmatprep.subr.mxu0 0.0
    %1160 = vmatpush1.xpose.msra.mxu0 0.0
    %1161 = vmatprep.subr.mxu0 0.0
    %1162 = vmatpush1.xpose.msra.mxu0 0.0
    %1163 = vmatprep.subr.mxu0 0.0
    %1164 = vmatpush1.xpose.msra.mxu0 0.0
    %1165 = vmatprep.subr.mxu0 0.0
    %1166 = vmatpush1.xpose.msra.mxu0 0.0
    %1167 = vmatprep.subr.mxu0 0.0
    %1168 = vmatpush1.xpose.msra.mxu0 0.0
    %1169 = vmatprep.subr.mxu0 0.0
    %1170 = vmatpush1.xpose.msra.mxu0 0.0
    %1171 = vmatprep.subr.mxu0 0.0
    %1172 = vmatpush1.xpose.msra.mxu0 0.0
    %1173 = vmatprep.subr.mxu0 0.0
    %1174 = vmatpush1.xpose.msra.mxu0 0.0
    %1175 = vmatprep.subr.mxu0 0.0
    %1176 = vmatpush1.xpose.msra.mxu0 0.0
    %1177 = vmatprep.subr.mxu0 0.0
    %1178 = vmatpush1.xpose.msra.mxu0 0.0
    %1179 = vmatprep.subr.mxu0 0.0
    %1180 = vmatpush1.xpose.msra.mxu0 0.0
    %1181 = vmatprep.subr.mxu0 0.0
    %1182 = vmatpush1.xpose.msra.mxu0 0.0
    %1183 = vmatprep.subr.mxu0 0.0
    %1184 = vmatpush1.xpose.msra.mxu0 0.0
    %1185 = vmatprep.subr.mxu0 0.0
    %1186 = vmatpush1.xpose.msra.mxu0 0.0
    %1187 = vmatprep.subr.mxu0 0.0
    %1188 = vmatpush1.xpose.msra.mxu0 %v1155
    %1189 = vmatprep.subr.mxu0 0.0
    %1190 = vmatpush2.xpose.msra.mxu0 0.0
    %1191 = vmatprep.subr.mxu0 0.0
    %1192 = vmatpush2.xpose.msra.mxu0 0.0
    %1193 = vmatprep.subr.mxu0 0.0
    %1194 = vmatpush2.xpose.msra.mxu0 0.0
    %1195 = vmatprep.subr.mxu0 0.0
    %1196 = vmatpush2.xpose.msra.mxu0 0.0
    %1197 = vmatprep.subr.mxu0 0.0
    %1198 = vmatpush2.xpose.msra.mxu0 0.0
    %1199 = vmatprep.subr.mxu0 0.0
    %1200 = vmatpush2.xpose.msra.mxu0 0.0
    %1201 = vmatprep.subr.mxu0 0.0
    %1202 = vmatpush2.xpose.msra.mxu0 0.0
    %1203 = vmatprep.subr.mxu0 0.0
    %1204 = vmatpush2.xpose.msra.mxu0 0.0
    %1205 = vmatprep.subr.mxu0 0.0
    %1206 = vmatpush2.xpose.msra.mxu0 0.0
    %1207 = vmatprep.subr.mxu0 0.0
    %1208 = vmatpush2.xpose.msra.mxu0 0.0
    %1209 = vmatprep.subr.mxu0 0.0
    %1210 = vmatpush2.xpose.msra.mxu0 0.0
    %1211 = vmatprep.subr.mxu0 0.0
    %1212 = vmatpush2.xpose.msra.mxu0 0.0
    %1213 = vmatprep.subr.mxu0 0.0
    %1214 = vmatpush2.xpose.msra.mxu0 0.0
    %1215 = vmatprep.subr.mxu0 0.0
    %1216 = vmatpush2.xpose.msra.mxu0 0.0
    %1217 = vmatprep.subr.mxu0 0.0
    %1218 = vmatpush2.xpose.msra.mxu0 0.0
    %1219 = vmatprep.subr.mxu0 0.0
    %1220 = vmatpush2.xpose.msra.mxu0 0.0
    %1221 = vmatprep.mubr.f32.mxu0 0.0
    %1222 = vmatmul.mubr.f32.gmra.mxu0 %v1153
    %v1223 = vpop.f32.mrf.mxu0
    %v1224 = vadd.f32 %v185, %v1223
    %v1225 = vpop.f32.mrf.mxu0
    %1226 = vdwg.mxu0
    %1227 = vrot.lane.b32.xlu0 %v321, 112
    %v1228 = vpop.permute.xlu0 %1227
    %1229 = vrot.lane.b32.xlu0 %v407, 112
    %v1230 = vpop.permute.xlu0 %1229
    %v1231 = vsel %vm496, %v1228, 0
    %v1233 = vsel %vm496, %v1230, 0
    %1235 = vmatprep.subr.mxu0 0.0
    %1236 = vmatpush1.xpose.msra.mxu0 0.0
    %1237 = vmatprep.subr.mxu0 0.0
    %1238 = vmatpush1.xpose.msra.mxu0 0.0
    %1239 = vmatprep.subr.mxu0 0.0
    %1240 = vmatpush1.xpose.msra.mxu0 0.0
    %1241 = vmatprep.subr.mxu0 0.0
    %1242 = vmatpush1.xpose.msra.mxu0 0.0
    %1243 = vmatprep.subr.mxu0 0.0
    %1244 = vmatpush1.xpose.msra.mxu0 0.0
    %1245 = vmatprep.subr.mxu0 0.0
    %1246 = vmatpush1.xpose.msra.mxu0 0.0
    %1247 = vmatprep.subr.mxu0 0.0
    %1248 = vmatpush1.xpose.msra.mxu0 0.0
    %1249 = vmatprep.subr.mxu0 0.0
    %1250 = vmatpush1.xpose.msra.mxu0 0.0
    %1251 = vmatprep.subr.mxu0 0.0
    %1252 = vmatpush1.xpose.msra.mxu0 0.0
    %1253 = vmatprep.subr.mxu0 0.0
    %1254 = vmatpush1.xpose.msra.mxu0 0.0
    %1255 = vmatprep.subr.mxu0 0.0
    %1256 = vmatpush1.xpose.msra.mxu0 0.0
    %1257 = vmatprep.subr.mxu0 0.0
    %1258 = vmatpush1.xpose.msra.mxu0 0.0
    %1259 = vmatprep.subr.mxu0 0.0
    %1260 = vmatpush1.xpose.msra.mxu0 0.0
    %1261 = vmatprep.subr.mxu0 0.0
    %1262 = vmatpush1.xpose.msra.mxu0 0.0
    %1263 = vmatprep.subr.mxu0 0.0
    %1264 = vmatpush1.xpose.msra.mxu0 0.0
    %1265 = vmatprep.subr.mxu0 0.0
    %1266 = vmatpush1.xpose.msra.mxu0 %v1233
    %1267 = vmatprep.subr.mxu0 0.0
    %1268 = vmatpush2.xpose.msra.mxu0 0.0
    %1269 = vmatprep.subr.mxu0 0.0
    %1270 = vmatpush2.xpose.msra.mxu0 0.0
    %1271 = vmatprep.subr.mxu0 0.0
    %1272 = vmatpush2.xpose.msra.mxu0 0.0
    %1273 = vmatprep.subr.mxu0 0.0
    %1274 = vmatpush2.xpose.msra.mxu0 0.0
    %1275 = vmatprep.subr.mxu0 0.0
    %1276 = vmatpush2.xpose.msra.mxu0 0.0
    %1277 = vmatprep.subr.mxu0 0.0
    %1278 = vmatpush2.xpose.msra.mxu0 0.0
    %1279 = vmatprep.subr.mxu0 0.0
    %1280 = vmatpush2.xpose.msra.mxu0 0.0
    %1281 = vmatprep.subr.mxu0 0.0
    %1282 = vmatpush2.xpose.msra.mxu0 0.0
    %1283 = vmatprep.subr.mxu0 0.0
    %1284 = vmatpush2.xpose.msra.mxu0 0.0
    %1285 = vmatprep.subr.mxu0 0.0
    %1286 = vmatpush2.xpose.msra.mxu0 0.0
    %1287 = vmatprep.subr.mxu0 0.0
    %1288 = vmatpush2.xpose.msra.mxu0 0.0
    %1289 = vmatprep.subr.mxu0 0.0
    %1290 = vmatpush2.xpose.msra.mxu0 0.0
    %1291 = vmatprep.subr.mxu0 0.0
    %1292 = vmatpush2.xpose.msra.mxu0 0.0
    %1293 = vmatprep.subr.mxu0 0.0
    %1294 = vmatpush2.xpose.msra.mxu0 0.0
    %1295 = vmatprep.subr.mxu0 0.0
    %1296 = vmatpush2.xpose.msra.mxu0 0.0
    %1297 = vmatprep.subr.mxu0 0.0
    %1298 = vmatpush2.xpose.msra.mxu0 0.0
    %1299 = vmatprep.mubr.f32.mxu0 0.0
    %1300 = vmatmul.mubr.f32.gmra.mxu0 %v1231
    %v1301 = vpop.f32.mrf.mxu0
    %v1302 = vadd.f32 %v185, %v1301
    %v1303 = vpop.f32.mrf.mxu0
    %1304 = vdwg.mxu0
    %v1305 = vsel %vm496, %v1224, -inf
    %1306 = vmax.xlane.f32.xlu0 %v1305
    %v1307 = vpop.xlane.xlu0 %1306
    %v1308 = vsel %vm496, %v1302, -inf
    %1309 = vmax.xlane.f32.xlu0 %v1308
    %v1310 = vpop.xlane.xlu0 %1309
    %v1311 = vsub.f32 %v1224, %v1307
    %v1312 = vsub.f32 %v1302, %v1310
    %v1313 = vmul.f32 %v1311, 1.442695
    %v1314 = vpow.pop %v1313
    %v1315 = vmul.f32 %v1312, 1.442695
    %v1316 = vpow.pop %v1315
    %v1317 = vsel %vm496, %v1314, 0.0
    %1318 = vadd.xlane.f32.xlu0 %v1317
    %v1319 = vpop.xlane.xlu0 %1318
    %v1320 = vsel %vm496, %v1316, 0.0
    %1321 = vadd.xlane.f32.xlu0 %v1320
    %v1322 = vpop.xlane.xlu0 %1321
    %v1323 = vrcp.pop %v1319
    %v1324 = vrcp.pop %v1322
    %v1325 = vmul.f32 %v1314, %v1323
    %v1326 = vmul.f32 %v1316, %v1324
    %1327 = vrot.lane.b32.xlu0 %v488, 112
    %v1328 = vpop.permute.xlu0 %1327
    %v1331 = vsel %vm496, %v1325, 0
    %1333 = vmatprep.subr.mxu0 0.0
    %1334 = vmatpush1.msra.mxu0 0.0
    %1335 = vmatprep.subr.mxu0 0.0
    %1336 = vmatpush1.msra.mxu0 0.0
    %1337 = vmatprep.subr.mxu0 0.0
    %1338 = vmatpush1.msra.mxu0 0.0
    %1339 = vmatprep.subr.mxu0 0.0
    %1340 = vmatpush1.msra.mxu0 0.0
    %1341 = vmatprep.subr.mxu0 0.0
    %1342 = vmatpush1.msra.mxu0 0.0
    %1343 = vmatprep.subr.mxu0 0.0
    %1344 = vmatpush1.msra.mxu0 0.0
    %1345 = vmatprep.subr.mxu0 0.0
    %1346 = vmatpush1.msra.mxu0 0.0
    %1347 = vmatprep.subr.mxu0 0.0
    %1348 = vmatpush1.msra.mxu0 0.0
    %1349 = vmatprep.subr.mxu0 0.0
    %1350 = vmatpush1.msra.mxu0 0.0
    %1351 = vmatprep.subr.mxu0 0.0
    %1352 = vmatpush1.msra.mxu0 0.0
    %1353 = vmatprep.subr.mxu0 0.0
    %1354 = vmatpush1.msra.mxu0 0.0
    %1355 = vmatprep.subr.mxu0 0.0
    %1356 = vmatpush1.msra.mxu0 0.0
    %1357 = vmatprep.subr.mxu0 0.0
    %1358 = vmatpush1.msra.mxu0 0.0
    %1359 = vmatprep.subr.mxu0 0.0
    %1360 = vmatpush1.msra.mxu0 0.0
    %1361 = vmatprep.subr.mxu0 0.0
    %1362 = vmatpush1.msra.mxu0 0.0
    %1363 = vmatprep.subr.mxu0 0.0
    %1364 = vmatpush1.msra.mxu0 %v1328
    %1365 = vmatprep.subr.mxu0 0.0
    %1366 = vmatpush2.msra.mxu0 0.0
    %1367 = vmatprep.subr.mxu0 0.0
    %1368 = vmatpush2.msra.mxu0 0.0
    %1369 = vmatprep.subr.mxu0 0.0
    %1370 = vmatpush2.msra.mxu0 0.0
    %1371 = vmatprep.subr.mxu0 0.0
    %1372 = vmatpush2.msra.mxu0 0.0
    %1373 = vmatprep.subr.mxu0 0.0
    %1374 = vmatpush2.msra.mxu0 0.0
    %1375 = vmatprep.subr.mxu0 0.0
    %1376 = vmatpush2.msra.mxu0 0.0
    %1377 = vmatprep.subr.mxu0 0.0
    %1378 = vmatpush2.msra.mxu0 0.0
    %1379 = vmatprep.subr.mxu0 0.0
    %1380 = vmatpush2.msra.mxu0 0.0
    %1381 = vmatprep.subr.mxu0 0.0
    %1382 = vmatpush2.msra.mxu0 0.0
    %1383 = vmatprep.subr.mxu0 0.0
    %1384 = vmatpush2.msra.mxu0 0.0
    %1385 = vmatprep.subr.mxu0 0.0
    %1386 = vmatpush2.msra.mxu0 0.0
    %1387 = vmatprep.subr.mxu0 0.0
    %1388 = vmatpush2.msra.mxu0 0.0
    %1389 = vmatprep.subr.mxu0 0.0
    %1390 = vmatpush2.msra.mxu0 0.0
    %1391 = vmatprep.subr.mxu0 0.0
    %1392 = vmatpush2.msra.mxu0 0.0
    %1393 = vmatprep.subr.mxu0 0.0
    %1394 = vmatpush2.msra.mxu0 0.0
    %1395 = vmatprep.subr.mxu0 0.0
    %1396 = vmatpush2.msra.mxu0 0.0
    %1397 = vmatprep.mubr.f32.mxu0 0.0
    %1398 = vmatmul.mubr.f32.gmra.mxu0 %v1331
    %v1399 = vpop.f32.mrf.mxu0
    %v1400 = vadd.f32 0.0, %v1399
    %v1401 = vpop.f32.mrf.mxu0
    %1402 = vdwg.mxu0
    %1403 = vrot.lane.b32.xlu0 %v493, 112
    %v1404 = vpop.permute.xlu0 %1403
    %v1407 = vsel %vm496, %v1326, 0
    %1409 = vmatprep.subr.mxu0 0.0
    %1410 = vmatpush1.msra.mxu0 0.0
    %1411 = vmatprep.subr.mxu0 0.0
    %1412 = vmatpush1.msra.mxu0 0.0
    %1413 = vmatprep.subr.mxu0 0.0
    %1414 = vmatpush1.msra.mxu0 0.0
    %1415 = vmatprep.subr.mxu0 0.0
    %1416 = vmatpush1.msra.mxu0 0.0
    %1417 = vmatprep.subr.mxu0 0.0
    %1418 = vmatpush1.msra.mxu0 0.0
    %1419 = vmatprep.subr.mxu0 0.0
    %1420 = vmatpush1.msra.mxu0 0.0
    %1421 = vmatprep.subr.mxu0 0.0
    %1422 = vmatpush1.msra.mxu0 0.0
    %1423 = vmatprep.subr.mxu0 0.0
    %1424 = vmatpush1.msra.mxu0 0.0
    %1425 = vmatprep.subr.mxu0 0.0
    %1426 = vmatpush1.msra.mxu0 0.0
    %1427 = vmatprep.subr.mxu0 0.0
    %1428 = vmatpush1.msra.mxu0 0.0
    %1429 = vmatprep.subr.mxu0 0.0
    %1430 = vmatpush1.msra.mxu0 0.0
    %1431 = vmatprep.subr.mxu0 0.0
    %1432 = vmatpush1.msra.mxu0 0.0
    %1433 = vmatprep.subr.mxu0 0.0
    %1434 = vmatpush1.msra.mxu0 0.0
    %1435 = vmatprep.subr.mxu0 0.0
    %1436 = vmatpush1.msra.mxu0 0.0
    %1437 = vmatprep.subr.mxu0 0.0
    %1438 = vmatpush1.msra.mxu0 0.0
    %1439 = vmatprep.subr.mxu0 0.0
    %1440 = vmatpush1.msra.mxu0 %v1404
    %1441 = vmatprep.subr.mxu0 0.0
    %1442 = vmatpush2.msra.mxu0 0.0
    %1443 = vmatprep.subr.mxu0 0.0
    %1444 = vmatpush2.msra.mxu0 0.0
    %1445 = vmatprep.subr.mxu0 0.0
    %1446 = vmatpush2.msra.mxu0 0.0
    %1447 = vmatprep.subr.mxu0 0.0
    %1448 = vmatpush2.msra.mxu0 0.0
    %1449 = vmatprep.subr.mxu0 0.0
    %1450 = vmatpush2.msra.mxu0 0.0
    %1451 = vmatprep.subr.mxu0 0.0
    %1452 = vmatpush2.msra.mxu0 0.0
    %1453 = vmatprep.subr.mxu0 0.0
    %1454 = vmatpush2.msra.mxu0 0.0
    %1455 = vmatprep.subr.mxu0 0.0
    %1456 = vmatpush2.msra.mxu0 0.0
    %1457 = vmatprep.subr.mxu0 0.0
    %1458 = vmatpush2.msra.mxu0 0.0
    %1459 = vmatprep.subr.mxu0 0.0
    %1460 = vmatpush2.msra.mxu0 0.0
    %1461 = vmatprep.subr.mxu0 0.0
    %1462 = vmatpush2.msra.mxu0 0.0
    %1463 = vmatprep.subr.mxu0 0.0
    %1464 = vmatpush2.msra.mxu0 0.0
    %1465 = vmatprep.subr.mxu0 0.0
    %1466 = vmatpush2.msra.mxu0 0.0
    %1467 = vmatprep.subr.mxu0 0.0
    %1468 = vmatpush2.msra.mxu0 0.0
    %1469 = vmatprep.subr.mxu0 0.0
    %1470 = vmatpush2.msra.mxu0 0.0
    %1471 = vmatprep.subr.mxu0 0.0
    %1472 = vmatpush2.msra.mxu0 0.0
    %1473 = vmatprep.mubr.f32.mxu0 0.0
    %1474 = vmatmul.mubr.f32.gmra.mxu0 %v1407
    %v1475 = vpop.f32.mrf.mxu0
    %v1476 = vadd.f32 0.0, %v1475
    %v1477 = vpop.f32.mrf.mxu0
    %1478 = vdwg.mxu0
    %1479 = vrot.lane.b32.xlu0 %v316, 104
    %v1480 = vpop.permute.xlu0 %1479
    %1481 = vrot.lane.b32.xlu0 %v402, 104
    %v1482 = vpop.permute.xlu0 %1481
    %v1483 = vsel %vm496, %v1480, 0
    %v1485 = vsel %vm496, %v1482, 0
    %1487 = vmatprep.subr.mxu0 0.0
    %1488 = vmatpush1.xpose.msra.mxu0 0.0
    %1489 = vmatprep.subr.mxu0 0.0
    %1490 = vmatpush1.xpose.msra.mxu0 0.0
    %1491 = vmatprep.subr.mxu0 0.0
    %1492 = vmatpush1.xpose.msra.mxu0 0.0
    %1493 = vmatprep.subr.mxu0 0.0
    %1494 = vmatpush1.xpose.msra.mxu0 0.0
    %1495 = vmatprep.subr.mxu0 0.0
    %1496 = vmatpush1.xpose.msra.mxu0 0.0
    %1497 = vmatprep.subr.mxu0 0.0
    %1498 = vmatpush1.xpose.msra.mxu0 0.0
    %1499 = vmatprep.subr.mxu0 0.0
    %1500 = vmatpush1.xpose.msra.mxu0 0.0
    %1501 = vmatprep.subr.mxu0 0.0
    %1502 = vmatpush1.xpose.msra.mxu0 0.0
    %1503 = vmatprep.subr.mxu0 0.0
    %1504 = vmatpush1.xpose.msra.mxu0 0.0
    %1505 = vmatprep.subr.mxu0 0.0
    %1506 = vmatpush1.xpose.msra.mxu0 0.0
    %1507 = vmatprep.subr.mxu0 0.0
    %1508 = vmatpush1.xpose.msra.mxu0 0.0
    %1509 = vmatprep.subr.mxu0 0.0
    %1510 = vmatpush1.xpose.msra.mxu0 0.0
    %1511 = vmatprep.subr.mxu0 0.0
    %1512 = vmatpush1.xpose.msra.mxu0 0.0
    %1513 = vmatprep.subr.mxu0 0.0
    %1514 = vmatpush1.xpose.msra.mxu0 0.0
    %1515 = vmatprep.subr.mxu0 0.0
    %1516 = vmatpush1.xpose.msra.mxu0 0.0
    %1517 = vmatprep.subr.mxu0 0.0
    %1518 = vmatpush1.xpose.msra.mxu0 %v1485
    %1519 = vmatprep.subr.mxu0 0.0
    %1520 = vmatpush2.xpose.msra.mxu0 0.0
    %1521 = vmatprep.subr.mxu0 0.0
    %1522 = vmatpush2.xpose.msra.mxu0 0.0
    %1523 = vmatprep.subr.mxu0 0.0
    %1524 = vmatpush2.xpose.msra.mxu0 0.0
    %1525 = vmatprep.subr.mxu0 0.0
    %1526 = vmatpush2.xpose.msra.mxu0 0.0
    %1527 = vmatprep.subr.mxu0 0.0
    %1528 = vmatpush2.xpose.msra.mxu0 0.0
    %1529 = vmatprep.subr.mxu0 0.0
    %1530 = vmatpush2.xpose.msra.mxu0 0.0
    %1531 = vmatprep.subr.mxu0 0.0
    %1532 = vmatpush2.xpose.msra.mxu0 0.0
    %1533 = vmatprep.subr.mxu0 0.0
    %1534 = vmatpush2.xpose.msra.mxu0 0.0
    %1535 = vmatprep.subr.mxu0 0.0
    %1536 = vmatpush2.xpose.msra.mxu0 0.0
    %1537 = vmatprep.subr.mxu0 0.0
    %1538 = vmatpush2.xpose.msra.mxu0 0.0
    %1539 = vmatprep.subr.mxu0 0.0
    %1540 = vmatpush2.xpose.msra.mxu0 0.0
    %1541 = vmatprep.subr.mxu0 0.0
    %1542 = vmatpush2.xpose.msra.mxu0 0.0
    %1543 = vmatprep.subr.mxu0 0.0
    %1544 = vmatpush2.xpose.msra.mxu0 0.0
    %1545 = vmatprep.subr.mxu0 0.0
    %1546 = vmatpush2.xpose.msra.mxu0 0.0
    %1547 = vmatprep.subr.mxu0 0.0
    %1548 = vmatpush2.xpose.msra.mxu0 0.0
    %1549 = vmatprep.subr.mxu0 0.0
    %1550 = vmatpush2.xpose.msra.mxu0 0.0
    %1551 = vmatprep.mubr.f32.mxu0 0.0
    %1552 = vmatmul.mubr.f32.gmra.mxu0 %v1483
    %v1553 = vpop.f32.mrf.mxu0
    %v1554 = vadd.f32 %v185, %v1553
    %v1555 = vpop.f32.mrf.mxu0
    %1556 = vdwg.mxu0
    %1557 = vrot.lane.b32.xlu0 %v321, 104
    %v1558 = vpop.permute.xlu0 %1557
    %1559 = vrot.lane.b32.xlu0 %v407, 104
    %v1560 = vpop.permute.xlu0 %1559
    %v1561 = vsel %vm496, %v1558, 0
    %v1563 = vsel %vm496, %v1560, 0
    %1565 = vmatprep.subr.mxu0 0.0
    %1566 = vmatpush1.xpose.msra.mxu0 0.0
    %1567 = vmatprep.subr.mxu0 0.0
    %1568 = vmatpush1.xpose.msra.mxu0 0.0
    %1569 = vmatprep.subr.mxu0 0.0
    %1570 = vmatpush1.xpose.msra.mxu0 0.0
    %1571 = vmatprep.subr.mxu0 0.0
    %1572 = vmatpush1.xpose.msra.mxu0 0.0
    %1573 = vmatprep.subr.mxu0 0.0
    %1574 = vmatpush1.xpose.msra.mxu0 0.0
    %1575 = vmatprep.subr.mxu0 0.0
    %1576 = vmatpush1.xpose.msra.mxu0 0.0
    %1577 = vmatprep.subr.mxu0 0.0
    %1578 = vmatpush1.xpose.msra.mxu0 0.0
    %1579 = vmatprep.subr.mxu0 0.0
    %1580 = vmatpush1.xpose.msra.mxu0 0.0
    %1581 = vmatprep.subr.mxu0 0.0
    %1582 = vmatpush1.xpose.msra.mxu0 0.0
    %1583 = vmatprep.subr.mxu0 0.0
    %1584 = vmatpush1.xpose.msra.mxu0 0.0
    %1585 = vmatprep.subr.mxu0 0.0
    %1586 = vmatpush1.xpose.msra.mxu0 0.0
    %1587 = vmatprep.subr.mxu0 0.0
    %1588 = vmatpush1.xpose.msra.mxu0 0.0
    %1589 = vmatprep.subr.mxu0 0.0
    %1590 = vmatpush1.xpose.msra.mxu0 0.0
    %1591 = vmatprep.subr.mxu0 0.0
    %1592 = vmatpush1.xpose.msra.mxu0 0.0
    %1593 = vmatprep.subr.mxu0 0.0
    %1594 = vmatpush1.xpose.msra.mxu0 0.0
    %1595 = vmatprep.subr.mxu0 0.0
    %1596 = vmatpush1.xpose.msra.mxu0 %v1563
    %1597 = vmatprep.subr.mxu0 0.0
    %1598 = vmatpush2.xpose.msra.mxu0 0.0
    %1599 = vmatprep.subr.mxu0 0.0
    %1600 = vmatpush2.xpose.msra.mxu0 0.0
    %1601 = vmatprep.subr.mxu0 0.0
    %1602 = vmatpush2.xpose.msra.mxu0 0.0
    %1603 = vmatprep.subr.mxu0 0.0
    %1604 = vmatpush2.xpose.msra.mxu0 0.0
    %1605 = vmatprep.subr.mxu0 0.0
    %1606 = vmatpush2.xpose.msra.mxu0 0.0
    %1607 = vmatprep.subr.mxu0 0.0
    %1608 = vmatpush2.xpose.msra.mxu0 0.0
    %1609 = vmatprep.subr.mxu0 0.0
    %1610 = vmatpush2.xpose.msra.mxu0 0.0
    %1611 = vmatprep.subr.mxu0 0.0
    %1612 = vmatpush2.xpose.msra.mxu0 0.0
    %1613 = vmatprep.subr.mxu0 0.0
    %1614 = vmatpush2.xpose.msra.mxu0 0.0
    %1615 = vmatprep.subr.mxu0 0.0
    %1616 = vmatpush2.xpose.msra.mxu0 0.0
    %1617 = vmatprep.subr.mxu0 0.0
    %1618 = vmatpush2.xpose.msra.mxu0 0.0
    %1619 = vmatprep.subr.mxu0 0.0
    %1620 = vmatpush2.xpose.msra.mxu0 0.0
    %1621 = vmatprep.subr.mxu0 0.0
    %1622 = vmatpush2.xpose.msra.mxu0 0.0
    %1623 = vmatprep.subr.mxu0 0.0
    %1624 = vmatpush2.xpose.msra.mxu0 0.0
    %1625 = vmatprep.subr.mxu0 0.0
    %1626 = vmatpush2.xpose.msra.mxu0 0.0
    %1627 = vmatprep.subr.mxu0 0.0
    %1628 = vmatpush2.xpose.msra.mxu0 0.0
    %1629 = vmatprep.mubr.f32.mxu0 0.0
    %1630 = vmatmul.mubr.f32.gmra.mxu0 %v1561
    %v1631 = vpop.f32.mrf.mxu0
    %v1632 = vadd.f32 %v185, %v1631
    %v1633 = vpop.f32.mrf.mxu0
    %1634 = vdwg.mxu0
    %v1635 = vsel %vm496, %v1554, -inf
    %1636 = vmax.xlane.f32.xlu0 %v1635
    %v1637 = vpop.xlane.xlu0 %1636
    %v1638 = vsel %vm496, %v1632, -inf
    %1639 = vmax.xlane.f32.xlu0 %v1638
    %v1640 = vpop.xlane.xlu0 %1639
    %v1641 = vsub.f32 %v1554, %v1637
    %v1642 = vsub.f32 %v1632, %v1640
    %v1643 = vmul.f32 %v1641, 1.442695
    %v1644 = vpow.pop %v1643
    %v1645 = vmul.f32 %v1642, 1.442695
    %v1646 = vpow.pop %v1645
    %v1647 = vsel %vm496, %v1644, 0.0
    %1648 = vadd.xlane.f32.xlu0 %v1647
    %v1649 = vpop.xlane.xlu0 %1648
    %v1650 = vsel %vm496, %v1646, 0.0
    %1651 = vadd.xlane.f32.xlu0 %v1650
    %v1652 = vpop.xlane.xlu0 %1651
    %v1653 = vrcp.pop %v1649
    %v1654 = vrcp.pop %v1652
    %v1655 = vmul.f32 %v1644, %v1653
    %v1656 = vmul.f32 %v1646, %v1654
    %1657 = vrot.lane.b32.xlu0 %v488, 104
    %v1658 = vpop.permute.xlu0 %1657
    %v1661 = vsel %vm496, %v1655, 0
    %1663 = vmatprep.subr.mxu0 0.0
    %1664 = vmatpush1.msra.mxu0 0.0
    %1665 = vmatprep.subr.mxu0 0.0
    %1666 = vmatpush1.msra.mxu0 0.0
    %1667 = vmatprep.subr.mxu0 0.0
    %1668 = vmatpush1.msra.mxu0 0.0
    %1669 = vmatprep.subr.mxu0 0.0
    %1670 = vmatpush1.msra.mxu0 0.0
    %1671 = vmatprep.subr.mxu0 0.0
    %1672 = vmatpush1.msra.mxu0 0.0
    %1673 = vmatprep.subr.mxu0 0.0
    %1674 = vmatpush1.msra.mxu0 0.0
    %1675 = vmatprep.subr.mxu0 0.0
    %1676 = vmatpush1.msra.mxu0 0.0
    %1677 = vmatprep.subr.mxu0 0.0
    %1678 = vmatpush1.msra.mxu0 0.0
    %1679 = vmatprep.subr.mxu0 0.0
    %1680 = vmatpush1.msra.mxu0 0.0
    %1681 = vmatprep.subr.mxu0 0.0
    %1682 = vmatpush1.msra.mxu0 0.0
    %1683 = vmatprep.subr.mxu0 0.0
    %1684 = vmatpush1.msra.mxu0 0.0
    %1685 = vmatprep.subr.mxu0 0.0
    %1686 = vmatpush1.msra.mxu0 0.0
    %1687 = vmatprep.subr.mxu0 0.0
    %1688 = vmatpush1.msra.mxu0 0.0
    %1689 = vmatprep.subr.mxu0 0.0
    %1690 = vmatpush1.msra.mxu0 0.0
    %1691 = vmatprep.subr.mxu0 0.0
    %1692 = vmatpush1.msra.mxu0 0.0
    %1693 = vmatprep.subr.mxu0 0.0
    %1694 = vmatpush1.msra.mxu0 %v1658
    %1695 = vmatprep.subr.mxu0 0.0
    %1696 = vmatpush2.msra.mxu0 0.0
    %1697 = vmatprep.subr.mxu0 0.0
    %1698 = vmatpush2.msra.mxu0 0.0
    %1699 = vmatprep.subr.mxu0 0.0
    %1700 = vmatpush2.msra.mxu0 0.0
    %1701 = vmatprep.subr.mxu0 0.0
    %1702 = vmatpush2.msra.mxu0 0.0
    %1703 = vmatprep.subr.mxu0 0.0
    %1704 = vmatpush2.msra.mxu0 0.0
    %1705 = vmatprep.subr.mxu0 0.0
    %1706 = vmatpush2.msra.mxu0 0.0
    %1707 = vmatprep.subr.mxu0 0.0
    %1708 = vmatpush2.msra.mxu0 0.0
    %1709 = vmatprep.subr.mxu0 0.0
    %1710 = vmatpush2.msra.mxu0 0.0
    %1711 = vmatprep.subr.mxu0 0.0
    %1712 = vmatpush2.msra.mxu0 0.0
    %1713 = vmatprep.subr.mxu0 0.0
    %1714 = vmatpush2.msra.mxu0 0.0
    %1715 = vmatprep.subr.mxu0 0.0
    %1716 = vmatpush2.msra.mxu0 0.0
    %1717 = vmatprep.subr.mxu0 0.0
    %1718 = vmatpush2.msra.mxu0 0.0
    %1719 = vmatprep.subr.mxu0 0.0
    %1720 = vmatpush2.msra.mxu0 0.0
    %1721 = vmatprep.subr.mxu0 0.0
    %1722 = vmatpush2.msra.mxu0 0.0
    %1723 = vmatprep.subr.mxu0 0.0
    %1724 = vmatpush2.msra.mxu0 0.0
    %1725 = vmatprep.subr.mxu0 0.0
    %1726 = vmatpush2.msra.mxu0 0.0
    %1727 = vmatprep.mubr.f32.mxu0 0.0
    %1728 = vmatmul.mubr.f32.gmra.mxu0 %v1661
    %v1729 = vpop.f32.mrf.mxu0
    %v1730 = vadd.f32 0.0, %v1729
    %v1731 = vpop.f32.mrf.mxu0
    %1732 = vdwg.mxu0
    %1733 = vrot.lane.b32.xlu0 %v493, 104
    %v1734 = vpop.permute.xlu0 %1733
    %v1737 = vsel %vm496, %v1656, 0
    %1739 = vmatprep.subr.mxu0 0.0
    %1740 = vmatpush1.msra.mxu0 0.0
    %1741 = vmatprep.subr.mxu0 0.0
    %1742 = vmatpush1.msra.mxu0 0.0
    %1743 = vmatprep.subr.mxu0 0.0
    %1744 = vmatpush1.msra.mxu0 0.0
    %1745 = vmatprep.subr.mxu0 0.0
    %1746 = vmatpush1.msra.mxu0 0.0
    %1747 = vmatprep.subr.mxu0 0.0
    %1748 = vmatpush1.msra.mxu0 0.0
    %1749 = vmatprep.subr.mxu0 0.0
    %1750 = vmatpush1.msra.mxu0 0.0
    %1751 = vmatprep.subr.mxu0 0.0
    %1752 = vmatpush1.msra.mxu0 0.0
    %1753 = vmatprep.subr.mxu0 0.0
    %1754 = vmatpush1.msra.mxu0 0.0
    %1755 = vmatprep.subr.mxu0 0.0
    %1756 = vmatpush1.msra.mxu0 0.0
    %1757 = vmatprep.subr.mxu0 0.0
    %1758 = vmatpush1.msra.mxu0 0.0
    %1759 = vmatprep.subr.mxu0 0.0
    %1760 = vmatpush1.msra.mxu0 0.0
    %1761 = vmatprep.subr.mxu0 0.0
    %1762 = vmatpush1.msra.mxu0 0.0
    %1763 = vmatprep.subr.mxu0 0.0
    %1764 = vmatpush1.msra.mxu0 0.0
    %1765 = vmatprep.subr.mxu0 0.0
    %1766 = vmatpush1.msra.mxu0 0.0
    %1767 = vmatprep.subr.mxu0 0.0
    %1768 = vmatpush1.msra.mxu0 0.0
    %1769 = vmatprep.subr.mxu0 0.0
    %1770 = vmatpush1.msra.mxu0 %v1734
    %1771 = vmatprep.subr.mxu0 0.0
    %1772 = vmatpush2.msra.mxu0 0.0
    %1773 = vmatprep.subr.mxu0 0.0
    %1774 = vmatpush2.msra.mxu0 0.0
    %1775 = vmatprep.subr.mxu0 0.0
    %1776 = vmatpush2.msra.mxu0 0.0
    %1777 = vmatprep.subr.mxu0 0.0
    %1778 = vmatpush2.msra.mxu0 0.0
    %1779 = vmatprep.subr.mxu0 0.0
    %1780 = vmatpush2.msra.mxu0 0.0
    %1781 = vmatprep.subr.mxu0 0.0
    %1782 = vmatpush2.msra.mxu0 0.0
    %1783 = vmatprep.subr.mxu0 0.0
    %1784 = vmatpush2.msra.mxu0 0.0
    %1785 = vmatprep.subr.mxu0 0.0
    %1786 = vmatpush2.msra.mxu0 0.0
    %1787 = vmatprep.subr.mxu0 0.0
    %1788 = vmatpush2.msra.mxu0 0.0
    %1789 = vmatprep.subr.mxu0 0.0
    %1790 = vmatpush2.msra.mxu0 0.0
    %1791 = vmatprep.subr.mxu0 0.0
    %1792 = vmatpush2.msra.mxu0 0.0
    %1793 = vmatprep.subr.mxu0 0.0
    %1794 = vmatpush2.msra.mxu0 0.0
    %1795 = vmatprep.subr.mxu0 0.0
    %1796 = vmatpush2.msra.mxu0 0.0
    %1797 = vmatprep.subr.mxu0 0.0
    %1798 = vmatpush2.msra.mxu0 0.0
    %1799 = vmatprep.subr.mxu0 0.0
    %1800 = vmatpush2.msra.mxu0 0.0
    %1801 = vmatprep.subr.mxu0 0.0
    %1802 = vmatpush2.msra.mxu0 0.0
    %1803 = vmatprep.mubr.f32.mxu0 0.0
    %1804 = vmatmul.mubr.f32.gmra.mxu0 %v1737
    %v1805 = vpop.f32.mrf.mxu0
    %v1806 = vadd.f32 0.0, %v1805
    %v1807 = vpop.f32.mrf.mxu0
    %1808 = vdwg.mxu0
    %1811 = vrot.lane.b32.xlu0 %v1069, 8
    %v1812 = vpop.permute.xlu0 %1811
    %1813 = vrot.lane.b32.xlu0 %v1146, 8
    %v1814 = vpop.permute.xlu0 %1813
    %1819 = vrot.lane.b32.xlu0 %v1400, 16
    %v1820 = vpop.permute.xlu0 %1819
    %1821 = vrot.lane.b32.xlu0 %v1476, 16
    %v1822 = vpop.permute.xlu0 %1821
    %1827 = vrot.lane.b32.xlu0 %v1730, 24
    %v1828 = vpop.permute.xlu0 %1827
    %1829 = vrot.lane.b32.xlu0 %v1806, 24
    %v1830 = vpop.permute.xlu0 %1829
    %v1833 = vsel %vm496, %v741, %v1812
    %v1834 = vsel %vm496, %v814, %v1814
    %vm1835 = vcmask 130048
    %v1836 = vsel %vm1835, %v1833, %v1820
    %v1837 = vsel %vm1835, %v1834, %v1822
    %vm1838 = vcmask 195584
    %v1839 = vsel %vm1838, %v1836, %v1828
    %v1840 = vsel %vm1838, %v1837, %v1830
    %v1841 = vld [vmem:[%s11] sm:$0xff]
    %v1842 = vld [vmem:[%s11 + $0x8] sm:$0xff]
    %v1843 = vld [vmem:[%s11 + $0x10] sm:$0xff]
    %v1844 = vld [vmem:[%s11 + $0x18] sm:$0xff]
    %v1845 = vld [vmem:[%s12] sm:$0x1]
    %v1847 = vlaneseq
    %v1848 = vshrl.u32 %v1847, 7
    %v1849 = vsub.s32 0, %v1848
    %v1850 = vrot.slane %v1845, %v1849
    %v1853 = vsel %vm188, %v1839, 0
    %v1856 = vsel %vm188, %v1840, 0
    %1858 = vmatprep.subr.mxu0 0.0
    %1859 = vmatpush1.msra.mxu0 0.0
    %1860 = vmatprep.subr.mxu0 0.0
    %1861 = vmatpush1.msra.mxu0 0.0
    %1862 = vmatprep.subr.mxu0 0.0
    %1863 = vmatpush1.msra.mxu0 0.0
    %1864 = vmatprep.subr.mxu0 0.0
    %1865 = vmatpush1.msra.mxu0 0.0
    %1866 = vmatprep.subr.mxu0 0.0
    %1867 = vmatpush1.msra.mxu0 0.0
    %1868 = vmatprep.subr.mxu0 0.0
    %1869 = vmatpush1.msra.mxu0 0.0
    %1870 = vmatprep.subr.mxu0 0.0
    %1871 = vmatpush1.msra.mxu0 0.0
    %1872 = vmatprep.subr.mxu0 0.0
    %1873 = vmatpush1.msra.mxu0 0.0
    %1874 = vmatprep.subr.mxu0 0.0
    %1875 = vmatpush1.msra.mxu0 0.0
    %1876 = vmatprep.subr.mxu0 0.0
    %1877 = vmatpush1.msra.mxu0 0.0
    %1878 = vmatprep.subr.mxu0 0.0
    %1879 = vmatpush1.msra.mxu0 0.0
    %1880 = vmatprep.subr.mxu0 0.0
    %1881 = vmatpush1.msra.mxu0 0.0
    %1882 = vmatprep.subr.mxu0 0.0
    %1883 = vmatpush1.msra.mxu0 %v1844
    %1884 = vmatprep.subr.mxu0 0.0
    %1885 = vmatpush1.msra.mxu0 %v1843
    %1886 = vmatprep.subr.mxu0 0.0
    %1887 = vmatpush1.msra.mxu0 %v1842
    %1888 = vmatprep.subr.mxu0 0.0
    %1889 = vmatpush1.msra.mxu0 %v1841
    %1890 = vmatprep.subr.mxu0 0.0
    %1891 = vmatpush2.msra.mxu0 0.0
    %1892 = vmatprep.subr.mxu0 0.0
    %1893 = vmatpush2.msra.mxu0 0.0
    %1894 = vmatprep.subr.mxu0 0.0
    %1895 = vmatpush2.msra.mxu0 0.0
    %1896 = vmatprep.subr.mxu0 0.0
    %1897 = vmatpush2.msra.mxu0 0.0
    %1898 = vmatprep.subr.mxu0 0.0
    %1899 = vmatpush2.msra.mxu0 0.0
    %1900 = vmatprep.subr.mxu0 0.0
    %1901 = vmatpush2.msra.mxu0 0.0
    %1902 = vmatprep.subr.mxu0 0.0
    %1903 = vmatpush2.msra.mxu0 0.0
    %1904 = vmatprep.subr.mxu0 0.0
    %1905 = vmatpush2.msra.mxu0 0.0
    %1906 = vmatprep.subr.mxu0 0.0
    %1907 = vmatpush2.msra.mxu0 0.0
    %1908 = vmatprep.subr.mxu0 0.0
    %1909 = vmatpush2.msra.mxu0 0.0
    %1910 = vmatprep.subr.mxu0 0.0
    %1911 = vmatpush2.msra.mxu0 0.0
    %1912 = vmatprep.subr.mxu0 0.0
    %1913 = vmatpush2.msra.mxu0 0.0
    %1914 = vmatprep.subr.mxu0 0.0
    %1915 = vmatpush2.msra.mxu0 0.0
    %1916 = vmatprep.subr.mxu0 0.0
    %1917 = vmatpush2.msra.mxu0 0.0
    %1918 = vmatprep.subr.mxu0 0.0
    %1919 = vmatpush2.msra.mxu0 0.0
    %1920 = vmatprep.subr.mxu0 0.0
    %1921 = vmatpush2.msra.mxu0 0.0
    %1922 = vmatprep.mubr.f32.mxu0 0.0
    %1923 = vmatmul.mubr.f32.gmra.mxu0 %v1853
    %v1924 = vpop.f32.mrf.mxu0
    %v1925 = vadd.f32 %v1850, %v1924
    %v1926 = vpop.f32.mrf.mxu0
    %1927 = vmatprep.mubr.f32.mxu0 0.0
    %1928 = vmatmul.mubr.f32.gmra.mxu0 %v1856
    %v1929 = vpop.f32.mrf.mxu0
    %v1930 = vadd.f32 %v1850, %v1929
    %v1931 = vpop.f32.mrf.mxu0
    %1932 = vdwg.mxu0
    %v1933 = vadd.f32 %v174, %v1925
    %v1934 = vadd.f32 %v179, %v1930
    %v1935 = vld [vmem:[%s13] sm:$0x1]
    %v1936 = vld [vmem:[%s14] sm:$0x1]
    %v1937 = vsel %vm188, %v1933, 0.0
    %1938 = vadd.xlane.f32.xlu0 %v1937
    %v1939 = vpop.xlane.xlu0 %1938
    %v1940 = vsel %vm188, %v1934, 0.0
    %1941 = vadd.xlane.f32.xlu0 %v1940
    %v1942 = vpop.xlane.xlu0 %1941
    %v1943 = vmul.f32 %v1939, %v195
    %v1944 = vmul.f32 %v1942, %v195
    %v1945 = vsub.f32 %v1933, %v1943
    %v1946 = vsub.f32 %v1934, %v1944
    %v1947 = vmul.f32 %v1945, %v1945
    %v1948 = vmul.f32 %v1946, %v1946
    %v1949 = vsel %vm188, %v1947, 0.0
    %1950 = vadd.xlane.f32.xlu0 %v1949
    %v1951 = vpop.xlane.xlu0 %1950
    %v1952 = vsel %vm188, %v1948, 0.0
    %1953 = vadd.xlane.f32.xlu0 %v1952
    %v1954 = vpop.xlane.xlu0 %1953
    %v1955 = vmul.f32 %v1951, %v195
    %v1956 = vmul.f32 %v1954, %v195
    %v1957 = vadd.f32 %v1955, 1e-05
    %v1958 = vadd.f32 %v1956, 1e-05
    %v1959 = vrsqrt.pop %v1957
    %v1960 = vrsqrt.pop %v1958
    %v1961 = vmul.f32 %v1945, %v1959
    %v1962 = vmul.f32 %v1946, %v1960
    %v1964 = vlaneseq
    %v1965 = vshrl.u32 %v1964, 7
    %v1966 = vsub.s32 0, %v1965
    %v1967 = vrot.slane %v1935, %v1966
    %v1969 = vmul.f32 %v1961, %v1967
    %v1970 = vmul.f32 %v1962, %v1967
    %v1972 = vlaneseq
    %v1973 = vshrl.u32 %v1972, 7
    %v1974 = vsub.s32 0, %v1973
    %v1975 = vrot.slane %v1936, %v1974
    %v1977 = vadd.f32 %v1969, %v1975
    %v1978 = vadd.f32 %v1970, %v1975
    %v1979 = vld [vmem:[%s15] sm:$0xff]
    %v1980 = vld [vmem:[%s15 + $0x8] sm:$0xff]
    %v1981 = vld [vmem:[%s15 + $0x10] sm:$0xff]
    %v1982 = vld [vmem:[%s15 + $0x18] sm:$0xff]
    %v1983 = vld [vmem:[%s16] sm:$0x1]
    %v1985 = vlaneseq
    %v1986 = vshrl.u32 %v1985, 7
    %v1987 = vsub.s32 0, %v1986
    %v1988 = vrot.slane %v1983, %v1987
    %v1991 = vsel %vm188, %v1977, 0
    %v1994 = vsel %vm188, %v1978, 0
    %1996 = vmatprep.subr.mxu0 0.0
    %1997 = vmatpush1.msra.mxu0 0.0
    %1998 = vmatprep.subr.mxu0 0.0
    %1999 = vmatpush1.msra.mxu0 0.0
    %2000 = vmatprep.subr.mxu0 0.0
    %2001 = vmatpush1.msra.mxu0 0.0
    %2002 = vmatprep.subr.mxu0 0.0
    %2003 = vmatpush1.msra.mxu0 0.0
    %2004 = vmatprep.subr.mxu0 0.0
    %2005 = vmatpush1.msra.mxu0 0.0
    %2006 = vmatprep.subr.mxu0 0.0
    %2007 = vmatpush1.msra.mxu0 0.0
    %2008 = vmatprep.subr.mxu0 0.0
    %2009 = vmatpush1.msra.mxu0 0.0
    %2010 = vmatprep.subr.mxu0 0.0
    %2011 = vmatpush1.msra.mxu0 0.0
    %2012 = vmatprep.subr.mxu0 0.0
    %2013 = vmatpush1.msra.mxu0 0.0
    %2014 = vmatprep.subr.mxu0 0.0
    %2015 = vmatpush1.msra.mxu0 0.0
    %2016 = vmatprep.subr.mxu0 0.0
    %2017 = vmatpush1.msra.mxu0 0.0
    %2018 = vmatprep.subr.mxu0 0.0
    %2019 = vmatpush1.msra.mxu0 0.0
    %2020 = vmatprep.subr.mxu0 0.0
    %2021 = vmatpush1.msra.mxu0 %v1982
    %2022 = vmatprep.subr.mxu0 0.0
    %2023 = vmatpush1.msra.mxu0 %v1981
    %2024 = vmatprep.subr.mxu0 0.0
    %2025 = vmatpush1.msra.mxu0 %v1980
    %2026 = vmatprep.subr.mxu0 0.0
    %2027 = vmatpush1.msra.mxu0 %v1979
    %2028 = vmatprep.subr.mxu0 0.0
    %2029 = vmatpush2.msra.mxu0 0.0
    %2030 = vmatprep.subr.mxu0 0.0
    %2031 = vmatpush2.msra.mxu0 0.0
    %2032 = vmatprep.subr.mxu0 0.0
    %2033 = vmatpush2.msra.mxu0 0.0
    %2034 = vmatprep.subr.mxu0 0.0
    %2035 = vmatpush2.msra.mxu0 0.0
    %2036 = vmatprep.subr.mxu0 0.0
    %2037 = vmatpush2.msra.mxu0 0.0
    %2038 = vmatprep.subr.mxu0 0.0
    %2039 = vmatpush2.msra.mxu0 0.0
    %2040 = vmatprep.subr.mxu0 0.0
    %2041 = vmatpush2.msra.mxu0 0.0
    %2042 = vmatprep.subr.mxu0 0.0
    %2043 = vmatpush2.msra.mxu0 0.0
    %2044 = vmatprep.subr.mxu0 0.0
    %2045 = vmatpush2.msra.mxu0 0.0
    %2046 = vmatprep.subr.mxu0 0.0
    %2047 = vmatpush2.msra.mxu0 0.0
    %2048 = vmatprep.subr.mxu0 0.0
    %2049 = vmatpush2.msra.mxu0 0.0
    %2050 = vmatprep.subr.mxu0 0.0
    %2051 = vmatpush2.msra.mxu0 0.0
    %2052 = vmatprep.subr.mxu0 0.0
    %2053 = vmatpush2.msra.mxu0 0.0
    %2054 = vmatprep.subr.mxu0 0.0
    %2055 = vmatpush2.msra.mxu0 0.0
    %2056 = vmatprep.subr.mxu0 0.0
    %2057 = vmatpush2.msra.mxu0 0.0
    %2058 = vmatprep.subr.mxu0 0.0
    %2059 = vmatpush2.msra.mxu0 0.0
    %2060 = vmatprep.mubr.f32.mxu0 0.0
    %2061 = vmatmul.mubr.f32.gmra.mxu0 %v1991
    %v2062 = vpop.f32.mrf.mxu0
    %v2063 = vadd.f32 %v1988, %v2062
    %v2064 = vpop.f32.mrf.mxu0
    %2065 = vmatprep.mubr.f32.mxu0 0.0
    %2066 = vmatmul.mubr.f32.gmra.mxu0 %v1994
    %v2067 = vpop.f32.mrf.mxu0
    %v2068 = vadd.f32 %v1988, %v2067
    %v2069 = vpop.f32.mrf.mxu0
    %2070 = vdwg.mxu0
    %v2071 = vmul.f32 %v2063, 0.5
    %v2072 = vmul.f32 %v2068, 0.5
    %v2073 = vmul.f32 %v2063, %v2063
    %v2074 = vmul.f32 %v2068, %v2068
    %v2075 = vmul.f32 %v2063, %v2073
    %v2076 = vmul.f32 %v2068, %v2074
    %v2077 = vmul.f32 %v2075, 0.044715
    %v2078 = vmul.f32 %v2076, 0.044715
    %v2079 = vadd.f32 %v2063, %v2077
    %v2080 = vadd.f32 %v2068, %v2078
    %v2081 = vmul.f32 %v2079, 0.7978846
    %v2082 = vmul.f32 %v2080, 0.7978846
    %v2083 = vtanh.pop %v2081
    %v2084 = vtanh.pop %v2082
    %v2085 = vadd.f32 %v2083, 1.0
    %v2086 = vadd.f32 %v2084, 1.0
    %v2087 = vmul.f32 %v2071, %v2085
    %v2088 = vmul.f32 %v2072, %v2086
    %v2089 = vld [vmem:[%s17] sm:$0xff]
    %v2090 = vld [vmem:[%s17 + $0x8] sm:$0xff]
    %v2091 = vld [vmem:[%s17 + $0x10] sm:$0xff]
    %v2092 = vld [vmem:[%s17 + $0x18] sm:$0xff]
    %v2093 = vld [vmem:[%s17 + $0x20] sm:$0xff]
    %v2094 = vld [vmem:[%s17 + $0x28] sm:$0xff]
    %v2095 = vld [vmem:[%s17 + $0x30] sm:$0xff]
    %v2096 = vld [vmem:[%s17 + $0x38] sm:$0xff]
    %v2097 = vld [vmem:[%s18] sm:$0x1]
    %v2099 = vlaneseq
    %v2100 = vshrl.u32 %v2099, 7
    %v2101 = vsub.s32 0, %v2100
    %v2102 = vrot.slane %v2097, %v2101
    %vm2104 = vcmask 523264
    %v2106 = vsel %vm2104, %v2087, 0
    %v2109 = vsel %vm2104, %v2088, 0
    %2111 = vmatprep.subr.mxu0 0.0
    %2112 = vmatpush1.msra.mxu0 0.0
    %2113 = vmatprep.subr.mxu0 0.0
    %2114 = vmatpush1.msra.mxu0 0.0
    %2115 = vmatprep.subr.mxu0 0.0
    %2116 = vmatpush1.msra.mxu0 0.0
    %2117 = vmatprep.subr.mxu0 0.0
    %2118 = vmatpush1.msra.mxu0 0.0
    %2119 = vmatprep.subr.mxu0 0.0
    %2120 = vmatpush1.msra.mxu0 0.0
    %2121 = vmatprep.subr.mxu0 0.0
    %2122 = vmatpush1.msra.mxu0 0.0
    %2123 = vmatprep.subr.mxu0 0.0
    %2124 = vmatpush1.msra.mxu0 0.0
    %2125 = vmatprep.subr.mxu0 0.0
    %2126 = vmatpush1.msra.mxu0 0.0
    %2127 = vmatprep.subr.mxu0 0.0
    %2128 = vmatpush1.msra.mxu0 %v2096
    %2129 = vmatprep.subr.mxu0 0.0
    %2130 = vmatpush1.msra.mxu0 %v2095
    %2131 = vmatprep.subr.mxu0 0.0
    %2132 = vmatpush1.msra.mxu0 %v2094
    %2133 = vmatprep.subr.mxu0 0.0
    %2134 = vmatpush1.msra.mxu0 %v2093
    %2135 = vmatprep.subr.mxu0 0.0
    %2136 = vmatpush1.msra.mxu0 %v2092
    %2137 = vmatprep.subr.mxu0 0.0
    %2138 = vmatpush1.msra.mxu0 %v2091
    %2139 = vmatprep.subr.mxu0 0.0
    %2140 = vmatpush1.msra.mxu0 %v2090
    %2141 = vmatprep.subr.mxu0 0.0
    %2142 = vmatpush1.msra.mxu0 %v2089
    %2143 = vmatprep.subr.mxu0 0.0
    %2144 = vmatpush2.msra.mxu0 0.0
    %2145 = vmatprep.subr.mxu0 0.0
    %2146 = vmatpush2.msra.mxu0 0.0
    %2147 = vmatprep.subr.mxu0 0.0
    %2148 = vmatpush2.msra.mxu0 0.0
    %2149 = vmatprep.subr.mxu0 0.0
    %2150 = vmatpush2.msra.mxu0 0.0
    %2151 = vmatprep.subr.mxu0 0.0
    %2152 = vmatpush2.msra.mxu0 0.0
    %2153 = vmatprep.subr.mxu0 0.0
    %2154 = vmatpush2.msra.mxu0 0.0
    %2155 = vmatprep.subr.mxu0 0.0
    %2156 = vmatpush2.msra.mxu0 0.0
    %2157 = vmatprep.subr.mxu0 0.0
    %2158 = vmatpush2.msra.mxu0 0.0
    %2159 = vmatprep.subr.mxu0 0.0
    %2160 = vmatpush2.msra.mxu0 0.0
    %2161 = vmatprep.subr.mxu0 0.0
    %2162 = vmatpush2.msra.mxu0 0.0
    %2163 = vmatprep.subr.mxu0 0.0
    %2164 = vmatpush2.msra.mxu0 0.0
    %2165 = vmatprep.subr.mxu0 0.0
    %2166 = vmatpush2.msra.mxu0 0.0
    %2167 = vmatprep.subr.mxu0 0.0
    %2168 = vmatpush2.msra.mxu0 0.0
    %2169 = vmatprep.subr.mxu0 0.0
    %2170 = vmatpush2.msra.mxu0 0.0
    %2171 = vmatprep.subr.mxu0 0.0
    %2172 = vmatpush2.msra.mxu0 0.0
    %2173 = vmatprep.subr.mxu0 0.0
    %2174 = vmatpush2.msra.mxu0 0.0
    %2175 = vmatprep.mubr.f32.mxu0 0.0
    %2176 = vmatmul.mubr.f32.gmra.mxu0 %v2106
    %v2177 = vpop.f32.mrf.mxu0
    %v2178 = vadd.f32 %v2102, %v2177
    %v2179 = vpop.f32.mrf.mxu0
    %2180 = vmatprep.mubr.f32.mxu0 0.0
    %2181 = vmatmul.mubr.f32.gmra.mxu0 %v2109
    %v2182 = vpop.f32.mrf.mxu0
    %v2183 = vadd.f32 %v2102, %v2182
    %v2184 = vpop.f32.mrf.mxu0
    %2185 = vdwg.mxu0
    %v2186 = vadd.f32 %v1933, %v2178
    %v2187 = vadd.f32 %v1934, %v2183
    %s2188 = scalar_lea.vmem %s3, 1
    %v2189 = vld [vmem:[%s2188] sm:$0x1]
    %s2190 = scalar_lea.vmem %s4, 1
    %v2191 = vld [vmem:[%s2190] sm:$0x1]
    %v2192 = vsel %vm188, %v2186, 0.0
    %2193 = vadd.xlane.f32.xlu0 %v2192
    %v2194 = vpop.xlane.xlu0 %2193
    %v2195 = vsel %vm188, %v2187, 0.0
    %2196 = vadd.xlane.f32.xlu0 %v2195
    %v2197 = vpop.xlane.xlu0 %2196
    %v2198 = vmul.f32 %v2194, %v195
    %v2199 = vmul.f32 %v2197, %v195
    %v2200 = vsub.f32 %v2186, %v2198
    %v2201 = vsub.f32 %v2187, %v2199
    %v2202 = vmul.f32 %v2200, %v2200
    %v2203 = vmul.f32 %v2201, %v2201
    %v2204 = vsel %vm188, %v2202, 0.0
    %2205 = vadd.xlane.f32.xlu0 %v2204
    %v2206 = vpop.xlane.xlu0 %2205
    %v2207 = vsel %vm188, %v2203, 0.0
    %2208 = vadd.xlane.f32.xlu0 %v2207
    %v2209 = vpop.xlane.xlu0 %2208
    %v2210 = vmul.f32 %v2206, %v195
    %v2211 = vmul.f32 %v2209, %v195
    %v2212 = vadd.f32 %v2210, 1e-05
    %v2213 = vadd.f32 %v2211, 1e-05
    %v2214 = vrsqrt.pop %v2212
    %v2215 = vrsqrt.pop %v2213
    %v2216 = vmul.f32 %v2200, %v2214
    %v2217 = vmul.f32 %v2201, %v2215
    %v2219 = vlaneseq
    %v2220 = vshrl.u32 %v2219, 7
    %v2221 = vsub.s32 0, %v2220
    %v2222 = vrot.slane %v2189, %v2221
    %v2224 = vmul.f32 %v2216, %v2222
    %v2225 = vmul.f32 %v2217, %v2222
    %v2227 = vlaneseq
    %v2228 = vshrl.u32 %v2227, 7
    %v2229 = vsub.s32 0, %v2228
    %v2230 = vrot.slane %v2191, %v2229
    %v2232 = vadd.f32 %v2224, %v2230
    %v2233 = vadd.f32 %v2225, %v2230
    %s2234 = scalar_lea.vmem %s5, 32
    %v2235 = vld [vmem:[%s2234] sm:$0xff]
    %v2236 = vld [vmem:[%s2234 + $0x8] sm:$0xff]
    %v2237 = vld [vmem:[%s2234 + $0x10] sm:$0xff]
    %v2238 = vld [vmem:[%s2234 + $0x18] sm:$0xff]
    %s2239 = scalar_lea.vmem %s6, 1
    %v2240 = vld [vmem:[%s2239] sm:$0x1]
    %v2242 = vlaneseq
    %v2243 = vshrl.u32 %v2242, 7
    %v2244 = vsub.s32 0, %v2243
    %v2245 = vrot.slane %v2240, %v2244
    %v2248 = vsel %vm188, %v2232, 0
    %v2251 = vsel %vm188, %v2233, 0
    %2253 = vmatprep.subr.mxu0 0.0
    %2254 = vmatpush1.msra.mxu0 0.0
    %2255 = vmatprep.subr.mxu0 0.0
    %2256 = vmatpush1.msra.mxu0 0.0
    %2257 = vmatprep.subr.mxu0 0.0
    %2258 = vmatpush1.msra.mxu0 0.0
    %2259 = vmatprep.subr.mxu0 0.0
    %2260 = vmatpush1.msra.mxu0 0.0
    %2261 = vmatprep.subr.mxu0 0.0
    %2262 = vmatpush1.msra.mxu0 0.0
    %2263 = vmatprep.subr.mxu0 0.0
    %2264 = vmatpush1.msra.mxu0 0.0
    %2265 = vmatprep.subr.mxu0 0.0
    %2266 = vmatpush1.msra.mxu0 0.0
    %2267 = vmatprep.subr.mxu0 0.0
    %2268 = vmatpush1.msra.mxu0 0.0
    %2269 = vmatprep.subr.mxu0 0.0
    %2270 = vmatpush1.msra.mxu0 0.0
    %2271 = vmatprep.subr.mxu0 0.0
    %2272 = vmatpush1.msra.mxu0 0.0
    %2273 = vmatprep.subr.mxu0 0.0
    %2274 = vmatpush1.msra.mxu0 0.0
    %2275 = vmatprep.subr.mxu0 0.0
    %2276 = vmatpush1.msra.mxu0 0.0
    %2277 = vmatprep.subr.mxu0 0.0
    %2278 = vmatpush1.msra.mxu0 %v2238
    %2279 = vmatprep.subr.mxu0 0.0
    %2280 = vmatpush1.msra.mxu0 %v2237
    %2281 = vmatprep.subr.mxu0 0.0
    %2282 = vmatpush1.msra.mxu0 %v2236
    %2283 = vmatprep.subr.mxu0 0.0
    %2284 = vmatpush1.msra.mxu0 %v2235
    %2285 = vmatprep.subr.mxu0 0.0
    %2286 = vmatpush2.msra.mxu0 0.0
    %2287 = vmatprep.subr.mxu0 0.0
    %2288 = vmatpush2.msra.mxu0 0.0
    %2289 = vmatprep.subr.mxu0 0.0
    %2290 = vmatpush2.msra.mxu0 0.0
    %2291 = vmatprep.subr.mxu0 0.0
    %2292 = vmatpush2.msra.mxu0 0.0
    %2293 = vmatprep.subr.mxu0 0.0
    %2294 = vmatpush2.msra.mxu0 0.0
    %2295 = vmatprep.subr.mxu0 0.0
    %2296 = vmatpush2.msra.mxu0 0.0
    %2297 = vmatprep.subr.mxu0 0.0
    %2298 = vmatpush2.msra.mxu0 0.0
    %2299 = vmatprep.subr.mxu0 0.0
    %2300 = vmatpush2.msra.mxu0 0.0
    %2301 = vmatprep.subr.mxu0 0.0
    %2302 = vmatpush2.msra.mxu0 0.0
    %2303 = vmatprep.subr.mxu0 0.0
    %2304 = vmatpush2.msra.mxu0 0.0
    %2305 = vmatprep.subr.mxu0 0.0
    %2306 = vmatpush2.msra.mxu0 0.0
    %2307 = vmatprep.subr.mxu0 0.0
    %2308 = vmatpush2.msra.mxu0 0.0
    %2309 = vmatprep.subr.mxu0 0.0
    %2310 = vmatpush2.msra.mxu0 0.0
    %2311 = vmatprep.subr.mxu0 0.0
    %2312 = vmatpush2.msra.mxu0 0.0
    %2313 = vmatprep.subr.mxu0 0.0
    %2314 = vmatpush2.msra.mxu0 0.0
    %2315 = vmatprep.subr.mxu0 0.0
    %2316 = vmatpush2.msra.mxu0 0.0
    %2317 = vmatprep.mubr.f32.mxu0 0.0
    %2318 = vmatmul.mubr.f32.gmra.mxu0 %v2248
    %v2319 = vpop.f32.mrf.mxu0
    %v2320 = vadd.f32 %v2245, %v2319
    %v2321 = vpop.f32.mrf.mxu0
    %2322 = vmatprep.mubr.f32.mxu0 0.0
    %2323 = vmatmul.mubr.f32.gmra.mxu0 %v2251
    %v2324 = vpop.f32.mrf.mxu0
    %v2325 = vadd.f32 %v2245, %v2324
    %v2326 = vpop.f32.mrf.mxu0
    %2327 = vdwg.mxu0
    %s2328 = scalar_lea.vmem %s7, 32
    %v2329 = vld [vmem:[%s2328] sm:$0xff]
    %v2330 = vld [vmem:[%s2328 + $0x8] sm:$0xff]
    %v2331 = vld [vmem:[%s2328 + $0x10] sm:$0xff]
    %v2332 = vld [vmem:[%s2328 + $0x18] sm:$0xff]
    %s2333 = scalar_lea.vmem %s8, 1
    %v2334 = vld [vmem:[%s2333] sm:$0x1]
    %v2336 = vlaneseq
    %v2337 = vshrl.u32 %v2336, 7
    %v2338 = vsub.s32 0, %v2337
    %v2339 = vrot.slane %v2334, %v2338
    %2341 = vmatprep.subr.mxu0 0.0
    %2342 = vmatpush1.msra.mxu0 0.0
    %2343 = vmatprep.subr.mxu0 0.0
    %2344 = vmatpush1.msra.mxu0 0.0
    %2345 = vmatprep.subr.mxu0 0.0
    %2346 = vmatpush1.msra.mxu0 0.0
    %2347 = vmatprep.subr.mxu0 0.0
    %2348 = vmatpush1.msra.mxu0 0.0
    %2349 = vmatprep.subr.mxu0 0.0
    %2350 = vmatpush1.msra.mxu0 0.0
    %2351 = vmatprep.subr.mxu0 0.0
    %2352 = vmatpush1.msra.mxu0 0.0
    %2353 = vmatprep.subr.mxu0 0.0
    %2354 = vmatpush1.msra.mxu0 0.0
    %2355 = vmatprep.subr.mxu0 0.0
    %2356 = vmatpush1.msra.mxu0 0.0
    %2357 = vmatprep.subr.mxu0 0.0
    %2358 = vmatpush1.msra.mxu0 0.0
    %2359 = vmatprep.subr.mxu0 0.0
    %2360 = vmatpush1.msra.mxu0 0.0
    %2361 = vmatprep.subr.mxu0 0.0
    %2362 = vmatpush1.msra.mxu0 0.0
    %2363 = vmatprep.subr.mxu0 0.0
    %2364 = vmatpush1.msra.mxu0 0.0
    %2365 = vmatprep.subr.mxu0 0.0
    %2366 = vmatpush1.msra.mxu0 %v2332
    %2367 = vmatprep.subr.mxu0 0.0
    %2368 = vmatpush1.msra.mxu0 %v2331
    %2369 = vmatprep.subr.mxu0 0.0
    %2370 = vmatpush1.msra.mxu0 %v2330
    %2371 = vmatprep.subr.mxu0 0.0
    %2372 = vmatpush1.msra.mxu0 %v2329
    %2373 = vmatprep.subr.mxu0 0.0
    %2374 = vmatpush2.msra.mxu0 0.0
    %2375 = vmatprep.subr.mxu0 0.0
    %2376 = vmatpush2.msra.mxu0 0.0
    %2377 = vmatprep.subr.mxu0 0.0
    %2378 = vmatpush2.msra.mxu0 0.0
    %2379 = vmatprep.subr.mxu0 0.0
    %2380 = vmatpush2.msra.mxu0 0.0
    %2381 = vmatprep.subr.mxu0 0.0
    %2382 = vmatpush2.msra.mxu0 0.0
    %2383 = vmatprep.subr.mxu0 0.0
    %2384 = vmatpush2.msra.mxu0 0.0
    %2385 = vmatprep.subr.mxu0 0.0
    %2386 = vmatpush2.msra.mxu0 0.0
    %2387 = vmatprep.subr.mxu0 0.0
    %2388 = vmatpush2.msra.mxu0 0.0
    %2389 = vmatprep.subr.mxu0 0.0
    %2390 = vmatpush2.msra.mxu0 0.0
    %2391 = vmatprep.subr.mxu0 0.0
    %2392 = vmatpush2.msra.mxu0 0.0
    %2393 = vmatprep.subr.mxu0 0.0
    %2394 = vmatpush2.msra.mxu0 0.0
    %2395 = vmatprep.subr.mxu0 0.0
    %2396 = vmatpush2.msra.mxu0 0.0
    %2397 = vmatprep.subr.mxu0 0.0
    %2398 = vmatpush2.msra.mxu0 0.0
    %2399 = vmatprep.subr.mxu0 0.0
    %2400 = vmatpush2.msra.mxu0 0.0
    %2401 = vmatprep.subr.mxu0 0.0
    %2402 = vmatpush2.msra.mxu0 0.0
    %2403 = vmatprep.subr.mxu0 0.0
    %2404 = vmatpush2.msra.mxu0 0.0
    %2405 = vmatprep.mubr.f32.mxu0 0.0
    %2406 = vmatmul.mubr.f32.gmra.mxu0 %v2248
    %v2407 = vpop.f32.mrf.mxu0
    %v2408 = vadd.f32 %v2339, %v2407
    %v2409 = vpop.f32.mrf.mxu0
    %2410 = vmatprep.mubr.f32.mxu0 0.0
    %2411 = vmatmul.mubr.f32.gmra.mxu0 %v2251
    %v2412 = vpop.f32.mrf.mxu0
    %v2413 = vadd.f32 %v2339, %v2412
    %v2414 = vpop.f32.mrf.mxu0
    %2415 = vdwg.mxu0
    %s2416 = scalar_lea.vmem %s9, 32
    %v2417 = vld [vmem:[%s2416] sm:$0xff]
    %v2418 = vld [vmem:[%s2416 + $0x8] sm:$0xff]
    %v2419 = vld [vmem:[%s2416 + $0x10] sm:$0xff]
    %v2420 = vld [vmem:[%s2416 + $0x18] sm:$0xff]
    %s2421 = scalar_lea.vmem %s10, 1
    %v2422 = vld [vmem:[%s2421] sm:$0x1]
    %v2424 = vlaneseq
    %v2425 = vshrl.u32 %v2424, 7
    %v2426 = vsub.s32 0, %v2425
    %v2427 = vrot.slane %v2422, %v2426
    %2429 = vmatprep.subr.mxu0 0.0
    %2430 = vmatpush1.msra.mxu0 0.0
    %2431 = vmatprep.subr.mxu0 0.0
    %2432 = vmatpush1.msra.mxu0 0.0
    %2433 = vmatprep.subr.mxu0 0.0
    %2434 = vmatpush1.msra.mxu0 0.0
    %2435 = vmatprep.subr.mxu0 0.0
    %2436 = vmatpush1.msra.mxu0 0.0
    %2437 = vmatprep.subr.mxu0 0.0
    %2438 = vmatpush1.msra.mxu0 0.0
    %2439 = vmatprep.subr.mxu0 0.0
    %2440 = vmatpush1.msra.mxu0 0.0
    %2441 = vmatprep.subr.mxu0 0.0
    %2442 = vmatpush1.msra.mxu0 0.0
    %2443 = vmatprep.subr.mxu0 0.0
    %2444 = vmatpush1.msra.mxu0 0.0
    %2445 = vmatprep.subr.mxu0 0.0
    %2446 = vmatpush1.msra.mxu0 0.0
    %2447 = vmatprep.subr.mxu0 0.0
    %2448 = vmatpush1.msra.mxu0 0.0
    %2449 = vmatprep.subr.mxu0 0.0
    %2450 = vmatpush1.msra.mxu0 0.0
    %2451 = vmatprep.subr.mxu0 0.0
    %2452 = vmatpush1.msra.mxu0 0.0
    %2453 = vmatprep.subr.mxu0 0.0
    %2454 = vmatpush1.msra.mxu0 %v2420
    %2455 = vmatprep.subr.mxu0 0.0
    %2456 = vmatpush1.msra.mxu0 %v2419
    %2457 = vmatprep.subr.mxu0 0.0
    %2458 = vmatpush1.msra.mxu0 %v2418
    %2459 = vmatprep.subr.mxu0 0.0
    %2460 = vmatpush1.msra.mxu0 %v2417
    %2461 = vmatprep.subr.mxu0 0.0
    %2462 = vmatpush2.msra.mxu0 0.0
    %2463 = vmatprep.subr.mxu0 0.0
    %2464 = vmatpush2.msra.mxu0 0.0
    %2465 = vmatprep.subr.mxu0 0.0
    %2466 = vmatpush2.msra.mxu0 0.0
    %2467 = vmatprep.subr.mxu0 0.0
    %2468 = vmatpush2.msra.mxu0 0.0
    %2469 = vmatprep.subr.mxu0 0.0
    %2470 = vmatpush2.msra.mxu0 0.0
    %2471 = vmatprep.subr.mxu0 0.0
    %2472 = vmatpush2.msra.mxu0 0.0
    %2473 = vmatprep.subr.mxu0 0.0
    %2474 = vmatpush2.msra.mxu0 0.0
    %2475 = vmatprep.subr.mxu0 0.0
    %2476 = vmatpush2.msra.mxu0 0.0
    %2477 = vmatprep.subr.mxu0 0.0
    %2478 = vmatpush2.msra.mxu0 0.0
    %2479 = vmatprep.subr.mxu0 0.0
    %2480 = vmatpush2.msra.mxu0 0.0
    %2481 = vmatprep.subr.mxu0 0.0
    %2482 = vmatpush2.msra.mxu0 0.0
    %2483 = vmatprep.subr.mxu0 0.0
    %2484 = vmatpush2.msra.mxu0 0.0
    %2485 = vmatprep.subr.mxu0 0.0
    %2486 = vmatpush2.msra.mxu0 0.0
    %2487 = vmatprep.subr.mxu0 0.0
    %2488 = vmatpush2.msra.mxu0 0.0
    %2489 = vmatprep.subr.mxu0 0.0
    %2490 = vmatpush2.msra.mxu0 0.0
    %2491 = vmatprep.subr.mxu0 0.0
    %2492 = vmatpush2.msra.mxu0 0.0
    %2493 = vmatprep.mubr.f32.mxu0 0.0
    %2494 = vmatmul.mubr.f32.gmra.mxu0 %v2248
    %v2495 = vpop.f32.mrf.mxu0
    %v2496 = vadd.f32 %v2427, %v2495
    %v2497 = vpop.f32.mrf.mxu0
    %2498 = vmatprep.mubr.f32.mxu0 0.0
    %2499 = vmatmul.mubr.f32.gmra.mxu0 %v2251
    %v2500 = vpop.f32.mrf.mxu0
    %v2501 = vadd.f32 %v2427, %v2500
    %v2502 = vpop.f32.mrf.mxu0
    %2503 = vdwg.mxu0
    %v2505 = vsel %vm496, %v2320, 0
    %v2508 = vsel %vm496, %v2408, 0
    %2510 = vmatprep.subr.mxu0 0.0
    %2511 = vmatpush1.xpose.msra.mxu0 0.0
    %2512 = vmatprep.subr.mxu0 0.0
    %2513 = vmatpush1.xpose.msra.mxu0 0.0
    %2514 = vmatprep.subr.mxu0 0.0
    %2515 = vmatpush1.xpose.msra.mxu0 0.0
    %2516 = vmatprep.subr.mxu0 0.0
    %2517 = vmatpush1.xpose.msra.mxu0 0.0
    %2518 = vmatprep.subr.mxu0 0.0
    %2519 = vmatpush1.xpose.msra.mxu0 0.0
    %2520 = vmatprep.subr.mxu0 0.0
    %2521 = vmatpush1.xpose.msra.mxu0 0.0
    %2522 = vmatprep.subr.mxu0 0.0
    %2523 = vmatpush1.xpose.msra.mxu0 0.0
    %2524 = vmatprep.subr.mxu0 0.0
    %2525 = vmatpush1.xpose.msra.mxu0 0.0
    %2526 = vmatprep.subr.mxu0 0.0
    %2527 = vmatpush1.xpose.msra.mxu0 0.0
    %2528 = vmatprep.subr.mxu0 0.0
    %2529 = vmatpush1.xpose.msra.mxu0 0.0
    %2530 = vmatprep.subr.mxu0 0.0
    %2531 = vmatpush1.xpose.msra.mxu0 0.0
    %2532 = vmatprep.subr.mxu0 0.0
    %2533 = vmatpush1.xpose.msra.mxu0 0.0
    %2534 = vmatprep.subr.mxu0 0.0
    %2535 = vmatpush1.xpose.msra.mxu0 0.0
    %2536 = vmatprep.subr.mxu0 0.0
    %2537 = vmatpush1.xpose.msra.mxu0 0.0
    %2538 = vmatprep.subr.mxu0 0.0
    %2539 = vmatpush1.xpose.msra.mxu0 0.0
    %2540 = vmatprep.subr.mxu0 0.0
    %2541 = vmatpush1.xpose.msra.mxu0 %v2508
    %2542 = vmatprep.subr.mxu0 0.0
    %2543 = vmatpush2.xpose.msra.mxu0 0.0
    %2544 = vmatprep.subr.mxu0 0.0
    %2545 = vmatpush2.xpose.msra.mxu0 0.0
    %2546 = vmatprep.subr.mxu0 0.0
    %2547 = vmatpush2.xpose.msra.mxu0 0.0
    %2548 = vmatprep.subr.mxu0 0.0
    %2549 = vmatpush2.xpose.msra.mxu0 0.0
    %2550 = vmatprep.subr.mxu0 0.0
    %2551 = vmatpush2.xpose.msra.mxu0 0.0
    %2552 = vmatprep.subr.mxu0 0.0
    %2553 = vmatpush2.xpose.msra.mxu0 0.0
    %2554 = vmatprep.subr.mxu0 0.0
    %2555 = vmatpush2.xpose.msra.mxu0 0.0
    %2556 = vmatprep.subr.mxu0 0.0
    %2557 = vmatpush2.xpose.msra.mxu0 0.0
    %2558 = vmatprep.subr.mxu0 0.0
    %2559 = vmatpush2.xpose.msra.mxu0 0.0
    %2560 = vmatprep.subr.mxu0 0.0
    %2561 = vmatpush2.xpose.msra.mxu0 0.0
    %2562 = vmatprep.subr.mxu0 0.0
    %2563 = vmatpush2.xpose.msra.mxu0 0.0
    %2564 = vmatprep.subr.mxu0 0.0
    %2565 = vmatpush2.xpose.msra.mxu0 0.0
    %2566 = vmatprep.subr.mxu0 0.0
    %2567 = vmatpush2.xpose.msra.mxu0 0.0
    %2568 = vmatprep.subr.mxu0 0.0
    %2569 = vmatpush2.xpose.msra.mxu0 0.0
    %2570 = vmatprep.subr.mxu0 0.0
    %2571 = vmatpush2.xpose.msra.mxu0 0.0
    %2572 = vmatprep.subr.mxu0 0.0
    %2573 = vmatpush2.xpose.msra.mxu0 0.0
    %2574 = vmatprep.mubr.f32.mxu0 0.0
    %2575 = vmatmul.mubr.f32.gmra.mxu0 %v2505
    %v2576 = vpop.f32.mrf.mxu0
    %v2577 = vadd.f32 %v185, %v2576
    %v2578 = vpop.f32.mrf.mxu0
    %2579 = vdwg.mxu0
    %v2581 = vsel %vm496, %v2325, 0
    %v2584 = vsel %vm496, %v2413, 0
    %2586 = vmatprep.subr.mxu0 0.0
    %2587 = vmatpush1.xpose.msra.mxu0 0.0
    %2588 = vmatprep.subr.mxu0 0.0
    %2589 = vmatpush1.xpose.msra.mxu0 0.0
    %2590 = vmatprep.subr.mxu0 0.0
    %2591 = vmatpush1.xpose.msra.mxu0 0.0
    %2592 = vmatprep.subr.mxu0 0.0
    %2593 = vmatpush1.xpose.msra.mxu0 0.0
    %2594 = vmatprep.subr.mxu0 0.0
    %2595 = vmatpush1.xpose.msra.mxu0 0.0
    %2596 = vmatprep.subr.mxu0 0.0
    %2597 = vmatpush1.xpose.msra.mxu0 0.0
    %2598 = vmatprep.subr.mxu0 0.0
    %2599 = vmatpush1.xpose.msra.mxu0 0.0
    %2600 = vmatprep.subr.mxu0 0.0
    %2601 = vmatpush1.xpose.msra.mxu0 0.0
    %2602 = vmatprep.subr.mxu0 0.0
    %2603 = vmatpush1.xpose.msra.mxu0 0.0
    %2604 = vmatprep.subr.mxu0 0.0
    %2605 = vmatpush1.xpose.msra.mxu0 0.0
    %2606 = vmatprep.subr.mxu0 0.0
    %2607 = vmatpush1.xpose.msra.mxu0 0.0
    %2608 = vmatprep.subr.mxu0 0.0
    %2609 = vmatpush1.xpose.msra.mxu0 0.0
    %2610 = vmatprep.subr.mxu0 0.0
    %2611 = vmatpush1.xpose.msra.mxu0 0.0
    %2612 = vmatprep.subr.mxu0 0.0
    %2613 = vmatpush1.xpose.msra.mxu0 0.0
    %2614 = vmatprep.subr.mxu0 0.0
    %2615 = vmatpush1.xpose.msra.mxu0 0.0
    %2616 = vmatprep.subr.mxu0 0.0
    %2617 = vmatpush1.xpose.msra.mxu0 %v2584
    %2618 = vmatprep.subr.mxu0 0.0
    %2619 = vmatpush2.xpose.msra.mxu0 0.0
    %2620 = vmatprep.subr.mxu0 0.0
    %2621 = vmatpush2.xpose.msra.mxu0 0.0
    %2622 = vmatprep.subr.mxu0 0.0
    %2623 = vmatpush2.xpose.msra.mxu0 0.0
    %2624 = vmatprep.subr.mxu0 0.0
    %2625 = vmatpush2.xpose.msra.mxu0 0.0
    %2626 = vmatprep.subr.mxu0 0.0
    %2627 = vmatpush2.xpose.msra.mxu0 0.0
    %2628 = vmatprep.subr.mxu0 0.0
    %2629 = vmatpush2.xpose.msra.mxu0 0.0
    %2630 = vmatprep.subr.mxu0 0.0
    %2631 = vmatpush2.xpose.msra.mxu0 0.0
    %2632 = vmatprep.subr.mxu0 0.0
    %2633 = vmatpush2.xpose.msra.mxu0 0.0
    %2634 = vmatprep.subr.mxu0 0.0
    %2635 = vmatpush2.xpose.msra.mxu0 0.0
    %2636 = vmatprep.subr.mxu0 0.0
    %2637 = vmatpush2.xpose.msra.mxu0 0.0
    %2638 = vmatprep.subr.mxu0 0.0
    %2639 = vmatpush2.xpose.msra.mxu0 0.0
    %2640 = vmatprep.subr.mxu0 0.0
    %2641 = vmatpush2.xpose.msra.mxu0 0.0
    %2642 = vmatprep.subr.mxu0 0.0
    %2643 = vmatpush2.xpose.msra.mxu0 0.0
    %2644 = vmatprep.subr.mxu0 0.0
    %2645 = vmatpush2.xpose.msra.mxu0 0.0
    %2646 = vmatprep.subr.mxu0 0.0
    %2647 = vmatpush2.xpose.msra.mxu0 0.0
    %2648 = vmatprep.subr.mxu0 0.0
    %2649 = vmatpush2.xpose.msra.mxu0 0.0
    %2650 = vmatprep.mubr.f32.mxu0 0.0
    %2651 = vmatmul.mubr.f32.gmra.mxu0 %v2581
    %v2652 = vpop.f32.mrf.mxu0
    %v2653 = vadd.f32 %v185, %v2652
    %v2654 = vpop.f32.mrf.mxu0
    %2655 = vdwg.mxu0
    %v2656 = vsel %vm496, %v2577, -inf
    %2657 = vmax.xlane.f32.xlu0 %v2656
    %v2658 = vpop.xlane.xlu0 %2657
    %v2659 = vsel %vm496, %v2653, -inf
    %2660 = vmax.xlane.f32.xlu0 %v2659
    %v2661 = vpop.xlane.xlu0 %2660
    %v2662 = vsub.f32 %v2577, %v2658
    %v2663 = vsub.f32 %v2653, %v2661
    %v2664 = vmul.f32 %v2662, 1.442695
    %v2665 = vpow.pop %v2664
    %v2666 = vmul.f32 %v2663, 1.442695
    %v2667 = vpow.pop %v2666
    %v2668 = vsel %vm496, %v2665, 0.0
    %2669 = vadd.xlane.f32.xlu0 %v2668
    %v2670 = vpop.xlane.xlu0 %2669
    %v2671 = vsel %vm496, %v2667, 0.0
    %2672 = vadd.xlane.f32.xlu0 %v2671
    %v2673 = vpop.xlane.xlu0 %2672
    %v2674 = vrcp.pop %v2670
    %v2675 = vrcp.pop %v2673
    %v2676 = vmul.f32 %v2665, %v2674
    %v2677 = vmul.f32 %v2667, %v2675
    %v2679 = vsel %vm496, %v2676, 0
    %2681 = vmatprep.subr.mxu0 0.0
    %2682 = vmatpush1.msra.mxu0 0.0
    %2683 = vmatprep.subr.mxu0 0.0
    %2684 = vmatpush1.msra.mxu0 0.0
    %2685 = vmatprep.subr.mxu0 0.0
    %2686 = vmatpush1.msra.mxu0 0.0
    %2687 = vmatprep.subr.mxu0 0.0
    %2688 = vmatpush1.msra.mxu0 0.0
    %2689 = vmatprep.subr.mxu0 0.0
    %2690 = vmatpush1.msra.mxu0 0.0
    %2691 = vmatprep.subr.mxu0 0.0
    %2692 = vmatpush1.msra.mxu0 0.0
    %2693 = vmatprep.subr.mxu0 0.0
    %2694 = vmatpush1.msra.mxu0 0.0
    %2695 = vmatprep.subr.mxu0 0.0
    %2696 = vmatpush1.msra.mxu0 0.0
    %2697 = vmatprep.subr.mxu0 0.0
    %2698 = vmatpush1.msra.mxu0 0.0
    %2699 = vmatprep.subr.mxu0 0.0
    %2700 = vmatpush1.msra.mxu0 0.0
    %2701 = vmatprep.subr.mxu0 0.0
    %2702 = vmatpush1.msra.mxu0 0.0
    %2703 = vmatprep.subr.mxu0 0.0
    %2704 = vmatpush1.msra.mxu0 0.0
    %2705 = vmatprep.subr.mxu0 0.0
    %2706 = vmatpush1.msra.mxu0 0.0
    %2707 = vmatprep.subr.mxu0 0.0
    %2708 = vmatpush1.msra.mxu0 0.0
    %2709 = vmatprep.subr.mxu0 0.0
    %2710 = vmatpush1.msra.mxu0 0.0
    %2711 = vmatprep.subr.mxu0 0.0
    %2712 = vmatpush1.msra.mxu0 %v2496
    %2713 = vmatprep.subr.mxu0 0.0
    %2714 = vmatpush2.msra.mxu0 0.0
    %2715 = vmatprep.subr.mxu0 0.0
    %2716 = vmatpush2.msra.mxu0 0.0
    %2717 = vmatprep.subr.mxu0 0.0
    %2718 = vmatpush2.msra.mxu0 0.0
    %2719 = vmatprep.subr.mxu0 0.0
    %2720 = vmatpush2.msra.mxu0 0.0
    %2721 = vmatprep.subr.mxu0 0.0
    %2722 = vmatpush2.msra.mxu0 0.0
    %2723 = vmatprep.subr.mxu0 0.0
    %2724 = vmatpush2.msra.mxu0 0.0
    %2725 = vmatprep.subr.mxu0 0.0
    %2726 = vmatpush2.msra.mxu0 0.0
    %2727 = vmatprep.subr.mxu0 0.0
    %2728 = vmatpush2.msra.mxu0 0.0
    %2729 = vmatprep.subr.mxu0 0.0
    %2730 = vmatpush2.msra.mxu0 0.0
    %2731 = vmatprep.subr.mxu0 0.0
    %2732 = vmatpush2.msra.mxu0 0.0
    %2733 = vmatprep.subr.mxu0 0.0
    %2734 = vmatpush2.msra.mxu0 0.0
    %2735 = vmatprep.subr.mxu0 0.0
    %2736 = vmatpush2.msra.mxu0 0.0
    %2737 = vmatprep.subr.mxu0 0.0
    %2738 = vmatpush2.msra.mxu0 0.0
    %2739 = vmatprep.subr.mxu0 0.0
    %2740 = vmatpush2.msra.mxu0 0.0
    %2741 = vmatprep.subr.mxu0 0.0
    %2742 = vmatpush2.msra.mxu0 0.0
    %2743 = vmatprep.subr.mxu0 0.0
    %2744 = vmatpush2.msra.mxu0 0.0
    %2745 = vmatprep.mubr.f32.mxu0 0.0
    %2746 = vmatmul.mubr.f32.gmra.mxu0 %v2679
    %v2747 = vpop.f32.mrf.mxu0
    %v2748 = vadd.f32 0.0, %v2747
    %v2749 = vpop.f32.mrf.mxu0
    %2750 = vdwg.mxu0
    %v2752 = vsel %vm496, %v2677, 0
    %2754 = vmatprep.subr.mxu0 0.0
    %2755 = vmatpush1.msra.mxu0 0.0
    %2756 = vmatprep.subr.mxu0 0.0
    %2757 = vmatpush1.msra.mxu0 0.0
    %2758 = vmatprep.subr.mxu0 0.0
    %2759 = vmatpush1.msra.mxu0 0.0
    %2760 = vmatprep.subr.mxu0 0.0
    %2761 = vmatpush1.msra.mxu0 0.0
    %2762 = vmatprep.subr.mxu0 0.0
    %2763 = vmatpush1.msra.mxu0 0.0
    %2764 = vmatprep.subr.mxu0 0.0
    %2765 = vmatpush1.msra.mxu0 0.0
    %2766 = vmatprep.subr.mxu0 0.0
    %2767 = vmatpush1.msra.mxu0 0.0
    %2768 = vmatprep.subr.mxu0 0.0
    %2769 = vmatpush1.msra.mxu0 0.0
    %2770 = vmatprep.subr.mxu0 0.0
    %2771 = vmatpush1.msra.mxu0 0.0
    %2772 = vmatprep.subr.mxu0 0.0
    %2773 = vmatpush1.msra.mxu0 0.0
    %2774 = vmatprep.subr.mxu0 0.0
    %2775 = vmatpush1.msra.mxu0 0.0
    %2776 = vmatprep.subr.mxu0 0.0
    %2777 = vmatpush1.msra.mxu0 0.0
    %2778 = vmatprep.subr.mxu0 0.0
    %2779 = vmatpush1.msra.mxu0 0.0
    %2780 = vmatprep.subr.mxu0 0.0
    %2781 = vmatpush1.msra.mxu0 0.0
    %2782 = vmatprep.subr.mxu0 0.0
    %2783 = vmatpush1.msra.mxu0 0.0
    %2784 = vmatprep.subr.mxu0 0.0
    %2785 = vmatpush1.msra.mxu0 %v2501
    %2786 = vmatprep.subr.mxu0 0.0
    %2787 = vmatpush2.msra.mxu0 0.0
    %2788 = vmatprep.subr.mxu0 0.0
    %2789 = vmatpush2.msra.mxu0 0.0
    %2790 = vmatprep.subr.mxu0 0.0
    %2791 = vmatpush2.msra.mxu0 0.0
    %2792 = vmatprep.subr.mxu0 0.0
    %2793 = vmatpush2.msra.mxu0 0.0
    %2794 = vmatprep.subr.mxu0 0.0
    %2795 = vmatpush2.msra.mxu0 0.0
    %2796 = vmatprep.subr.mxu0 0.0
    %2797 = vmatpush2.msra.mxu0 0.0
    %2798 = vmatprep.subr.mxu0 0.0
    %2799 = vmatpush2.msra.mxu0 0.0
    %2800 = vmatprep.subr.mxu0 0.0
    %2801 = vmatpush2.msra.mxu0 0.0
    %2802 = vmatprep.subr.mxu0 0.0
    %2803 = vmatpush2.msra.mxu0 0.0
    %2804 = vmatprep.subr.mxu0 0.0
    %2805 = vmatpush2.msra.mxu0 0.0
    %2806 = vmatprep.subr.mxu0 0.0
    %2807 = vmatpush2.msra.mxu0 0.0
    %2808 = vmatprep.subr.mxu0 0.0
    %2809 = vmatpush2.msra.mxu0 0.0
    %2810 = vmatprep.subr.mxu0 0.0
    %2811 = vmatpush2.msra.mxu0 0.0
    %2812 = vmatprep.subr.mxu0 0.0
    %2813 = vmatpush2.msra.mxu0 0.0
    %2814 = vmatprep.subr.mxu0 0.0
    %2815 = vmatpush2.msra.mxu0 0.0
    %2816 = vmatprep.subr.mxu0 0.0
    %2817 = vmatpush2.msra.mxu0 0.0
    %2818 = vmatprep.mubr.f32.mxu0 0.0
    %2819 = vmatmul.mubr.f32.gmra.mxu0 %v2752
    %v2820 = vpop.f32.mrf.mxu0
    %v2821 = vadd.f32 0.0, %v2820
    %v2822 = vpop.f32.mrf.mxu0
    %2823 = vdwg.mxu0
    %2824 = vrot.lane.b32.xlu0 %v2320, 120
    %v2825 = vpop.permute.xlu0 %2824
    %2826 = vrot.lane.b32.xlu0 %v2408, 120
    %v2827 = vpop.permute.xlu0 %2826
    %v2828 = vsel %vm496, %v2825, 0
    %v2830 = vsel %vm496, %v2827, 0
    %2832 = vmatprep.subr.mxu0 0.0
    %2833 = vmatpush1.xpose.msra.mxu0 0.0
    %2834 = vmatprep.subr.mxu0 0.0
    %2835 = vmatpush1.xpose.msra.mxu0 0.0
    %2836 = vmatprep.subr.mxu0 0.0
    %2837 = vmatpush1.xpose.msra.mxu0 0.0
    %2838 = vmatprep.subr.mxu0 0.0
    %2839 = vmatpush1.xpose.msra.mxu0 0.0
    %2840 = vmatprep.subr.mxu0 0.0
    %2841 = vmatpush1.xpose.msra.mxu0 0.0
    %2842 = vmatprep.subr.mxu0 0.0
    %2843 = vmatpush1.xpose.msra.mxu0 0.0
    %2844 = vmatprep.subr.mxu0 0.0
    %2845 = vmatpush1.xpose.msra.mxu0 0.0
    %2846 = vmatprep.subr.mxu0 0.0
    %2847 = vmatpush1.xpose.msra.mxu0 0.0
    %2848 = vmatprep.subr.mxu0 0.0
    %2849 = vmatpush1.xpose.msra.mxu0 0.0
    %2850 = vmatprep.subr.mxu0 0.0
    %2851 = vmatpush1.xpose.msra.mxu0 0.0
    %2852 = vmatprep.subr.mxu0 0.0
    %2853 = vmatpush1.xpose.msra.mxu0 0.0
    %2854 = vmatprep.subr.mxu0 0.0
    %2855 = vmatpush1.xpose.msra.mxu0 0.0
    %2856 = vmatprep.subr.mxu0 0.0
    %2857 = vmatpush1.xpose.msra.mxu0 0.0
    %2858 = vmatprep.subr.mxu0 0.0
    %2859 = vmatpush1.xpose.msra.mxu0 0.0
    %2860 = vmatprep.subr.mxu0 0.0
    %2861 = vmatpush1.xpose.msra.mxu0 0.0
    %2862 = vmatprep.subr.mxu0 0.0
    %2863 = vmatpush1.xpose.msra.mxu0 %v2830
    %2864 = vmatprep.subr.mxu0 0.0
    %2865 = vmatpush2.xpose.msra.mxu0 0.0
    %2866 = vmatprep.subr.mxu0 0.0
    %2867 = vmatpush2.xpose.msra.mxu0 0.0
    %2868 = vmatprep.subr.mxu0 0.0
    %2869 = vmatpush2.xpose.msra.mxu0 0.0
    %2870 = vmatprep.subr.mxu0 0.0
    %2871 = vmatpush2.xpose.msra.mxu0 0.0
    %2872 = vmatprep.subr.mxu0 0.0
    %2873 = vmatpush2.xpose.msra.mxu0 0.0
    %2874 = vmatprep.subr.mxu0 0.0
    %2875 = vmatpush2.xpose.msra.mxu0 0.0
    %2876 = vmatprep.subr.mxu0 0.0
    %2877 = vmatpush2.xpose.msra.mxu0 0.0
    %2878 = vmatprep.subr.mxu0 0.0
    %2879 = vmatpush2.xpose.msra.mxu0 0.0
    %2880 = vmatprep.subr.mxu0 0.0
    %2881 = vmatpush2.xpose.msra.mxu0 0.0
    %2882 = vmatprep.subr.mxu0 0.0
    %2883 = vmatpush2.xpose.msra.mxu0 0.0
    %2884 = vmatprep.subr.mxu0 0.0
    %2885 = vmatpush2.xpose.msra.mxu0 0.0
    %2886 = vmatprep.subr.mxu0 0.0
    %2887 = vmatpush2.xpose.msra.mxu0 0.0
    %2888 = vmatprep.subr.mxu0 0.0
    %2889 = vmatpush2.xpose.msra.mxu0 0.0
    %2890 = vmatprep.subr.mxu0 0.0
    %2891 = vmatpush2.xpose.msra.mxu0 0.0
    %2892 = vmatprep.subr.mxu0 0.0
    %2893 = vmatpush2.xpose.msra.mxu0 0.0
    %2894 = vmatprep.subr.mxu0 0.0
    %2895 = vmatpush2.xpose.msra.mxu0 0.0
    %2896 = vmatprep.mubr.f32.mxu0 0.0
    %2897 = vmatmul.mubr.f32.gmra.mxu0 %v2828
    %v2898 = vpop.f32.mrf.mxu0
    %v2899 = vadd.f32 %v185, %v2898
    %v2900 = vpop.f32.mrf.mxu0
    %2901 = vdwg.mxu0
    %2902 = vrot.lane.b32.xlu0 %v2325, 120
    %v2903 = vpop.permute.xlu0 %2902
    %2904 = vrot.lane.b32.xlu0 %v2413, 120
    %v2905 = vpop.permute.xlu0 %2904
    %v2906 = vsel %vm496, %v2903, 0
    %v2908 = vsel %vm496, %v2905, 0
    %2910 = vmatprep.subr.mxu0 0.0
    %2911 = vmatpush1.xpose.msra.mxu0 0.0
    %2912 = vmatprep.subr.mxu0 0.0
    %2913 = vmatpush1.xpose.msra.mxu0 0.0
    %2914 = vmatprep.subr.mxu0 0.0
    %2915 = vmatpush1.xpose.msra.mxu0 0.0
    %2916 = vmatprep.subr.mxu0 0.0
    %2917 = vmatpush1.xpose.msra.mxu0 0.0
    %2918 = vmatprep.subr.mxu0 0.0
    %2919 = vmatpush1.xpose.msra.mxu0 0.0
    %2920 = vmatprep.subr.mxu0 0.0
    %2921 = vmatpush1.xpose.msra.mxu0 0.0
    %2922 = vmatprep.subr.mxu0 0.0
    %2923 = vmatpush1.xpose.msra.mxu0 0.0
    %2924 = vmatprep.subr.mxu0 0.0
    %2925 = vmatpush1.xpose.msra.mxu0 0.0
    %2926 = vmatprep.subr.mxu0 0.0
    %2927 = vmatpush1.xpose.msra.mxu0 0.0
    %2928 = vmatprep.subr.mxu0 0.0
    %2929 = vmatpush1.xpose.msra.mxu0 0.0
    %2930 = vmatprep.subr.mxu0 0.0
    %2931 = vmatpush1.xpose.msra.mxu0 0.0
    %2932 = vmatprep.subr.mxu0 0.0
    %2933 = vmatpush1.xpose.msra.mxu0 0.0
    %2934 = vmatprep.subr.mxu0 0.0
    %2935 = vmatpush1.xpose.msra.mxu0 0.0
    %2936 = vmatprep.subr.mxu0 0.0
    %2937 = vmatpush1.xpose.msra.mxu0 0.0
    %2938 = vmatprep.subr.mxu0 0.0
    %2939 = vmatpush1.xpose.msra.mxu0 0.0
    %2940 = vmatprep.subr.mxu0 0.0
    %2941 = vmatpush1.xpose.msra.mxu0 %v2908
    %2942 = vmatprep.subr.mxu0 0.0
    %2943 = vmatpush2.xpose.msra.mxu0 0.0
    %2944 = vmatprep.subr.mxu0 0.0
    %2945 = vmatpush2.xpose.msra.mxu0 0.0
    %2946 = vmatprep.subr.mxu0 0.0
    %2947 = vmatpush2.xpose.msra.mxu0 0.0
    %2948 = vmatprep.subr.mxu0 0.0
    %2949 = vmatpush2.xpose.msra.mxu0 0.0
    %2950 = vmatprep.subr.mxu0 0.0
    %2951 = vmatpush2.xpose.msra.mxu0 0.0
    %2952 = vmatprep.subr.mxu0 0.0
    %2953 = vmatpush2.xpose.msra.mxu0 0.0
    %2954 = vmatprep.subr.mxu0 0.0
    %2955 = vmatpush2.xpose.msra.mxu0 0.0
    %2956 = vmatprep.subr.mxu0 0.0
    %2957 = vmatpush2.xpose.msra.mxu0 0.0
    %2958 = vmatprep.subr.mxu0 0.0
    %2959 = vmatpush2.xpose.msra.mxu0 0.0
    %2960 = vmatprep.subr.mxu0 0.0
    %2961 = vmatpush2.xpose.msra.mxu0 0.0
    %2962 = vmatprep.subr.mxu0 0.0
    %2963 = vmatpush2.xpose.msra.mxu0 0.0
    %2964 = vmatprep.subr.mxu0 0.0
    %2965 = vmatpush2.xpose.msra.mxu0 0.0
    %2966 = vmatprep.subr.mxu0 0.0
    %2967 = vmatpush2.xpose.msra.mxu0 0.0
    %2968 = vmatprep.subr.mxu0 0.0
    %2969 = vmatpush2.xpose.msra.mxu0 0.0
    %2970 = vmatprep.subr.mxu0 0.0
    %2971 = vmatpush2.xpose.msra.mxu0 0.0
    %2972 = vmatprep.subr.mxu0 0.0
    %2973 = vmatpush2.xpose.msra.mxu0 0.0
    %2974 = vmatprep.mubr.f32.mxu0 0.0
    %2975 = vmatmul.mubr.f32.gmra.mxu0 %v2906
    %v2976 = vpop.f32.mrf.mxu0
    %v2977 = vadd.f32 %v185, %v2976
    %v2978 = vpop.f32.mrf.mxu0
    %2979 = vdwg.mxu0
    %v2980 = vsel %vm496, %v2899, -inf
    %2981 = vmax.xlane.f32.xlu0 %v2980
    %v2982 = vpop.xlane.xlu0 %2981
    %v2983 = vsel %vm496, %v2977, -inf
    %2984 = vmax.xlane.f32.xlu0 %v2983
    %v2985 = vpop.xlane.xlu0 %2984
    %v2986 = vsub.f32 %v2899, %v2982
    %v2987 = vsub.f32 %v2977, %v2985
    %v2988 = vmul.f32 %v2986, 1.442695
    %v2989 = vpow.pop %v2988
    %v2990 = vmul.f32 %v2987, 1.442695
    %v2991 = vpow.pop %v2990
    %v2992 = vsel %vm496, %v2989, 0.0
    %2993 = vadd.xlane.f32.xlu0 %v2992
    %v2994 = vpop.xlane.xlu0 %2993
    %v2995 = vsel %vm496, %v2991, 0.0
    %2996 = vadd.xlane.f32.xlu0 %v2995
    %v2997 = vpop.xlane.xlu0 %2996
    %v2998 = vrcp.pop %v2994
    %v2999 = vrcp.pop %v2997
    %v3000 = vmul.f32 %v2989, %v2998
    %v3001 = vmul.f32 %v2991, %v2999
    %3003 = vrot.lane.b32.xlu0 %v2496, 120
    %v3004 = vpop.permute.xlu0 %3003
    %v3007 = vsel %vm496, %v3000, 0
    %3009 = vmatprep.subr.mxu0 0.0
    %3010 = vmatpush1.msra.mxu0 0.0
    %3011 = vmatprep.subr.mxu0 0.0
    %3012 = vmatpush1.msra.mxu0 0.0
    %3013 = vmatprep.subr.mxu0 0.0
    %3014 = vmatpush1.msra.mxu0 0.0
    %3015 = vmatprep.subr.mxu0 0.0
    %3016 = vmatpush1.msra.mxu0 0.0
    %3017 = vmatprep.subr.mxu0 0.0
    %3018 = vmatpush1.msra.mxu0 0.0
    %3019 = vmatprep.subr.mxu0 0.0
    %3020 = vmatpush1.msra.mxu0 0.0
    %3021 = vmatprep.subr.mxu0 0.0
    %3022 = vmatpush1.msra.mxu0 0.0
    %3023 = vmatprep.subr.mxu0 0.0
    %3024 = vmatpush1.msra.mxu0 0.0
    %3025 = vmatprep.subr.mxu0 0.0
    %3026 = vmatpush1.msra.mxu0 0.0
    %3027 = vmatprep.subr.mxu0 0.0
    %3028 = vmatpush1.msra.mxu0 0.0
    %3029 = vmatprep.subr.mxu0 0.0
    %3030 = vmatpush1.msra.mxu0 0.0
    %3031 = vmatprep.subr.mxu0 0.0
    %3032 = vmatpush1.msra.mxu0 0.0
    %3033 = vmatprep.subr.mxu0 0.0
    %3034 = vmatpush1.msra.mxu0 0.0
    %3035 = vmatprep.subr.mxu0 0.0
    %3036 = vmatpush1.msra.mxu0 0.0
    %3037 = vmatprep.subr.mxu0 0.0
    %3038 = vmatpush1.msra.mxu0 0.0
    %3039 = vmatprep.subr.mxu0 0.0
    %3040 = vmatpush1.msra.mxu0 %v3004
    %3041 = vmatprep.subr.mxu0 0.0
    %3042 = vmatpush2.msra.mxu0 0.0
    %3043 = vmatprep.subr.mxu0 0.0
    %3044 = vmatpush2.msra.mxu0 0.0
    %3045 = vmatprep.subr.mxu0 0.0
    %3046 = vmatpush2.msra.mxu0 0.0
    %3047 = vmatprep.subr.mxu0 0.0
    %3048 = vmatpush2.msra.mxu0 0.0
    %3049 = vmatprep.subr.mxu0 0.0
    %3050 = vmatpush2.msra.mxu0 0.0
    %3051 = vmatprep.subr.mxu0 0.0
    %3052 = vmatpush2.msra.mxu0 0.0
    %3053 = vmatprep.subr.mxu0 0.0
    %3054 = vmatpush2.msra.mxu0 0.0
    %3055 = vmatprep.subr.mxu0 0.0
    %3056 = vmatpush2.msra.mxu0 0.0
    %3057 = vmatprep.subr.mxu0 0.0
    %3058 = vmatpush2.msra.mxu0 0.0
    %3059 = vmatprep.subr.mxu0 0.0
    %3060 = vmatpush2.msra.mxu0 0.0
    %3061 = vmatprep.subr.mxu0 0.0
    %3062 = vmatpush2.msra.mxu0 0.0
    %3063 = vmatprep.subr.mxu0 0.0
    %3064 = vmatpush2.msra.mxu0 0.0
    %3065 = vmatprep.subr.mxu0 0.0
    %3066 = vmatpush2.msra.mxu0 0.0
    %3067 = vmatprep.subr.mxu0 0.0
    %3068 = vmatpush2.msra.mxu0 0.0
    %3069 = vmatprep.subr.mxu0 0.0
    %3070 = vmatpush2.msra.mxu0 0.0
    %3071 = vmatprep.subr.mxu0 0.0
    %3072 = vmatpush2.msra.mxu0 0.0
    %3073 = vmatprep.mubr.f32.mxu0 0.0
    %3074 = vmatmul.mubr.f32.gmra.mxu0 %v3007
    %v3075 = vpop.f32.mrf.mxu0
    %v3076 = vadd.f32 0.0, %v3075
    %v3077 = vpop.f32.mrf.mxu0
    %3078 = vdwg.mxu0
    %3080 = vrot.lane.b32.xlu0 %v2501, 120
    %v3081 = vpop.permute.xlu0 %3080
    %v3084 = vsel %vm496, %v3001, 0
    %3086 = vmatprep.subr.mxu0 0.0
    %3087 = vmatpush1.msra.mxu0 0.0
    %3088 = vmatprep.subr.mxu0 0.0
    %3089 = vmatpush1.msra.mxu0 0.0
    %3090 = vmatprep.subr.mxu0 0.0
    %3091 = vmatpush1.msra.mxu0 0.0
    %3092 = vmatprep.subr.mxu0 0.0
    %3093 = vmatpush1.msra.mxu0 0.0
    %3094 = vmatprep.subr.mxu0 0.0
    %3095 = vmatpush1.msra.mxu0 0.0
    %3096 = vmatprep.subr.mxu0 0.0
    %3097 = vmatpush1.msra.mxu0 0.0
    %3098 = vmatprep.subr.mxu0 0.0
    %3099 = vmatpush1.msra.mxu0 0.0
    %3100 = vmatprep.subr.mxu0 0.0
    %3101 = vmatpush1.msra.mxu0 0.0
    %3102 = vmatprep.subr.mxu0 0.0
    %3103 = vmatpush1.msra.mxu0 0.0
    %3104 = vmatprep.subr.mxu0 0.0
    %3105 = vmatpush1.msra.mxu0 0.0
    %3106 = vmatprep.subr.mxu0 0.0
    %3107 = vmatpush1.msra.mxu0 0.0
    %3108 = vmatprep.subr.mxu0 0.0
    %3109 = vmatpush1.msra.mxu0 0.0
    %3110 = vmatprep.subr.mxu0 0.0
    %3111 = vmatpush1.msra.mxu0 0.0
    %3112 = vmatprep.subr.mxu0 0.0
    %3113 = vmatpush1.msra.mxu0 0.0
    %3114 = vmatprep.subr.mxu0 0.0
    %3115 = vmatpush1.msra.mxu0 0.0
    %3116 = vmatprep.subr.mxu0 0.0
    %3117 = vmatpush1.msra.mxu0 %v3081
    %3118 = vmatprep.subr.mxu0 0.0
    %3119 = vmatpush2.msra.mxu0 0.0
    %3120 = vmatprep.subr.mxu0 0.0
    %3121 = vmatpush2.msra.mxu0 0.0
    %3122 = vmatprep.subr.mxu0 0.0
    %3123 = vmatpush2.msra.mxu0 0.0
    %3124 = vmatprep.subr.mxu0 0.0
    %3125 = vmatpush2.msra.mxu0 0.0
    %3126 = vmatprep.subr.mxu0 0.0
    %3127 = vmatpush2.msra.mxu0 0.0
    %3128 = vmatprep.subr.mxu0 0.0
    %3129 = vmatpush2.msra.mxu0 0.0
    %3130 = vmatprep.subr.mxu0 0.0
    %3131 = vmatpush2.msra.mxu0 0.0
    %3132 = vmatprep.subr.mxu0 0.0
    %3133 = vmatpush2.msra.mxu0 0.0
    %3134 = vmatprep.subr.mxu0 0.0
    %3135 = vmatpush2.msra.mxu0 0.0
    %3136 = vmatprep.subr.mxu0 0.0
    %3137 = vmatpush2.msra.mxu0 0.0
    %3138 = vmatprep.subr.mxu0 0.0
    %3139 = vmatpush2.msra.mxu0 0.0
    %3140 = vmatprep.subr.mxu0 0.0
    %3141 = vmatpush2.msra.mxu0 0.0
    %3142 = vmatprep.subr.mxu0 0.0
    %3143 = vmatpush2.msra.mxu0 0.0
    %3144 = vmatprep.subr.mxu0 0.0
    %3145 = vmatpush2.msra.mxu0 0.0
    %3146 = vmatprep.subr.mxu0 0.0
    %3147 = vmatpush2.msra.mxu0 0.0
    %3148 = vmatprep.subr.mxu0 0.0
    %3149 = vmatpush2.msra.mxu0 0.0
    %3150 = vmatprep.mubr.f32.mxu0 0.0
    %3151 = vmatmul.mubr.f32.gmra.mxu0 %v3084
    %v3152 = vpop.f32.mrf.mxu0
    %v3153 = vadd.f32 0.0, %v3152
    %v3154 = vpop.f32.mrf.mxu0
    %3155 = vdwg.mxu0
    %3156 = vrot.lane.b32.xlu0 %v2320, 112
    %v3157 = vpop.permute.xlu0 %3156
    %3158 = vrot.lane.b32.xlu0 %v2408, 112
    %v3159 = vpop.permute.xlu0 %3158
    %v3160 = vsel %vm496, %v3157, 0
    %v3162 = vsel %vm496, %v3159, 0
    %3164 = vmatprep.subr.mxu0 0.0
    %3165 = vmatpush1.xpose.msra.mxu0 0.0
    %3166 = vmatprep.subr.mxu0 0.0
    %3167 = vmatpush1.xpose.msra.mxu0 0.0
    %3168 = vmatprep.subr.mxu0 0.0
    %3169 = vmatpush1.xpose.msra.mxu0 0.0
    %3170 = vmatprep.subr.mxu0 0.0
    %3171 = vmatpush1.xpose.msra.mxu0 0.0
    %3172 = vmatprep.subr.mxu0 0.0
    %3173 = vmatpush1.xpose.msra.mxu0 0.0
    %3174 = vmatprep.subr.mxu0 0.0
    %3175 = vmatpush1.xpose.msra.mxu0 0.0
    %3176 = vmatprep.subr.mxu0 0.0
    %3177 = vmatpush1.xpose.msra.mxu0 0.0
    %3178 = vmatprep.subr.mxu0 0.0
    %3179 = vmatpush1.xpose.msra.mxu0 0.0
    %3180 = vmatprep.subr.mxu0 0.0
    %3181 = vmatpush1.xpose.msra.mxu0 0.0
    %3182 = vmatprep.subr.mxu0 0.0
    %3183 = vmatpush1.xpose.msra.mxu0 0.0
    %3184 = vmatprep.subr.mxu0 0.0
    %3185 = vmatpush1.xpose.msra.mxu0 0.0
    %3186 = vmatprep.subr.mxu0 0.0
    %3187 = vmatpush1.xpose.msra.mxu0 0.0
    %3188 = vmatprep.subr.mxu0 0.0
    %3189 = vmatpush1.xpose.msra.mxu0 0.0
    %3190 = vmatprep.subr.mxu0 0.0
    %3191 = vmatpush1.xpose.msra.mxu0 0.0
    %3192 = vmatprep.subr.mxu0 0.0
    %3193 = vmatpush1.xpose.msra.mxu0 0.0
    %3194 = vmatprep.subr.mxu0 0.0
    %3195 = vmatpush1.xpose.msra.mxu0 %v3162
    %3196 = vmatprep.subr.mxu0 0.0
    %3197 = vmatpush2.xpose.msra.mxu0 0.0
    %3198 = vmatprep.subr.mxu0 0.0
    %3199 = vmatpush2.xpose.msra.mxu0 0.0
    %3200 = vmatprep.subr.mxu0 0.0
    %3201 = vmatpush2.xpose.msra.mxu0 0.0
    %3202 = vmatprep.subr.mxu0 0.0
    %3203 = vmatpush2.xpose.msra.mxu0 0.0
    %3204 = vmatprep.subr.mxu0 0.0
    %3205 = vmatpush2.xpose.msra.mxu0 0.0
    %3206 = vmatprep.subr.mxu0 0.0
    %3207 = vmatpush2.xpose.msra.mxu0 0.0
    %3208 = vmatprep.subr.mxu0 0.0
    %3209 = vmatpush2.xpose.msra.mxu0 0.0
    %3210 = vmatprep.subr.mxu0 0.0
    %3211 = vmatpush2.xpose.msra.mxu0 0.0
    %3212 = vmatprep.subr.mxu0 0.0
    %3213 = vmatpush2.xpose.msra.mxu0 0.0
    %3214 = vmatprep.subr.mxu0 0.0
    %3215 = vmatpush2.xpose.msra.mxu0 0.0
    %3216 = vmatprep.subr.mxu0 0.0
    %3217 = vmatpush2.xpose.msra.mxu0 0.0
    %3218 = vmatprep.subr.mxu0 0.0
    %3219 = vmatpush2.xpose.msra.mxu0 0.0
    %3220 = vmatprep.subr.mxu0 0.0
    %3221 = vmatpush2.xpose.msra.mxu0 0.0
    %3222 = vmatprep.subr.mxu0 0.0
    %3223 = vmatpush2.xpose.msra.mxu0 0.0
    %3224 = vmatprep.subr.mxu0 0.0
    %3225 = vmatpush2.xpose.msra.mxu0 0.0
    %3226 = vmatprep.subr.mxu0 0.0
    %3227 = vmatpush2.xpose.msra.mxu0 0.0
    %3228 = vmatprep.mubr.f32.mxu0 0.0
    %3229 = vmatmul.mubr.f32.gmra.mxu0 %v3160
    %v3230 = vpop.f32.mrf.mxu0
    %v3231 = vadd.f32 %v185, %v3230
    %v3232 = vpop.f32.mrf.mxu0
    %3233 = vdwg.mxu0
    %3234 = vrot.lane.b32.xlu0 %v2325, 112
    %v3235 = vpop.permute.xlu0 %3234
    %3236 = vrot.lane.b32.xlu0 %v2413, 112
    %v3237 = vpop.permute.xlu0 %3236
    %v3238 = vsel %vm496, %v3235, 0
    %v3240 = vsel %vm496, %v3237, 0
    %3242 = vmatprep.subr.mxu0 0.0
    %3243 = vmatpush1.xpose.msra.mxu0 0.0
    %3244 = vmatprep.subr.mxu0 0.0
    %3245 = vmatpush1.xpose.msra.mxu0 0.0
    %3246 = vmatprep.subr.mxu0 0.0
    %3247 = vmatpush1.xpose.msra.mxu0 0.0
    %3248 = vmatprep.subr.mxu0 0.0
    %3249 = vmatpush1.xpose.msra.mxu0 0.0
    %3250 = vmatprep.subr.mxu0 0.0
    %3251 = vmatpush1.xpose.msra.mxu0 0.0
    %3252 = vmatprep.subr.mxu0 0.0
    %3253 = vmatpush1.xpose.msra.mxu0 0.0
    %3254 = vmatprep.subr.mxu0 0.0
    %3255 = vmatpush1.xpose.msra.mxu0 0.0
    %3256 = vmatprep.subr.mxu0 0.0
    %3257 = vmatpush1.xpose.msra.mxu0 0.0
    %3258 = vmatprep.subr.mxu0 0.0
    %3259 = vmatpush1.xpose.msra.mxu0 0.0
    %3260 = vmatprep.subr.mxu0 0.0
    %3261 = vmatpush1.xpose.msra.mxu0 0.0
    %3262 = vmatprep.subr.mxu0 0.0
    %3263 = vmatpush1.xpose.msra.mxu0 0.0
    %3264 = vmatprep.subr.mxu0 0.0
    %3265 = vmatpush1.xpose.msra.mxu0 0.0
    %3266 = vmatprep.subr.mxu0 0.0
    %3267 = vmatpush1.xpose.msra.mxu0 0.0
    %3268 = vmatprep.subr.mxu0 0.0
    %3269 = vmatpush1.xpose.msra.mxu0 0.0
    %3270 = vmatprep.subr.mxu0 0.0
    %3271 = vmatpush1.xpose.msra.mxu0 0.0
    %3272 = vmatprep.subr.mxu0 0.0
    %3273 = vmatpush1.xpose.msra.mxu0 %v3240
    %3274 = vmatprep.subr.mxu0 0.0
    %3275 = vmatpush2.xpose.msra.mxu0 0.0
    %3276 = vmatprep.subr.mxu0 0.0
    %3277 = vmatpush2.xpose.msra.mxu0 0.0
    %3278 = vmatprep.subr.mxu0 0.0
    %3279 = vmatpush2.xpose.msra.mxu0 0.0
    %3280 = vmatprep.subr.mxu0 0.0
    %3281 = vmatpush2.xpose.msra.mxu0 0.0
    %3282 = vmatprep.subr.mxu0 0.0
    %3283 = vmatpush2.xpose.msra.mxu0 0.0
    %3284 = vmatprep.subr.mxu0 0.0
    %3285 = vmatpush2.xpose.msra.mxu0 0.0
    %3286 = vmatprep.subr.mxu0 0.0
    %3287 = vmatpush2.xpose.msra.mxu0 0.0
    %3288 = vmatprep.subr.mxu0 0.0
    %3289 = vmatpush2.xpose.msra.mxu0 0.0
    %3290 = vmatprep.subr.mxu0 0.0
    %3291 = vmatpush2.xpose.msra.mxu0 0.0
    %3292 = vmatprep.subr.mxu0 0.0
    %3293 = vmatpush2.xpose.msra.mxu0 0.0
    %3294 = vmatprep.subr.mxu0 0.0
    %3295 = vmatpush2.xpose.msra.mxu0 0.0
    %3296 = vmatprep.subr.mxu0 0.0
    %3297 = vmatpush2.xpose.msra.mxu0 0.0
    %3298 = vmatprep.subr.mxu0 0.0
    %3299 = vmatpush2.xpose.msra.mxu0 0.0
    %3300 = vmatprep.subr.mxu0 0.0
    %3301 = vmatpush2.xpose.msra.mxu0 0.0
    %3302 = vmatprep.subr.mxu0 0.0
    %3303 = vmatpush2.xpose.msra.mxu0 0.0
    %3304 = vmatprep.subr.mxu0 0.0
    %3305 = vmatpush2.xpose.msra.mxu0 0.0
    %3306 = vmatprep.mubr.f32.mxu0 0.0
    %3307 = vmatmul.mubr.f32.gmra.mxu0 %v3238
    %v3308 = vpop.f32.mrf.mxu0
    %v3309 = vadd.f32 %v185, %v3308
    %v3310 = vpop.f32.mrf.mxu0
    %3311 = vdwg.mxu0
    %v3312 = vsel %vm496, %v3231, -inf
    %3313 = vmax.xlane.f32.xlu0 %v3312
    %v3314 = vpop.xlane.xlu0 %3313
    %v3315 = vsel %vm496, %v3309, -inf
    %3316 = vmax.xlane.f32.xlu0 %v3315
    %v3317 = vpop.xlane.xlu0 %3316
    %v3318 = vsub.f32 %v3231, %v3314
    %v3319 = vsub.f32 %v3309, %v3317
    %v3320 = vmul.f32 %v3318, 1.442695
    %v3321 = vpow.pop %v3320
    %v3322 = vmul.f32 %v3319, 1.442695
    %v3323 = vpow.pop %v3322
    %v3324 = vsel %vm496, %v3321, 0.0
    %3325 = vadd.xlane.f32.xlu0 %v3324
    %v3326 = vpop.xlane.xlu0 %3325
    %v3327 = vsel %vm496, %v3323, 0.0
    %3328 = vadd.xlane.f32.xlu0 %v3327
    %v3329 = vpop.xlane.xlu0 %3328
    %v3330 = vrcp.pop %v3326
    %v3331 = vrcp.pop %v3329
    %v3332 = vmul.f32 %v3321, %v3330
    %v3333 = vmul.f32 %v3323, %v3331
    %3334 = vrot.lane.b32.xlu0 %v2496, 112
    %v3335 = vpop.permute.xlu0 %3334
    %v3338 = vsel %vm496, %v3332, 0
    %3340 = vmatprep.subr.mxu0 0.0
    %3341 = vmatpush1.msra.mxu0 0.0
    %3342 = vmatprep.subr.mxu0 0.0
    %3343 = vmatpush1.msra.mxu0 0.0
    %3344 = vmatprep.subr.mxu0 0.0
    %3345 = vmatpush1.msra.mxu0 0.0
    %3346 = vmatprep.subr.mxu0 0.0
    %3347 = vmatpush1.msra.mxu0 0.0
    %3348 = vmatprep.subr.mxu0 0.0
    %3349 = vmatpush1.msra.mxu0 0.0
    %3350 = vmatprep.subr.mxu0 0.0
    %3351 = vmatpush1.msra.mxu0 0.0
    %3352 = vmatprep.subr.mxu0 0.0
    %3353 = vmatpush1.msra.mxu0 0.0
    %3354 = vmatprep.subr.mxu0 0.0
    %3355 = vmatpush1.msra.mxu0 0.0
    %3356 = vmatprep.subr.mxu0 0.0
    %3357 = vmatpush1.msra.mxu0 0.0
    %3358 = vmatprep.subr.mxu0 0.0
    %3359 = vmatpush1.msra.mxu0 0.0
    %3360 = vmatprep.subr.mxu0 0.0
    %3361 = vmatpush1.msra.mxu0 0.0
    %3362 = vmatprep.subr.mxu0 0.0
    %3363 = vmatpush1.msra.mxu0 0.0
    %3364 = vmatprep.subr.mxu0 0.0
    %3365 = vmatpush1.msra.mxu0 0.0
    %3366 = vmatprep.subr.mxu0 0.0
    %3367 = vmatpush1.msra.mxu0 0.0
    %3368 = vmatprep.subr.mxu0 0.0
    %3369 = vmatpush1.msra.mxu0 0.0
    %3370 = vmatprep.subr.mxu0 0.0
    %3371 = vmatpush1.msra.mxu0 %v3335
    %3372 = vmatprep.subr.mxu0 0.0
    %3373 = vmatpush2.msra.mxu0 0.0
    %3374 = vmatprep.subr.mxu0 0.0
    %3375 = vmatpush2.msra.mxu0 0.0
    %3376 = vmatprep.subr.mxu0 0.0
    %3377 = vmatpush2.msra.mxu0 0.0
    %3378 = vmatprep.subr.mxu0 0.0
    %3379 = vmatpush2.msra.mxu0 0.0
    %3380 = vmatprep.subr.mxu0 0.0
    %3381 = vmatpush2.msra.mxu0 0.0
    %3382 = vmatprep.subr.mxu0 0.0
    %3383 = vmatpush2.msra.mxu0 0.0
    %3384 = vmatprep.subr.mxu0 0.0
    %3385 = vmatpush2.msra.mxu0 0.0
    %3386 = vmatprep.subr.mxu0 0.0
    %3387 = vmatpush2.msra.mxu0 0.0
    %3388 = vmatprep.subr.mxu0 0.0
    %3389 = vmatpush2.msra.mxu0 0.0
    %3390 = vmatprep.subr.mxu0 0.0
    %3391 = vmatpush2.msra.mxu0 0.0
    %3392 = vmatprep.subr.mxu0 0.0
    %3393 = vmatpush2.msra.mxu0 0.0
    %3394 = vmatprep.subr.mxu0 0.0
    %3395 = vmatpush2.msra.mxu0 0.0
    %3396 = vmatprep.subr.mxu0 0.0
    %3397 = vmatpush2.msra.mxu0 0.0
    %3398 = vmatprep.subr.mxu0 0.0
    %3399 = vmatpush2.msra.mxu0 0.0
    %3400 = vmatprep.subr.mxu0 0.0
    %3401 = vmatpush2.msra.mxu0 0.0
    %3402 = vmatprep.subr.mxu0 0.0
    %3403 = vmatpush2.msra.mxu0 0.0
    %3404 = vmatprep.mubr.f32.mxu0 0.0
    %3405 = vmatmul.mubr.f32.gmra.mxu0 %v3338
    %v3406 = vpop.f32.mrf.mxu0
    %v3407 = vadd.f32 0.0, %v3406
    %v3408 = vpop.f32.mrf.mxu0
    %3409 = vdwg.mxu0
    %3410 = vrot.lane.b32.xlu0 %v2501, 112
    %v3411 = vpop.permute.xlu0 %3410
    %v3414 = vsel %vm496, %v3333, 0
    %3416 = vmatprep.subr.mxu0 0.0
    %3417 = vmatpush1.msra.mxu0 0.0
    %3418 = vmatprep.subr.mxu0 0.0
    %3419 = vmatpush1.msra.mxu0 0.0
    %3420 = vmatprep.subr.mxu0 0.0
    %3421 = vmatpush1.msra.mxu0 0.0
    %3422 = vmatprep.subr.mxu0 0.0
    %3423 = vmatpush1.msra.mxu0 0.0
    %3424 = vmatprep.subr.mxu0 0.0
    %3425 = vmatpush1.msra.mxu0 0.0
    %3426 = vmatprep.subr.mxu0 0.0
    %3427 = vmatpush1.msra.mxu0 0.0
    %3428 = vmatprep.subr.mxu0 0.0
    %3429 = vmatpush1.msra.mxu0 0.0
    %3430 = vmatprep.subr.mxu0 0.0
    %3431 = vmatpush1.msra.mxu0 0.0
    %3432 = vmatprep.subr.mxu0 0.0
    %3433 = vmatpush1.msra.mxu0 0.0
    %3434 = vmatprep.subr.mxu0 0.0
    %3435 = vmatpush1.msra.mxu0 0.0
    %3436 = vmatprep.subr.mxu0 0.0
    %3437 = vmatpush1.msra.mxu0 0.0
    %3438 = vmatprep.subr.mxu0 0.0
    %3439 = vmatpush1.msra.mxu0 0.0
    %3440 = vmatprep.subr.mxu0 0.0
    %3441 = vmatpush1.msra.mxu0 0.0
    %3442 = vmatprep.subr.mxu0 0.0
    %3443 = vmatpush1.msra.mxu0 0.0
    %3444 = vmatprep.subr.mxu0 0.0
    %3445 = vmatpush1.msra.mxu0 0.0
    %3446 = vmatprep.subr.mxu0 0.0
    %3447 = vmatpush1.msra.mxu0 %v3411
    %3448 = vmatprep.subr.mxu0 0.0
    %3449 = vmatpush2.msra.mxu0 0.0
    %3450 = vmatprep.subr.mxu0 0.0
    %3451 = vmatpush2.msra.mxu0 0.0
    %3452 = vmatprep.subr.mxu0 0.0
    %3453 = vmatpush2.msra.mxu0 0.0
    %3454 = vmatprep.subr.mxu0 0.0
    %3455 = vmatpush2.msra.mxu0 0.0
    %3456 = vmatprep.subr.mxu0 0.0
    %3457 = vmatpush2.msra.mxu0 0.0
    %3458 = vmatprep.subr.mxu0 0.0
    %3459 = vmatpush2.msra.mxu0 0.0
    %3460 = vmatprep.subr.mxu0 0.0
    %3461 = vmatpush2.msra.mxu0 0.0
    %3462 = vmatprep.subr.mxu0 0.0
    %3463 = vmatpush2.msra.mxu0 0.0
    %3464 = vmatprep.subr.mxu0 0.0
    %3465 = vmatpush2.msra.mxu0 0.0
    %3466 = vmatprep.subr.mxu0 0.0
    %3467 = vmatpush2.msra.mxu0 0.0
    %3468 = vmatprep.subr.mxu0 0.0
    %3469 = vmatpush2.msra.mxu0 0.0
    %3470 = vmatprep.subr.mxu0 0.0
    %3471 = vmatpush2.msra.mxu0 0.0
    %3472 = vmatprep.subr.mxu0 0.0
    %3473 = vmatpush2.msra.mxu0 0.0
    %3474 = vmatprep.subr.mxu0 0.0
    %3475 = vmatpush2.msra.mxu0 0.0
    %3476 = vmatprep.subr.mxu0 0.0
    %3477 = vmatpush2.msra.mxu0 0.0
    %3478 = vmatprep.subr.mxu0 0.0
    %3479 = vmatpush2.msra.mxu0 0.0
    %3480 = vmatprep.mubr.f32.mxu0 0.0
    %3481 = vmatmul.mubr.f32.gmra.mxu0 %v3414
    %v3482 = vpop.f32.mrf.mxu0
    %v3483 = vadd.f32 0.0, %v3482
    %v3484 = vpop.f32.mrf.mxu0
    %3485 = vdwg.mxu0
    %3486 = vrot.lane.b32.xlu0 %v2320, 104
    %v3487 = vpop.permute.xlu0 %3486
    %3488 = vrot.lane.b32.xlu0 %v2408, 104
    %v3489 = vpop.permute.xlu0 %3488
    %v3490 = vsel %vm496, %v3487, 0
    %v3492 = vsel %vm496, %v3489, 0
    %3494 = vmatprep.subr.mxu0 0.0
    %3495 = vmatpush1.xpose.msra.mxu0 0.0
    %3496 = vmatprep.subr.mxu0 0.0
    %3497 = vmatpush1.xpose.msra.mxu0 0.0
    %3498 = vmatprep.subr.mxu0 0.0
    %3499 = vmatpush1.xpose.msra.mxu0 0.0
    %3500 = vmatprep.subr.mxu0 0.0
    %3501 = vmatpush1.xpose.msra.mxu0 0.0
    %3502 = vmatprep.subr.mxu0 0.0
    %3503 = vmatpush1.xpose.msra.mxu0 0.0
    %3504 = vmatprep.subr.mxu0 0.0
    %3505 = vmatpush1.xpose.msra.mxu0 0.0
    %3506 = vmatprep.subr.mxu0 0.0
    %3507 = vmatpush1.xpose.msra.mxu0 0.0
    %3508 = vmatprep.subr.mxu0 0.0
    %3509 = vmatpush1.xpose.msra.mxu0 0.0
    %3510 = vmatprep.subr.mxu0 0.0
    %3511 = vmatpush1.xpose.msra.mxu0 0.0
    %3512 = vmatprep.subr.mxu0 0.0
    %3513 = vmatpush1.xpose.msra.mxu0 0.0
    %3514 = vmatprep.subr.mxu0 0.0
    %3515 = vmatpush1.xpose.msra.mxu0 0.0
    %3516 = vmatprep.subr.mxu0 0.0
    %3517 = vmatpush1.xpose.msra.mxu0 0.0
    %3518 = vmatprep.subr.mxu0 0.0
    %3519 = vmatpush1.xpose.msra.mxu0 0.0
    %3520 = vmatprep.subr.mxu0 0.0
    %3521 = vmatpush1.xpose.msra.mxu0 0.0
    %3522 = vmatprep.subr.mxu0 0.0
    %3523 = vmatpush1.xpose.msra.mxu0 0.0
    %3524 = vmatprep.subr.mxu0 0.0
    %3525 = vmatpush1.xpose.msra.mxu0 %v3492
    %3526 = vmatprep.subr.mxu0 0.0
    %3527 = vmatpush2.xpose.msra.mxu0 0.0
    %3528 = vmatprep.subr.mxu0 0.0
    %3529 = vmatpush2.xpose.msra.mxu0 0.0
    %3530 = vmatprep.subr.mxu0 0.0
    %3531 = vmatpush2.xpose.msra.mxu0 0.0
    %3532 = vmatprep.subr.mxu0 0.0
    %3533 = vmatpush2.xpose.msra.mxu0 0.0
    %3534 = vmatprep.subr.mxu0 0.0
    %3535 = vmatpush2.xpose.msra.mxu0 0.0
    %3536 = vmatprep.subr.mxu0 0.0
    %3537 = vmatpush2.xpose.msra.mxu0 0.0
    %3538 = vmatprep.subr.mxu0 0.0
    %3539 = vmatpush2.xpose.msra.mxu0 0.0
    %3540 = vmatprep.subr.mxu0 0.0
    %3541 = vmatpush2.xpose.msra.mxu0 0.0
    %3542 = vmatprep.subr.mxu0 0.0
    %3543 = vmatpush2.xpose.msra.mxu0 0.0
    %3544 = vmatprep.subr.mxu0 0.0
    %3545 = vmatpush2.xpose.msra.mxu0 0.0
    %3546 = vmatprep.subr.mxu0 0.0
    %3547 = vmatpush2.xpose.msra.mxu0 0.0
    %3548 = vmatprep.subr.mxu0 0.0
    %3549 = vmatpush2.xpose.msra.mxu0 0.0
    %3550 = vmatprep.subr.mxu0 0.0
    %3551 = vmatpush2.xpose.msra.mxu0 0.0
    %3552 = vmatprep.subr.mxu0 0.0
    %3553 = vmatpush2.xpose.msra.mxu0 0.0
    %3554 = vmatprep.subr.mxu0 0.0
    %3555 = vmatpush2.xpose.msra.mxu0 0.0
    %3556 = vmatprep.subr.mxu0 0.0
    %3557 = vmatpush2.xpose.msra.mxu0 0.0
    %3558 = vmatprep.mubr.f32.mxu0 0.0
    %3559 = vmatmul.mubr.f32.gmra.mxu0 %v3490
    %v3560 = vpop.f32.mrf.mxu0
    %v3561 = vadd.f32 %v185, %v3560
    %v3562 = vpop.f32.mrf.mxu0
    %3563 = vdwg.mxu0
    %3564 = vrot.lane.b32.xlu0 %v2325, 104
    %v3565 = vpop.permute.xlu0 %3564
    %3566 = vrot.lane.b32.xlu0 %v2413, 104
    %v3567 = vpop.permute.xlu0 %3566
    %v3568 = vsel %vm496, %v3565, 0
    %v3570 = vsel %vm496, %v3567, 0
    %3572 = vmatprep.subr.mxu0 0.0
    %3573 = vmatpush1.xpose.msra.mxu0 0.0
    %3574 = vmatprep.subr.mxu0 0.0
    %3575 = vmatpush1.xpose.msra.mxu0 0.0
    %3576 = vmatprep.subr.mxu0 0.0
    %3577 = vmatpush1.xpose.msra.mxu0 0.0
    %3578 = vmatprep.subr.mxu0 0.0
    %3579 = vmatpush1.xpose.msra.mxu0 0.0
    %3580 = vmatprep.subr.mxu0 0.0
    %3581 = vmatpush1.xpose.msra.mxu0 0.0
    %3582 = vmatprep.subr.mxu0 0.0
    %3583 = vmatpush1.xpose.msra.mxu0 0.0
    %3584 = vmatprep.subr.mxu0 0.0
    %3585 = vmatpush1.xpose.msra.mxu0 0.0
    %3586 = vmatprep.subr.mxu0 0.0
    %3587 = vmatpush1.xpose.msra.mxu0 0.0
    %3588 = vmatprep.subr.mxu0 0.0
    %3589 = vmatpush1.xpose.msra.mxu0 0.0
    %3590 = vmatprep.subr.mxu0 0.0
    %3591 = vmatpush1.xpose.msra.mxu0 0.0
    %3592 = vmatprep.subr.mxu0 0.0
    %3593 = vmatpush1.xpose.msra.mxu0 0.0
    %3594 = vmatprep.subr.mxu0 0.0
    %3595 = vmatpush1.xpose.msra.mxu0 0.0
    %3596 = vmatprep.subr.mxu0 0.0
    %3597 = vmatpush1.xpose.msra.mxu0 0.0
    %3598 = vmatprep.subr.mxu0 0.0
    %3599 = vmatpush1.xpose.msra.mxu0 0.0
    %3600 = vmatprep.subr.mxu0 0.0
    %3601 = vmatpush1.xpose.msra.mxu0 0.0
    %3602 = vmatprep.subr.mxu0 0.0
    %3603 = vmatpush1.xpose.msra.mxu0 %v3570
    %3604 = vmatprep.subr.mxu0 0.0
    %3605 = vmatpush2.xpose.msra.mxu0 0.0
    %3606 = vmatprep.subr.mxu0 0.0
    %3607 = vmatpush2.xpose.msra.mxu0 0.0
    %3608 = vmatprep.subr.mxu0 0.0
    %3609 = vmatpush2.xpose.msra.mxu0 0.0
    %3610 = vmatprep.subr.mxu0 0.0
    %3611 = vmatpush2.xpose.msra.mxu0 0.0
    %3612 = vmatprep.subr.mxu0 0.0
    %3613 = vmatpush2.xpose.msra.mxu0 0.0
    %3614 = vmatprep.subr.mxu0 0.0
    %3615 = vmatpush2.xpose.msra.mxu0 0.0
    %3616 = vmatprep.subr.mxu0 0.0
    %3617 = vmatpush2.xpose.msra.mxu0 0.0
    %3618 = vmatprep.subr.mxu0 0.0
    %3619 = vmatpush2.xpose.msra.mxu0 0.0
    %3620 = vmatprep.subr.mxu0 0.0
    %3621 = vmatpush2.xpose.msra.mxu0 0.0
    %3622 = vmatprep.subr.mxu0 0.0
    %3623 = vmatpush2.xpose.msra.mxu0 0.0
    %3624 = vmatprep.subr.mxu0 0.0
    %3625 = vmatpush2.xpose.msra.mxu0 0.0
    %3626 = vmatprep.subr.mxu0 0.0
    %3627 = vmatpush2.xpose.msra.mxu0 0.0
    %3628 = vmatprep.subr.mxu0 0.0
    %3629 = vmatpush2.xpose.msra.mxu0 0.0
    %3630 = vmatprep.subr.mxu0 0.0
    %3631 = vmatpush2.xpose.msra.mxu0 0.0
    %3632 = vmatprep.subr.mxu0 0.0
    %3633 = vmatpush2.xpose.msra.mxu0 0.0
    %3634 = vmatprep.subr.mxu0 0.0
    %3635 = vmatpush2.xpose.msra.mxu0 0.0
    %3636 = vmatprep.mubr.f32.mxu0 0.0
    %3637 = vmatmul.mubr.f32.gmra.mxu0 %v3568
    %v3638 = vpop.f32.mrf.mxu0
    %v3639 = vadd.f32 %v185, %v3638
    %v3640 = vpop.f32.mrf.mxu0
    %3641 = vdwg.mxu0
    %v3642 = vsel %vm496, %v3561, -inf
    %3643 = vmax.xlane.f32.xlu0 %v3642
    %v3644 = vpop.xlane.xlu0 %3643
    %v3645 = vsel %vm496, %v3639, -inf
    %3646 = vmax.xlane.f32.xlu0 %v3645
    %v3647 = vpop.xlane.xlu0 %3646
    %v3648 = vsub.f32 %v3561, %v3644
    %v3649 = vsub.f32 %v3639, %v3647
    %v3650 = vmul.f32 %v3648, 1.442695
    %v3651 = vpow.pop %v3650
    %v3652 = vmul.f32 %v3649, 1.442695
    %v3653 = vpow.pop %v3652
    %v3654 = vsel %vm496, %v3651, 0.0
    %3655 = vadd.xlane.f32.xlu0 %v3654
    %v3656 = vpop.xlane.xlu0 %3655
    %v3657 = vsel %vm496, %v3653, 0.0
    %3658 = vadd.xlane.f32.xlu0 %v3657
    %v3659 = vpop.xlane.xlu0 %3658
    %v3660 = vrcp.pop %v3656
    %v3661 = vrcp.pop %v3659
    %v3662 = vmul.f32 %v3651, %v3660
    %v3663 = vmul.f32 %v3653, %v3661
    %3664 = vrot.lane.b32.xlu0 %v2496, 104
    %v3665 = vpop.permute.xlu0 %3664
    %v3668 = vsel %vm496, %v3662, 0
    %3670 = vmatprep.subr.mxu0 0.0
    %3671 = vmatpush1.msra.mxu0 0.0
    %3672 = vmatprep.subr.mxu0 0.0
    %3673 = vmatpush1.msra.mxu0 0.0
    %3674 = vmatprep.subr.mxu0 0.0
    %3675 = vmatpush1.msra.mxu0 0.0
    %3676 = vmatprep.subr.mxu0 0.0
    %3677 = vmatpush1.msra.mxu0 0.0
    %3678 = vmatprep.subr.mxu0 0.0
    %3679 = vmatpush1.msra.mxu0 0.0
    %3680 = vmatprep.subr.mxu0 0.0
    %3681 = vmatpush1.msra.mxu0 0.0
    %3682 = vmatprep.subr.mxu0 0.0
    %3683 = vmatpush1.msra.mxu0 0.0
    %3684 = vmatprep.subr.mxu0 0.0
    %3685 = vmatpush1.msra.mxu0 0.0
    %3686 = vmatprep.subr.mxu0 0.0
    %3687 = vmatpush1.msra.mxu0 0.0
    %3688 = vmatprep.subr.mxu0 0.0
    %3689 = vmatpush1.msra.mxu0 0.0
    %3690 = vmatprep.subr.mxu0 0.0
    %3691 = vmatpush1.msra.mxu0 0.0
    %3692 = vmatprep.subr.mxu0 0.0
    %3693 = vmatpush1.msra.mxu0 0.0
    %3694 = vmatprep.subr.mxu0 0.0
    %3695 = vmatpush1.msra.mxu0 0.0
    %3696 = vmatprep.subr.mxu0 0.0
    %3697 = vmatpush1.msra.mxu0 0.0
    %3698 = vmatprep.subr.mxu0 0.0
    %3699 = vmatpush1.msra.mxu0 0.0
    %3700 = vmatprep.subr.mxu0 0.0
    %3701 = vmatpush1.msra.mxu0 %v3665
    %3702 = vmatprep.subr.mxu0 0.0
    %3703 = vmatpush2.msra.mxu0 0.0
    %3704 = vmatprep.subr.mxu0 0.0
    %3705 = vmatpush2.msra.mxu0 0.0
    %3706 = vmatprep.subr.mxu0 0.0
    %3707 = vmatpush2.msra.mxu0 0.0
    %3708 = vmatprep.subr.mxu0 0.0
    %3709 = vmatpush2.msra.mxu0 0.0
    %3710 = vmatprep.subr.mxu0 0.0
    %3711 = vmatpush2.msra.mxu0 0.0
    %3712 = vmatprep.subr.mxu0 0.0
    %3713 = vmatpush2.msra.mxu0 0.0
    %3714 = vmatprep.subr.mxu0 0.0
    %3715 = vmatpush2.msra.mxu0 0.0
    %3716 = vmatprep.subr.mxu0 0.0
    %3717 = vmatpush2.msra.mxu0 0.0
    %3718 = vmatprep.subr.mxu0 0.0
    %3719 = vmatpush2.msra.mxu0 0.0
    %3720 = vmatprep.subr.mxu0 0.0
    %3721 = vmatpush2.msra.mxu0 0.0
    %3722 = vmatprep.subr.mxu0 0.0
    %3723 = vmatpush2.msra.mxu0 0.0
    %3724 = vmatprep.subr.mxu0 0.0
    %3725 = vmatpush2.msra.mxu0 0.0
    %3726 = vmatprep.subr.mxu0 0.0
    %3727 = vmatpush2.msra.mxu0 0.0
    %3728 = vmatprep.subr.mxu0 0.0
    %3729 = vmatpush2.msra.mxu0 0.0
    %3730 = vmatprep.subr.mxu0 0.0
    %3731 = vmatpush2.msra.mxu0 0.0
    %3732 = vmatprep.subr.mxu0 0.0
    %3733 = vmatpush2.msra.mxu0 0.0
    %3734 = vmatprep.mubr.f32.mxu0 0.0
    %3735 = vmatmul.mubr.f32.gmra.mxu0 %v3668
    %v3736 = vpop.f32.mrf.mxu0
    %v3737 = vadd.f32 0.0, %v3736
    %v3738 = vpop.f32.mrf.mxu0
    %3739 = vdwg.mxu0
    %3740 = vrot.lane.b32.xlu0 %v2501, 104
    %v3741 = vpop.permute.xlu0 %3740
    %v3744 = vsel %vm496, %v3663, 0
    %3746 = vmatprep.subr.mxu0 0.0
    %3747 = vmatpush1.msra.mxu0 0.0
    %3748 = vmatprep.subr.mxu0 0.0
    %3749 = vmatpush1.msra.mxu0 0.0
    %3750 = vmatprep.subr.mxu0 0.0
    %3751 = vmatpush1.msra.mxu0 0.0
    %3752 = vmatprep.subr.mxu0 0.0
    %3753 = vmatpush1.msra.mxu0 0.0
    %3754 = vmatprep.subr.mxu0 0.0
    %3755 = vmatpush1.msra.mxu0 0.0
    %3756 = vmatprep.subr.mxu0 0.0
    %3757 = vmatpush1.msra.mxu0 0.0
    %3758 = vmatprep.subr.mxu0 0.0
    %3759 = vmatpush1.msra.mxu0 0.0
    %3760 = vmatprep.subr.mxu0 0.0
    %3761 = vmatpush1.msra.mxu0 0.0
    %3762 = vmatprep.subr.mxu0 0.0
    %3763 = vmatpush1.msra.mxu0 0.0
    %3764 = vmatprep.subr.mxu0 0.0
    %3765 = vmatpush1.msra.mxu0 0.0
    %3766 = vmatprep.subr.mxu0 0.0
    %3767 = vmatpush1.msra.mxu0 0.0
    %3768 = vmatprep.subr.mxu0 0.0
    %3769 = vmatpush1.msra.mxu0 0.0
    %3770 = vmatprep.subr.mxu0 0.0
    %3771 = vmatpush1.msra.mxu0 0.0
    %3772 = vmatprep.subr.mxu0 0.0
    %3773 = vmatpush1.msra.mxu0 0.0
    %3774 = vmatprep.subr.mxu0 0.0
    %3775 = vmatpush1.msra.mxu0 0.0
    %3776 = vmatprep.subr.mxu0 0.0
    %3777 = vmatpush1.msra.mxu0 %v3741
    %3778 = vmatprep.subr.mxu0 0.0
    %3779 = vmatpush2.msra.mxu0 0.0
    %3780 = vmatprep.subr.mxu0 0.0
    %3781 = vmatpush2.msra.mxu0 0.0
    %3782 = vmatprep.subr.mxu0 0.0
    %3783 = vmatpush2.msra.mxu0 0.0
    %3784 = vmatprep.subr.mxu0 0.0
    %3785 = vmatpush2.msra.mxu0 0.0
    %3786 = vmatprep.subr.mxu0 0.0
    %3787 = vmatpush2.msra.mxu0 0.0
    %3788 = vmatprep.subr.mxu0 0.0
    %3789 = vmatpush2.msra.mxu0 0.0
    %3790 = vmatprep.subr.mxu0 0.0
    %3791 = vmatpush2.msra.mxu0 0.0
    %3792 = vmatprep.subr.mxu0 0.0
    %3793 = vmatpush2.msra.mxu0 0.0
    %3794 = vmatprep.subr.mxu0 0.0
    %3795 = vmatpush2.msra.mxu0 0.0
    %3796 = vmatprep.subr.mxu0 0.0
    %3797 = vmatpush2.msra.mxu0 0.0
    %3798 = vmatprep.subr.mxu0 0.0
    %3799 = vmatpush2.msra.mxu0 0.0
    %3800 = vmatprep.subr.mxu0 0.0
    %3801 = vmatpush2.msra.mxu0 0.0
    %3802 = vmatprep.subr.mxu0 0.0
    %3803 = vmatpush2.msra.mxu0 0.0
    %3804 = vmatprep.subr.mxu0 0.0
    %3805 = vmatpush2.msra.mxu0 0.0
    %3806 = vmatprep.subr.mxu0 0.0
    %3807 = vmatpush2.msra.mxu0 0.0
    %3808 = vmatprep.subr.mxu0 0.0
    %3809 = vmatpush2.msra.mxu0 0.0
    %3810 = vmatprep.mubr.f32.mxu0 0.0
    %3811 = vmatmul.mubr.f32.gmra.mxu0 %v3744
    %v3812 = vpop.f32.mrf.mxu0
    %v3813 = vadd.f32 0.0, %v3812
    %v3814 = vpop.f32.mrf.mxu0
    %3815 = vdwg.mxu0
    %3818 = vrot.lane.b32.xlu0 %v3076, 8
    %v3819 = vpop.permute.xlu0 %3818
    %3820 = vrot.lane.b32.xlu0 %v3153, 8
    %v3821 = vpop.permute.xlu0 %3820
    %3826 = vrot.lane.b32.xlu0 %v3407, 16
    %v3827 = vpop.permute.xlu0 %3826
    %3828 = vrot.lane.b32.xlu0 %v3483, 16
    %v3829 = vpop.permute.xlu0 %3828
    %3834 = vrot.lane.b32.xlu0 %v3737, 24
    %v3835 = vpop.permute.xlu0 %3834
    %3836 = vrot.lane.b32.xlu0 %v3813, 24
    %v3837 = vpop.permute.xlu0 %3836
    %v3840 = vsel %vm496, %v2748, %v3819
    %v3841 = vsel %vm496, %v2821, %v3821
    %v3842 = vsel %vm1835, %v3840, %v3827
    %v3843 = vsel %vm1835, %v3841, %v3829
    %v3844 = vsel %vm1838, %v3842, %v3835
    %v3845 = vsel %vm1838, %v3843, %v3837
    %s3846 = scalar_lea.vmem %s11, 32
    %v3847 = vld [vmem:[%s3846] sm:$0xff]
    %v3848 = vld [vmem:[%s3846 + $0x8] sm:$0xff]
    %v3849 = vld [vmem:[%s3846 + $0x10] sm:$0xff]
    %v3850 = vld [vmem:[%s3846 + $0x18] sm:$0xff]
    %s3851 = scalar_lea.vmem %s12, 1
    %v3852 = vld [vmem:[%s3851] sm:$0x1]
    %v3854 = vlaneseq
    %v3855 = vshrl.u32 %v3854, 7
    %v3856 = vsub.s32 0, %v3855
    %v3857 = vrot.slane %v3852, %v3856
    %v3860 = vsel %vm188, %v3844, 0
    %v3863 = vsel %vm188, %v3845, 0
    %3865 = vmatprep.subr.mxu0 0.0
    %3866 = vmatpush1.msra.mxu0 0.0
    %3867 = vmatprep.subr.mxu0 0.0
    %3868 = vmatpush1.msra.mxu0 0.0
    %3869 = vmatprep.subr.mxu0 0.0
    %3870 = vmatpush1.msra.mxu0 0.0
    %3871 = vmatprep.subr.mxu0 0.0
    %3872 = vmatpush1.msra.mxu0 0.0
    %3873 = vmatprep.subr.mxu0 0.0
    %3874 = vmatpush1.msra.mxu0 0.0
    %3875 = vmatprep.subr.mxu0 0.0
    %3876 = vmatpush1.msra.mxu0 0.0
    %3877 = vmatprep.subr.mxu0 0.0
    %3878 = vmatpush1.msra.mxu0 0.0
    %3879 = vmatprep.subr.mxu0 0.0
    %3880 = vmatpush1.msra.mxu0 0.0
    %3881 = vmatprep.subr.mxu0 0.0
    %3882 = vmatpush1.msra.mxu0 0.0
    %3883 = vmatprep.subr.mxu0 0.0
    %3884 = vmatpush1.msra.mxu0 0.0
    %3885 = vmatprep.subr.mxu0 0.0
    %3886 = vmatpush1.msra.mxu0 0.0
    %3887 = vmatprep.subr.mxu0 0.0
    %3888 = vmatpush1.msra.mxu0 0.0
    %3889 = vmatprep.subr.mxu0 0.0
    %3890 = vmatpush1.msra.mxu0 %v3850
    %3891 = vmatprep.subr.mxu0 0.0
    %3892 = vmatpush1.msra.mxu0 %v3849
    %3893 = vmatprep.subr.mxu0 0.0
    %3894 = vmatpush1.msra.mxu0 %v3848
    %3895 = vmatprep.subr.mxu0 0.0
    %3896 = vmatpush1.msra.mxu0 %v3847
    %3897 = vmatprep.subr.mxu0 0.0
    %3898 = vmatpush2.msra.mxu0 0.0
    %3899 = vmatprep.subr.mxu0 0.0
    %3900 = vmatpush2.msra.mxu0 0.0
    %3901 = vmatprep.subr.mxu0 0.0
    %3902 = vmatpush2.msra.mxu0 0.0
    %3903 = vmatprep.subr.mxu0 0.0
    %3904 = vmatpush2.msra.mxu0 0.0
    %3905 = vmatprep.subr.mxu0 0.0
    %3906 = vmatpush2.msra.mxu0 0.0
    %3907 = vmatprep.subr.mxu0 0.0
    %3908 = vmatpush2.msra.mxu0 0.0
    %3909 = vmatprep.subr.mxu0 0.0
    %3910 = vmatpush2.msra.mxu0 0.0
    %3911 = vmatprep.subr.mxu0 0.0
    %3912 = vmatpush2.msra.mxu0 0.0
    %3913 = vmatprep.subr.mxu0 0.0
    %3914 = vmatpush2.msra.mxu0 0.0
    %3915 = vmatprep.subr.mxu0 0.0
    %3916 = vmatpush2.msra.mxu0 0.0
    %3917 = vmatprep.subr.mxu0 0.0
    %3918 = vmatpush2.msra.mxu0 0.0
    %3919 = vmatprep.subr.mxu0 0.0
    %3920 = vmatpush2.msra.mxu0 0.0
    %3921 = vmatprep.subr.mxu0 0.0
    %3922 = vmatpush2.msra.mxu0 0.0
    %3923 = vmatprep.subr.mxu0 0.0
    %3924 = vmatpush2.msra.mxu0 0.0
    %3925 = vmatprep.subr.mxu0 0.0
    %3926 = vmatpush2.msra.mxu0 0.0
    %3927 = vmatprep.subr.mxu0 0.0
    %3928 = vmatpush2.msra.mxu0 0.0
    %3929 = vmatprep.mubr.f32.mxu0 0.0
    %3930 = vmatmul.mubr.f32.gmra.mxu0 %v3860
    %v3931 = vpop.f32.mrf.mxu0
    %v3932 = vadd.f32 %v3857, %v3931
    %v3933 = vpop.f32.mrf.mxu0
    %3934 = vmatprep.mubr.f32.mxu0 0.0
    %3935 = vmatmul.mubr.f32.gmra.mxu0 %v3863
    %v3936 = vpop.f32.mrf.mxu0
    %v3937 = vadd.f32 %v3857, %v3936
    %v3938 = vpop.f32.mrf.mxu0
    %3939 = vdwg.mxu0
    %v3940 = vadd.f32 %v2186, %v3932
    %v3941 = vadd.f32 %v2187, %v3937
    %s3942 = scalar_lea.vmem %s13, 1
    %v3943 = vld [vmem:[%s3942] sm:$0x1]
    %s3944 = scalar_lea.vmem %s14, 1
    %v3945 = vld [vmem:[%s3944] sm:$0x1]
    %v3946 = vsel %vm188, %v3940, 0.0
    %3947 = vadd.xlane.f32.xlu0 %v3946
    %v3948 = vpop.xlane.xlu0 %3947
    %v3949 = vsel %vm188, %v3941, 0.0
    %3950 = vadd.xlane.f32.xlu0 %v3949
    %v3951 = vpop.xlane.xlu0 %3950
    %v3952 = vmul.f32 %v3948, %v195
    %v3953 = vmul.f32 %v3951, %v195
    %v3954 = vsub.f32 %v3940, %v3952
    %v3955 = vsub.f32 %v3941, %v3953
    %v3956 = vmul.f32 %v3954, %v3954
    %v3957 = vmul.f32 %v3955, %v3955
    %v3958 = vsel %vm188, %v3956, 0.0
    %3959 = vadd.xlane.f32.xlu0 %v3958
    %v3960 = vpop.xlane.xlu0 %3959
    %v3961 = vsel %vm188, %v3957, 0.0
    %3962 = vadd.xlane.f32.xlu0 %v3961
    %v3963 = vpop.xlane.xlu0 %3962
    %v3964 = vmul.f32 %v3960, %v195
    %v3965 = vmul.f32 %v3963, %v195
    %v3966 = vadd.f32 %v3964, 1e-05
    %v3967 = vadd.f32 %v3965, 1e-05
    %v3968 = vrsqrt.pop %v3966
    %v3969 = vrsqrt.pop %v3967
    %v3970 = vmul.f32 %v3954, %v3968
    %v3971 = vmul.f32 %v3955, %v3969
    %v3973 = vlaneseq
    %v3974 = vshrl.u32 %v3973, 7
    %v3975 = vsub.s32 0, %v3974
    %v3976 = vrot.slane %v3943, %v3975
    %v3978 = vmul.f32 %v3970, %v3976
    %v3979 = vmul.f32 %v3971, %v3976
    %v3981 = vlaneseq
    %v3982 = vshrl.u32 %v3981, 7
    %v3983 = vsub.s32 0, %v3982
    %v3984 = vrot.slane %v3945, %v3983
    %v3986 = vadd.f32 %v3978, %v3984
    %v3987 = vadd.f32 %v3979, %v3984
    %s3988 = scalar_lea.vmem %s15, 32
    %v3989 = vld [vmem:[%s3988] sm:$0xff]
    %v3990 = vld [vmem:[%s3988 + $0x8] sm:$0xff]
    %v3991 = vld [vmem:[%s3988 + $0x10] sm:$0xff]
    %v3992 = vld [vmem:[%s3988 + $0x18] sm:$0xff]
    %s3993 = scalar_lea.vmem %s16, 1
    %v3994 = vld [vmem:[%s3993] sm:$0x1]
    %v3996 = vlaneseq
    %v3997 = vshrl.u32 %v3996, 7
    %v3998 = vsub.s32 0, %v3997
    %v3999 = vrot.slane %v3994, %v3998
    %v4002 = vsel %vm188, %v3986, 0
    %v4005 = vsel %vm188, %v3987, 0
    %4007 = vmatprep.subr.mxu0 0.0
    %4008 = vmatpush1.msra.mxu0 0.0
    %4009 = vmatprep.subr.mxu0 0.0
    %4010 = vmatpush1.msra.mxu0 0.0
    %4011 = vmatprep.subr.mxu0 0.0
    %4012 = vmatpush1.msra.mxu0 0.0
    %4013 = vmatprep.subr.mxu0 0.0
    %4014 = vmatpush1.msra.mxu0 0.0
    %4015 = vmatprep.subr.mxu0 0.0
    %4016 = vmatpush1.msra.mxu0 0.0
    %4017 = vmatprep.subr.mxu0 0.0
    %4018 = vmatpush1.msra.mxu0 0.0
    %4019 = vmatprep.subr.mxu0 0.0
    %4020 = vmatpush1.msra.mxu0 0.0
    %4021 = vmatprep.subr.mxu0 0.0
    %4022 = vmatpush1.msra.mxu0 0.0
    %4023 = vmatprep.subr.mxu0 0.0
    %4024 = vmatpush1.msra.mxu0 0.0
    %4025 = vmatprep.subr.mxu0 0.0
    %4026 = vmatpush1.msra.mxu0 0.0
    %4027 = vmatprep.subr.mxu0 0.0
    %4028 = vmatpush1.msra.mxu0 0.0
    %4029 = vmatprep.subr.mxu0 0.0
    %4030 = vmatpush1.msra.mxu0 0.0
    %4031 = vmatprep.subr.mxu0 0.0
    %4032 = vmatpush1.msra.mxu0 %v3992
    %4033 = vmatprep.subr.mxu0 0.0
    %4034 = vmatpush1.msra.mxu0 %v3991
    %4035 = vmatprep.subr.mxu0 0.0
    %4036 = vmatpush1.msra.mxu0 %v3990
    %4037 = vmatprep.subr.mxu0 0.0
    %4038 = vmatpush1.msra.mxu0 %v3989
    %4039 = vmatprep.subr.mxu0 0.0
    %4040 = vmatpush2.msra.mxu0 0.0
    %4041 = vmatprep.subr.mxu0 0.0
    %4042 = vmatpush2.msra.mxu0 0.0
    %4043 = vmatprep.subr.mxu0 0.0
    %4044 = vmatpush2.msra.mxu0 0.0
    %4045 = vmatprep.subr.mxu0 0.0
    %4046 = vmatpush2.msra.mxu0 0.0
    %4047 = vmatprep.subr.mxu0 0.0
    %4048 = vmatpush2.msra.mxu0 0.0
    %4049 = vmatprep.subr.mxu0 0.0
    %4050 = vmatpush2.msra.mxu0 0.0
    %4051 = vmatprep.subr.mxu0 0.0
    %4052 = vmatpush2.msra.mxu0 0.0
    %4053 = vmatprep.subr.mxu0 0.0
    %4054 = vmatpush2.msra.mxu0 0.0
    %4055 = vmatprep.subr.mxu0 0.0
    %4056 = vmatpush2.msra.mxu0 0.0
    %4057 = vmatprep.subr.mxu0 0.0
    %4058 = vmatpush2.msra.mxu0 0.0
    %4059 = vmatprep.subr.mxu0 0.0
    %4060 = vmatpush2.msra.mxu0 0.0
    %4061 = vmatprep.subr.mxu0 0.0
    %4062 = vmatpush2.msra.mxu0 0.0
    %4063 = vmatprep.subr.mxu0 0.0
    %4064 = vmatpush2.msra.mxu0 0.0
    %4065 = vmatprep.subr.mxu0 0.0
    %4066 = vmatpush2.msra.mxu0 0.0
    %4067 = vmatprep.subr.mxu0 0.0
    %4068 = vmatpush2.msra.mxu0 0.0
    %4069 = vmatprep.subr.mxu0 0.0
    %4070 = vmatpush2.msra.mxu0 0.0
    %4071 = vmatprep.mubr.f32.mxu0 0.0
    %4072 = vmatmul.mubr.f32.gmra.mxu0 %v4002
    %v4073 = vpop.f32.mrf.mxu0
    %v4074 = vadd.f32 %v3999, %v4073
    %v4075 = vpop.f32.mrf.mxu0
    %4076 = vmatprep.mubr.f32.mxu0 0.0
    %4077 = vmatmul.mubr.f32.gmra.mxu0 %v4005
    %v4078 = vpop.f32.mrf.mxu0
    %v4079 = vadd.f32 %v3999, %v4078
    %v4080 = vpop.f32.mrf.mxu0
    %4081 = vdwg.mxu0
    %v4082 = vmul.f32 %v4074, 0.5
    %v4083 = vmul.f32 %v4079, 0.5
    %v4084 = vmul.f32 %v4074, %v4074
    %v4085 = vmul.f32 %v4079, %v4079
    %v4086 = vmul.f32 %v4074, %v4084
    %v4087 = vmul.f32 %v4079, %v4085
    %v4088 = vmul.f32 %v4086, 0.044715
    %v4089 = vmul.f32 %v4087, 0.044715
    %v4090 = vadd.f32 %v4074, %v4088
    %v4091 = vadd.f32 %v4079, %v4089
    %v4092 = vmul.f32 %v4090, 0.7978846
    %v4093 = vmul.f32 %v4091, 0.7978846
    %v4094 = vtanh.pop %v4092
    %v4095 = vtanh.pop %v4093
    %v4096 = vadd.f32 %v4094, 1.0
    %v4097 = vadd.f32 %v4095, 1.0
    %v4098 = vmul.f32 %v4082, %v4096
    %v4099 = vmul.f32 %v4083, %v4097
    %s4100 = scalar_lea.vmem %s17, 64
    %v4101 = vld [vmem:[%s4100] sm:$0xff]
    %v4102 = vld [vmem:[%s4100 + $0x8] sm:$0xff]
    %v4103 = vld [vmem:[%s4100 + $0x10] sm:$0xff]
    %v4104 = vld [vmem:[%s4100 + $0x18] sm:$0xff]
    %v4105 = vld [vmem:[%s4100 + $0x20] sm:$0xff]
    %v4106 = vld [vmem:[%s4100 + $0x28] sm:$0xff]
    %v4107 = vld [vmem:[%s4100 + $0x30] sm:$0xff]
    %v4108 = vld [vmem:[%s4100 + $0x38] sm:$0xff]
    %s4109 = scalar_lea.vmem %s18, 1
    %v4110 = vld [vmem:[%s4109] sm:$0x1]
    %v4112 = vlaneseq
    %v4113 = vshrl.u32 %v4112, 7
    %v4114 = vsub.s32 0, %v4113
    %v4115 = vrot.slane %v4110, %v4114
    %v4118 = vsel %vm2104, %v4098, 0
    %v4121 = vsel %vm2104, %v4099, 0
    %4123 = vmatprep.subr.mxu0 0.0
    %4124 = vmatpush1.msra.mxu0 0.0
    %4125 = vmatprep.subr.mxu0 0.0
    %4126 = vmatpush1.msra.mxu0 0.0
    %4127 = vmatprep.subr.mxu0 0.0
    %4128 = vmatpush1.msra.mxu0 0.0
    %4129 = vmatprep.subr.mxu0 0.0
    %4130 = vmatpush1.msra.mxu0 0.0
    %4131 = vmatprep.subr.mxu0 0.0
    %4132 = vmatpush1.msra.mxu0 0.0
    %4133 = vmatprep.subr.mxu0 0.0
    %4134 = vmatpush1.msra.mxu0 0.0
    %4135 = vmatprep.subr.mxu0 0.0
    %4136 = vmatpush1.msra.mxu0 0.0
    %4137 = vmatprep.subr.mxu0 0.0
    %4138 = vmatpush1.msra.mxu0 0.0
    %4139 = vmatprep.subr.mxu0 0.0
    %4140 = vmatpush1.msra.mxu0 %v4108
    %4141 = vmatprep.subr.mxu0 0.0
    %4142 = vmatpush1.msra.mxu0 %v4107
    %4143 = vmatprep.subr.mxu0 0.0
    %4144 = vmatpush1.msra.mxu0 %v4106
    %4145 = vmatprep.subr.mxu0 0.0
    %4146 = vmatpush1.msra.mxu0 %v4105
    %4147 = vmatprep.subr.mxu0 0.0
    %4148 = vmatpush1.msra.mxu0 %v4104
    %4149 = vmatprep.subr.mxu0 0.0
    %4150 = vmatpush1.msra.mxu0 %v4103
    %4151 = vmatprep.subr.mxu0 0.0
    %4152 = vmatpush1.msra.mxu0 %v4102
    %4153 = vmatprep.subr.mxu0 0.0
    %4154 = vmatpush1.msra.mxu0 %v4101
    %4155 = vmatprep.subr.mxu0 0.0
    %4156 = vmatpush2.msra.mxu0 0.0
    %4157 = vmatprep.subr.mxu0 0.0
    %4158 = vmatpush2.msra.mxu0 0.0
    %4159 = vmatprep.subr.mxu0 0.0
    %4160 = vmatpush2.msra.mxu0 0.0
    %4161 = vmatprep.subr.mxu0 0.0
    %4162 = vmatpush2.msra.mxu0 0.0
    %4163 = vmatprep.subr.mxu0 0.0
    %4164 = vmatpush2.msra.mxu0 0.0
    %4165 = vmatprep.subr.mxu0 0.0
    %4166 = vmatpush2.msra.mxu0 0.0
    %4167 = vmatprep.subr.mxu0 0.0
    %4168 = vmatpush2.msra.mxu0 0.0
    %4169 = vmatprep.subr.mxu0 0.0
    %4170 = vmatpush2.msra.mxu0 0.0
    %4171 = vmatprep.subr.mxu0 0.0
    %4172 = vmatpush2.msra.mxu0 0.0
    %4173 = vmatprep.subr.mxu0 0.0
    %4174 = vmatpush2.msra.mxu0 0.0
    %4175 = vmatprep.subr.mxu0 0.0
    %4176 = vmatpush2.msra.mxu0 0.0
    %4177 = vmatprep.subr.mxu0 0.0
    %4178 = vmatpush2.msra.mxu0 0.0
    %4179 = vmatprep.subr.mxu0 0.0
    %4180 = vmatpush2.msra.mxu0 0.0
    %4181 = vmatprep.subr.mxu0 0.0
    %4182 = vmatpush2.msra.mxu0 0.0
    %4183 = vmatprep.subr.mxu0 0.0
    %4184 = vmatpush2.msra.mxu0 0.0
    %4185 = vmatprep.subr.mxu0 0.0
    %4186 = vmatpush2.msra.mxu0 0.0
    %4187 = vmatprep.mubr.f32.mxu0 0.0
    %4188 = vmatmul.mubr.f32.gmra.mxu0 %v4118
    %v4189 = vpop.f32.mrf.mxu0
    %v4190 = vadd.f32 %v4115, %v4189
    %v4191 = vpop.f32.mrf.mxu0
    %4192 = vmatprep.mubr.f32.mxu0 0.0
    %4193 = vmatmul.mubr.f32.gmra.mxu0 %v4121
    %v4194 = vpop.f32.mrf.mxu0
    %v4195 = vadd.f32 %v4115, %v4194
    %v4196 = vpop.f32.mrf.mxu0
    %4197 = vdwg.mxu0
    %v4198 = vadd.f32 %v3940, %v4190
    %v4199 = vadd.f32 %v3941, %v4195
    %v4201 = vrot.slane %v4199, 7
    %vm4203 = vcmask 1040384
    %v4204 = vsel %vm4203, %v4198, %v4201
    %v4205 = vld [vmem:[%s19] sm:$0xff]
    %v4206 = vld [vmem:[%s19 + $0x8] sm:$0xff]
    %v4207 = vld [vmem:[%s19 + $0x10] sm:$0xff]
    %v4208 = vld [vmem:[%s19 + $0x18] sm:$0xff]
    %v4209 = vld [vmem:[%s20] sm:$0x1]
    %v4211 = vlaneseq
    %v4212 = vshrl.u32 %v4211, 7
    %v4213 = vsub.s32 0, %v4212
    %v4214 = vrot.slane %v4209, %v4213
    %v4217 = vsel %vm188, %v4204, 0
    %4219 = vmatprep.subr.mxu0 0.0
    %4220 = vmatpush1.msra.mxu0 0.0
    %4221 = vmatprep.subr.mxu0 0.0
    %4222 = vmatpush1.msra.mxu0 0.0
    %4223 = vmatprep.subr.mxu0 0.0
    %4224 = vmatpush1.msra.mxu0 0.0
    %4225 = vmatprep.subr.mxu0 0.0
    %4226 = vmatpush1.msra.mxu0 0.0
    %4227 = vmatprep.subr.mxu0 0.0
    %4228 = vmatpush1.msra.mxu0 0.0
    %4229 = vmatprep.subr.mxu0 0.0
    %4230 = vmatpush1.msra.mxu0 0.0
    %4231 = vmatprep.subr.mxu0 0.0
    %4232 = vmatpush1.msra.mxu0 0.0
    %4233 = vmatprep.subr.mxu0 0.0
    %4234 = vmatpush1.msra.mxu0 0.0
    %4235 = vmatprep.subr.mxu0 0.0
    %4236 = vmatpush1.msra.mxu0 0.0
    %4237 = vmatprep.subr.mxu0 0.0
    %4238 = vmatpush1.msra.mxu0 0.0
    %4239 = vmatprep.subr.mxu0 0.0
    %4240 = vmatpush1.msra.mxu0 0.0
    %4241 = vmatprep.subr.mxu0 0.0
    %4242 = vmatpush1.msra.mxu0 0.0
    %4243 = vmatprep.subr.mxu0 0.0
    %4244 = vmatpush1.msra.mxu0 %v4208
    %4245 = vmatprep.subr.mxu0 0.0
    %4246 = vmatpush1.msra.mxu0 %v4207
    %4247 = vmatprep.subr.mxu0 0.0
    %4248 = vmatpush1.msra.mxu0 %v4206
    %4249 = vmatprep.subr.mxu0 0.0
    %4250 = vmatpush1.msra.mxu0 %v4205
    %4251 = vmatprep.subr.mxu0 0.0
    %4252 = vmatpush2.msra.mxu0 0.0
    %4253 = vmatprep.subr.mxu0 0.0
    %4254 = vmatpush2.msra.mxu0 0.0
    %4255 = vmatprep.subr.mxu0 0.0
    %4256 = vmatpush2.msra.mxu0 0.0
    %4257 = vmatprep.subr.mxu0 0.0
    %4258 = vmatpush2.msra.mxu0 0.0
    %4259 = vmatprep.subr.mxu0 0.0
    %4260 = vmatpush2.msra.mxu0 0.0
    %4261 = vmatprep.subr.mxu0 0.0
    %4262 = vmatpush2.msra.mxu0 0.0
    %4263 = vmatprep.subr.mxu0 0.0
    %4264 = vmatpush2.msra.mxu0 0.0
    %4265 = vmatprep.subr.mxu0 0.0
    %4266 = vmatpush2.msra.mxu0 0.0
    %4267 = vmatprep.subr.mxu0 0.0
    %4268 = vmatpush2.msra.mxu0 0.0
    %4269 = vmatprep.subr.mxu0 0.0
    %4270 = vmatpush2.msra.mxu0 0.0
    %4271 = vmatprep.subr.mxu0 0.0
    %4272 = vmatpush2.msra.mxu0 0.0
    %4273 = vmatprep.subr.mxu0 0.0
    %4274 = vmatpush2.msra.mxu0 0.0
    %4275 = vmatprep.subr.mxu0 0.0
    %4276 = vmatpush2.msra.mxu0 0.0
    %4277 = vmatprep.subr.mxu0 0.0
    %4278 = vmatpush2.msra.mxu0 0.0
    %4279 = vmatprep.subr.mxu0 0.0
    %4280 = vmatpush2.msra.mxu0 0.0
    %4281 = vmatprep.subr.mxu0 0.0
    %4282 = vmatpush2.msra.mxu0 0.0
    %4283 = vmatprep.mubr.f32.mxu0 0.0
    %4284 = vmatmul.mubr.f32.gmra.mxu0 %v4217
    %v4285 = vpop.f32.mrf.mxu0
    %v4286 = vadd.f32 %v4214, %v4285
    %v4287 = vpop.f32.mrf.mxu0
    %4288 = vdwg.mxu0
    %vm4289 = vcmask 58368
    %4290 = vst.msk [vmem:[#allocation2] sm:$0x3] %vm4289, %v4286
    // Predicated region
    $region86: #{_lambda_.1} parent=1 // pred_check
      _
    $region87: #{_lambda_.1} parent=1 // pred_check_branch
      %4292 = sbr.rel (0) target = $region89
    $region88: #{_lambda_.1} parent=1 // pred_region
      %s4294 = ssub.s32 32, 32
      %4295 = vsyncadd [#allocation3], %s4294
      %s4297 = sshll.u32 [#allocation2], 4
      %s4298 = int_to_ptr.vmem [resolvable:$true] %s4297
      %4300 = dma.vmem_to_hbm [thread:$0]  %s4298, 32, %s21, [#allocation3]
    $region89: #{_lambda_.1} parent=1 // pred_fallthru
      _
    // Predicated region
    $region90: #{_lambda_.1} parent=1 // pred_check
      _
    $region91: #{_lambda_.1} parent=1 // pred_check_branch
      %4302 = sbr.rel (0) target = $region93
    $region92: #{_lambda_.1} parent=1 // pred_region
      %4303 = dma.done [#allocation3], 32
    $region93: #{_lambda_.1} parent=1 // pred_fallthru
      _
    %4304 = vsyncpa [#allocation3], 1

</llo_original>
